<compile_context>
chip_gen: v6e
topology: v6e:2x2x1
jax: 0.10.0
libtpu: 0.0.40
codegen_flags: <defaults>
</compile_context>

<pallas_src>
import functools

import jax
import jax.numpy as jnp
from jax.experimental import pallas as pl
from jax.experimental.pallas import tpu as pltpu


def _gatv2_into(x, w_ref, b_ref, av_ref, E, bias, heads, channels, dst_ref):
    """One dense GATv2 layer (all heads) + ELU, written into dst_ref[:, h*C:(h+1)*C]."""
    N = x.shape[0]
    wl = w_ref[0]                          # [F, H*C]
    wr = w_ref[1]                          # [F, H*C]
    bl = b_ref[0:1, :]                     # [1, H*C]
    br = b_ref[1:2, :]                     # [1, H*C]
    bout = b_ref[2:3, :]                   # [1, H*C]

    # One wide MXU matmul per projection for ALL heads at once.
    xl_all = jnp.dot(x, wl, preferred_element_type=jnp.float32) + bl   # [N, H*C]
    xr_all = jnp.dot(x, wr, preferred_element_type=jnp.float32) + br   # [N, H*C]
    xlT = jnp.transpose(xl_all)                                        # [H*C, N] (src on lanes)

    for h in range(heads):
        # Attention logits kept as a [N_dst, N_src] tile; channels accumulated with
        # SMEM scalars (avoids the [N, N, C] broadcast and per-element XLU reduce).
        s = jnp.zeros((N, N), jnp.float32)
        for c in range(channels):
            k = h * channels + c
            z = xlT[k:k + 1, :] + xr_all[:, k:k + 1] + E * av_ref[1, k]   # [N, N]
            z = jnp.where(z >= 0.0, z, 0.2 * z)                           # leaky_relu(0.2)
            s = s + av_ref[0, k] * z
        s = s + bias                                         # additive mask (-1e9 off-edges)
        s = s - jnp.max(s, axis=-1, keepdims=True)
        p = jnp.exp(s)
        alpha = p * pl.reciprocal(jnp.sum(p, axis=-1, keepdims=True), approx=True)

        xl_h = xl_all[:, h * channels:(h + 1) * channels]                 # [N, C]
        o = jnp.dot(alpha, xl_h, preferred_element_type=jnp.float32)
        o = o + bout[:, h * channels:(h + 1) * channels]
        # ELU; exp is only evaluated on the clamped non-positive branch -> no spurious inf.
        dst_ref[:, h * channels:(h + 1) * channels] = jnp.where(
            o > 0.0, o, jnp.exp(jnp.minimum(o, 0.0)) - 1.0)


def affinity_gat_kernel(x_ref, e_ref, bias_ref,
                        w1_ref, b1_ref, av1_ref,
                        w2_ref, b2_ref, av2_ref,
                        out_ref, h_scratch,
                        *, heads1, ch1, heads2, ch2):
    x = x_ref[...]                         # [N, F]
    E = e_ref[...]                         # [N, N]  dense edge_attr (row = dst, col = src)
    bias = bias_ref[...]                   # [N, N]  additive mask bias

    # Layer 1 (3 heads, concat) -> VMEM scratch, never leaves the chip.
    _gatv2_into(x, w1_ref, b1_ref, av1_ref, E, bias, heads1, ch1, h_scratch)
    # Layer 2 (1 head) -> output, already in concatenated [N, H*C] layout.
    _gatv2_into(h_scratch[...], w2_ref, b2_ref, av2_ref, E, bias, heads2, ch2, out_ref)


def affinity_gat_forward(x, edge_index, edge_attr, params1, params2,
                         *, heads1, ch1, heads2, ch2):
    N, _ = x.shape
    src, dst = edge_index[0], edge_index[1]
    ea = edge_attr[:, 0]
    keep = (src != dst).astype(jnp.float32)        # PyG removes pre-existing self-loops

    eye = jnp.eye(N, dtype=jnp.float32)
    mask = jnp.zeros((N, N), jnp.float32).at[dst, src].max(keep)
    mask = jnp.maximum(mask, eye)                  # add self-loops
    mask_bias = (mask - 1.0) * 1e9                 # 0 on edges, -1e9 elsewhere

    # add_self_loops(fill_value='mean'): per-destination mean of incoming edge_attr.
    sums = jnp.zeros((N,), jnp.float32).at[dst].add(keep * ea)
    counts = jnp.zeros((N,), jnp.float32).at[dst].add(keep)
    mean_per_dst = jnp.where(counts > 0, sums / jnp.maximum(counts, 1.0), 0.0)

    E = jnp.zeros((N, N), jnp.float32).at[dst, src].set(keep * ea)
    E = E * (1.0 - eye) + mean_per_dst[:, None] * eye

    HC1 = params1[0].shape[2]
    HC2 = params2[0].shape[2]

    vmem = pl.BlockSpec(memory_space=pltpu.MemorySpace.VMEM)
    smem = pl.BlockSpec(memory_space=pltpu.MemorySpace.SMEM)

    kernel = functools.partial(affinity_gat_kernel,
                               heads1=heads1, ch1=ch1, heads2=heads2, ch2=ch2)

    return pl.pallas_call(
        kernel,
        out_shape=jax.ShapeDtypeStruct((N, HC2), jnp.float32),
        in_specs=[vmem, vmem, vmem,    # x, E, mask_bias
                  vmem, vmem, smem,    # layer 1: W [2,F,HC], B [3,HC], (att, w_edge) [2,HC]
                  vmem, vmem, smem],   # layer 2
        out_specs=vmem,
        scratch_shapes=[pltpu.VMEM((N, HC1), jnp.float32)],
    )(x, E, mask_bias,
      params1[0], params1[1], params1[2],
      params2[0], params2[1], params2[2])


def make_gatv2_params(key, in_dim, out_dim, heads):
    ks = jax.random.split(key, 7)
    hc = heads * out_dim
    scale = 1.0 / jnp.sqrt(jnp.float32(in_dim))
    wl = jax.random.normal(ks[0], (in_dim, hc), jnp.float32) * scale
    wr = jax.random.normal(ks[1], (in_dim, hc), jnp.float32) * scale
    bl = jax.random.normal(ks[2], (hc,), jnp.float32) * 0.1
    br = jax.random.normal(ks[3], (hc,), jnp.float32) * 0.1
    bout = jax.random.normal(ks[4], (hc,), jnp.float32) * 0.1
    att = jax.random.normal(ks[5], (hc,), jnp.float32) * scale
    we = jax.random.normal(ks[6], (hc,), jnp.float32)   # lin_edge weight (edge_dim=1, no bias)
    W = jnp.stack([wl, wr], axis=0)                     # [2, F, H*C]
    B = jnp.stack([bl, br, bout], axis=0)               # [3, H*C]
    AV = jnp.stack([att, we], axis=0)                   # [2, H*C]  (SMEM scalars)
    return (W, B, AV)


if __name__ == "__main__":
    key = jax.random.PRNGKey(0)
    k_x, k_e, k_p1, k_p2 = jax.random.split(key, 4)

    N = 16                    # nodes
    num_features = 8
    hidden_channel = 8
    out_channel = 8
    heads1 = 3

    # Node features
    x = jax.random.normal(k_x, (N, num_features), jnp.float32)

    # Deterministic directed edges (unique, no self-loops): i -> (i+k) % N
    srcs, dsts = [], []
    for k in (1, 2, 5):
        for i in range(N):
            srcs.append(i)
            dsts.append((i + k) % N)
    edge_index = jnp.array([srcs, dsts], dtype=jnp.int32)          # [2, 48]
    edge_attr = jax.random.uniform(k_e, (edge_index.shape[1], 1), jnp.float32)

    params1 = make_gatv2_params(k_p1, num_features, hidden_channel, heads1)
    params2 = make_gatv2_params(k_p2, hidden_channel * heads1, out_channel, 1)

    fwd = jax.jit(functools.partial(affinity_gat_forward,
                                    heads1=heads1, ch1=hidden_channel,
                                    heads2=1, ch2=out_channel))
    out = fwd(x, edge_index, edge_attr, params1, params2)
    jax.block_until_ready(out)

    assert out.shape == (N, out_channel), out.shape
    assert bool(jnp.all(jnp.isfinite(out)))
    print("KERNEL_OK")
</pallas_src>

<mosaic_0001>
module attributes {stable_mosaic.version = 11 : i64} {
  func.func private @main(%arg0: i32) attributes {dimension_semantics = [#tpu.dimension_semantics<core_parallel>], iteration_bounds = array<i64: 2>, tpu.core_type = #tpu.core_type<sc_scalar_subcore>, window_params = []} {
    return
  }
}

module attributes {stable_mosaic.version = 11 : i64} {
  func.func private @main(%arg0: i32) attributes {dimension_semantics = [#tpu.dimension_semantics<core_parallel>], iteration_bounds = array<i64: 2>, tpu.core_type = #tpu.core_type<sc_scalar_subcore>, window_params = []} {
    return
  }
}

module attributes {stable_mosaic.version = 11 : i64} {
  func.func @affinity_gat_kernel(%arg0: memref<16x8xf32, #tpu.memory_space<vmem>>, %arg1: memref<16x16xf32, #tpu.memory_space<vmem>>, %arg2: memref<16x16xf32, #tpu.memory_space<vmem>>, %arg3: memref<2x8x24xf32, #tpu.memory_space<vmem>>, %arg4: memref<3x24xf32, #tpu.memory_space<vmem>>, %arg5: memref<2x24xf32, #tpu.memory_space<smem>>, %arg6: memref<2x24x8xf32, #tpu.memory_space<vmem>>, %arg7: memref<3x8xf32, #tpu.memory_space<vmem>>, %arg8: memref<2x8xf32, #tpu.memory_space<smem>>, %arg9: memref<16x8xf32, #tpu.memory_space<vmem>>, %arg10: memref<16x24xf32, #tpu.memory_space<vmem>>) attributes {dimension_semantics = [], scalar_prefetch = 0 : i64, scratch_operands = 1 : i64, tpu.core_type = #tpu.core_type<tc>} {
    %c0 = arith.constant 0 : index
    %c0_0 = arith.constant 0 : index
    %0 = vector.load %arg0[%c0, %c0_0] : memref<16x8xf32, #tpu.memory_space<vmem>>, vector<16x8xf32>
    %c0_1 = arith.constant 0 : index
    %c0_2 = arith.constant 0 : index
    %1 = vector.load %arg1[%c0_1, %c0_2] : memref<16x16xf32, #tpu.memory_space<vmem>>, vector<16x16xf32>
    %c0_3 = arith.constant 0 : index
    %c0_4 = arith.constant 0 : index
    %2 = vector.load %arg2[%c0_3, %c0_4] : memref<16x16xf32, #tpu.memory_space<vmem>>, vector<16x16xf32>
    %c0_5 = arith.constant 0 : index
    %c0_6 = arith.constant 0 : index
    %c0_7 = arith.constant 0 : index
    %3 = vector.load %arg3[%c0_5, %c0_6, %c0_7] : memref<2x8x24xf32, #tpu.memory_space<vmem>>, vector<1x8x24xf32>
    %4 = vector.shape_cast %3 : vector<1x8x24xf32> to vector<8x24xf32>
    %c1 = arith.constant 1 : index
    %c0_8 = arith.constant 0 : index
    %c0_9 = arith.constant 0 : index
    %5 = vector.load %arg3[%c1, %c0_8, %c0_9] : memref<2x8x24xf32, #tpu.memory_space<vmem>>, vector<1x8x24xf32>
    %6 = vector.shape_cast %5 : vector<1x8x24xf32> to vector<8x24xf32>
    %c0_10 = arith.constant 0 : index
    %c0_11 = arith.constant 0 : index
    %7 = vector.load %arg4[%c0_10, %c0_11] : memref<3x24xf32, #tpu.memory_space<vmem>>, vector<1x24xf32>
    %c1_12 = arith.constant 1 : index
    %c0_13 = arith.constant 0 : index
    %8 = vector.load %arg4[%c1_12, %c0_13] : memref<3x24xf32, #tpu.memory_space<vmem>>, vector<1x24xf32>
    %c2 = arith.constant 2 : index
    %c0_14 = arith.constant 0 : index
    %9 = vector.load %arg4[%c2, %c0_14] : memref<3x24xf32, #tpu.memory_space<vmem>>, vector<1x24xf32>
    %cst = arith.constant dense<0.000000e+00> : vector<16x24xf32>
    %10 = tpu.matmul %0, %4, %cst {dimension_numbers = #tpu.dot_dimension_numbers<[1], [0], [0], [1], [0, 0, 1, 1], [], []>} : vector<16x8xf32>, vector<8x24xf32>, vector<16x24xf32> -> vector<16x24xf32>
    %11 = vector.broadcast %7 : vector<1x24xf32> to vector<16x24xf32>
    %12 = arith.addf %10, %11 : vector<16x24xf32>
    %cst_15 = arith.constant dense<0.000000e+00> : vector<16x24xf32>
    %13 = tpu.matmul %0, %6, %cst_15 {dimension_numbers = #tpu.dot_dimension_numbers<[1], [0], [0], [1], [0, 0, 1, 1], [], []>} : vector<16x8xf32>, vector<8x24xf32>, vector<16x24xf32> -> vector<16x24xf32>
    %14 = vector.broadcast %8 : vector<1x24xf32> to vector<16x24xf32>
    %15 = arith.addf %13, %14 : vector<16x24xf32>
    %16 = tpu.transpose %12, [1, 0] : vector<16x24xf32> -> vector<24x16xf32>
    %cst_16 = arith.constant 0.000000e+00 : f32
    %17 = vector.broadcast %cst_16 : f32 to vector<16x16xf32>
    %18 = vector.extract_strided_slice %16 {offsets = [0, 0], sizes = [1, 16], strides = [1, 1]} : vector<24x16xf32> to vector<1x16xf32>
    %19 = vector.extract_strided_slice %15 {offsets = [0, 0], sizes = [16, 1], strides = [1, 1]} : vector<16x24xf32> to vector<16x1xf32>
    %20 = vector.broadcast %18 : vector<1x16xf32> to vector<16x16xf32>
    %21 = vector.broadcast %19 : vector<16x1xf32> to vector<16x16xf32>
    %22 = arith.addf %20, %21 : vector<16x16xf32>
    %c1_17 = arith.constant 1 : index
    %c0_18 = arith.constant 0 : index
    %23 = memref.load %arg5[%c1_17, %c0_18] : memref<2x24xf32, #tpu.memory_space<smem>>
    %24 = vector.broadcast %23 : f32 to vector<16x16xf32>
    %25 = arith.mulf %1, %24 : vector<16x16xf32>
    %26 = arith.addf %22, %25 : vector<16x16xf32>
    %cst_19 = arith.constant 0.000000e+00 : f32
    %27 = vector.broadcast %cst_19 : f32 to vector<16x16xf32>
    %28 = arith.cmpf oge, %26, %27 : vector<16x16xf32>
    %cst_20 = arith.constant 2.000000e-01 : f32
    %29 = vector.broadcast %cst_20 : f32 to vector<16x16xf32>
    %30 = arith.mulf %29, %26 : vector<16x16xf32>
    %31 = arith.select %28, %26, %30 : vector<16x16xi1>, vector<16x16xf32>
    %c0_21 = arith.constant 0 : index
    %c0_22 = arith.constant 0 : index
    %32 = memref.load %arg5[%c0_21, %c0_22] : memref<2x24xf32, #tpu.memory_space<smem>>
    %33 = vector.broadcast %32 : f32 to vector<16x16xf32>
    %34 = arith.mulf %33, %31 : vector<16x16xf32>
    %35 = arith.addf %17, %34 : vector<16x16xf32>
    %36 = vector.extract_strided_slice %16 {offsets = [1, 0], sizes = [1, 16], strides = [1, 1]} : vector<24x16xf32> to vector<1x16xf32>
    %37 = vector.extract_strided_slice %15 {offsets = [0, 1], sizes = [16, 1], strides = [1, 1]} : vector<16x24xf32> to vector<16x1xf32>
    %38 = vector.broadcast %36 : vector<1x16xf32> to vector<16x16xf32>
    %39 = vector.broadcast %37 : vector<16x1xf32> to vector<16x16xf32>
    %40 = arith.addf %38, %39 : vector<16x16xf32>
    %c1_23 = arith.constant 1 : index
    %c1_24 = arith.constant 1 : index
    %41 = memref.load %arg5[%c1_23, %c1_24] : memref<2x24xf32, #tpu.memory_space<smem>>
    %42 = vector.broadcast %41 : f32 to vector<16x16xf32>
    %43 = arith.mulf %1, %42 : vector<16x16xf32>
    %44 = arith.addf %40, %43 : vector<16x16xf32>
    %cst_25 = arith.constant 0.000000e+00 : f32
    %45 = vector.broadcast %cst_25 : f32 to vector<16x16xf32>
    %46 = arith.cmpf oge, %44, %45 : vector<16x16xf32>
    %cst_26 = arith.constant 2.000000e-01 : f32
    %47 = vector.broadcast %cst_26 : f32 to vector<16x16xf32>
    %48 = arith.mulf %47, %44 : vector<16x16xf32>
    %49 = arith.select %46, %44, %48 : vector<16x16xi1>, vector<16x16xf32>
    %c0_27 = arith.constant 0 : index
    %c1_28 = arith.constant 1 : index
    %50 = memref.load %arg5[%c0_27, %c1_28] : memref<2x24xf32, #tpu.memory_space<smem>>
    %51 = vector.broadcast %50 : f32 to vector<16x16xf32>
    %52 = arith.mulf %51, %49 : vector<16x16xf32>
    %53 = arith.addf %35, %52 : vector<16x16xf32>
    %54 = vector.extract_strided_slice %16 {offsets = [2, 0], sizes = [1, 16], strides = [1, 1]} : vector<24x16xf32> to vector<1x16xf32>
    %55 = vector.extract_strided_slice %15 {offsets = [0, 2], sizes = [16, 1], strides = [1, 1]} : vector<16x24xf32> to vector<16x1xf32>
    %56 = vector.broadcast %54 : vector<1x16xf32> to vector<16x16xf32>
    %57 = vector.broadcast %55 : vector<16x1xf32> to vector<16x16xf32>
    %58 = arith.addf %56, %57 : vector<16x16xf32>
    %c1_29 = arith.constant 1 : index
    %c2_30 = arith.constant 2 : index
    %59 = memref.load %arg5[%c1_29, %c2_30] : memref<2x24xf32, #tpu.memory_space<smem>>
    %60 = vector.broadcast %59 : f32 to vector<16x16xf32>
    %61 = arith.mulf %1, %60 : vector<16x16xf32>
    %62 = arith.addf %58, %61 : vector<16x16xf32>
    %cst_31 = arith.constant 0.000000e+00 : f32
    %63 = vector.broadcast %cst_31 : f32 to vector<16x16xf32>
    %64 = arith.cmpf oge, %62, %63 : vector<16x16xf32>
    %cst_32 = arith.constant 2.000000e-01 : f32
    %65 = vector.broadcast %cst_32 : f32 to vector<16x16xf32>
    %66 = arith.mulf %65, %62 : vector<16x16xf32>
    %67 = arith.select %64, %62, %66 : vector<16x16xi1>, vector<16x16xf32>
    %c0_33 = arith.constant 0 : index
    %c2_34 = arith.constant 2 : index
    %68 = memref.load %arg5[%c0_33, %c2_34] : memref<2x24xf32, #tpu.memory_space<smem>>
    %69 = vector.broadcast %68 : f32 to vector<16x16xf32>
    %70 = arith.mulf %69, %67 : vector<16x16xf32>
    %71 = arith.addf %53, %70 : vector<16x16xf32>
    %72 = vector.extract_strided_slice %16 {offsets = [3, 0], sizes = [1, 16], strides = [1, 1]} : vector<24x16xf32> to vector<1x16xf32>
    %73 = vector.extract_strided_slice %15 {offsets = [0, 3], sizes = [16, 1], strides = [1, 1]} : vector<16x24xf32> to vector<16x1xf32>
    %74 = vector.broadcast %72 : vector<1x16xf32> to vector<16x16xf32>
    %75 = vector.broadcast %73 : vector<16x1xf32> to vector<16x16xf32>
    %76 = arith.addf %74, %75 : vector<16x16xf32>
    %c1_35 = arith.constant 1 : index
    %c3 = arith.constant 3 : index
    %77 = memref.load %arg5[%c1_35, %c3] : memref<2x24xf32, #tpu.memory_space<smem>>
    %78 = vector.broadcast %77 : f32 to vector<16x16xf32>
    %79 = arith.mulf %1, %78 : vector<16x16xf32>
    %80 = arith.addf %76, %79 : vector<16x16xf32>
    %cst_36 = arith.constant 0.000000e+00 : f32
    %81 = vector.broadcast %cst_36 : f32 to vector<16x16xf32>
    %82 = arith.cmpf oge, %80, %81 : vector<16x16xf32>
    %cst_37 = arith.constant 2.000000e-01 : f32
    %83 = vector.broadcast %cst_37 : f32 to vector<16x16xf32>
    %84 = arith.mulf %83, %80 : vector<16x16xf32>
    %85 = arith.select %82, %80, %84 : vector<16x16xi1>, vector<16x16xf32>
    %c0_38 = arith.constant 0 : index
    %c3_39 = arith.constant 3 : index
    %86 = memref.load %arg5[%c0_38, %c3_39] : memref<2x24xf32, #tpu.memory_space<smem>>
    %87 = vector.broadcast %86 : f32 to vector<16x16xf32>
    %88 = arith.mulf %87, %85 : vector<16x16xf32>
    %89 = arith.addf %71, %88 : vector<16x16xf32>
    %90 = vector.extract_strided_slice %16 {offsets = [4, 0], sizes = [1, 16], strides = [1, 1]} : vector<24x16xf32> to vector<1x16xf32>
    %91 = vector.extract_strided_slice %15 {offsets = [0, 4], sizes = [16, 1], strides = [1, 1]} : vector<16x24xf32> to vector<16x1xf32>
    %92 = vector.broadcast %90 : vector<1x16xf32> to vector<16x16xf32>
    %93 = vector.broadcast %91 : vector<16x1xf32> to vector<16x16xf32>
    %94 = arith.addf %92, %93 : vector<16x16xf32>
    %c1_40 = arith.constant 1 : index
    %c4 = arith.constant 4 : index
    %95 = memref.load %arg5[%c1_40, %c4] : memref<2x24xf32, #tpu.memory_space<smem>>
    %96 = vector.broadcast %95 : f32 to vector<16x16xf32>
    %97 = arith.mulf %1, %96 : vector<16x16xf32>
    %98 = arith.addf %94, %97 : vector<16x16xf32>
    %cst_41 = arith.constant 0.000000e+00 : f32
    %99 = vector.broadcast %cst_41 : f32 to vector<16x16xf32>
    %100 = arith.cmpf oge, %98, %99 : vector<16x16xf32>
    %cst_42 = arith.constant 2.000000e-01 : f32
    %101 = vector.broadcast %cst_42 : f32 to vector<16x16xf32>
    %102 = arith.mulf %101, %98 : vector<16x16xf32>
    %103 = arith.select %100, %98, %102 : vector<16x16xi1>, vector<16x16xf32>
    %c0_43 = arith.constant 0 : index
    %c4_44 = arith.constant 4 : index
    %104 = memref.load %arg5[%c0_43, %c4_44] : memref<2x24xf32, #tpu.memory_space<smem>>
    %105 = vector.broadcast %104 : f32 to vector<16x16xf32>
    %106 = arith.mulf %105, %103 : vector<16x16xf32>
    %107 = arith.addf %89, %106 : vector<16x16xf32>
    %108 = vector.extract_strided_slice %16 {offsets = [5, 0], sizes = [1, 16], strides = [1, 1]} : vector<24x16xf32> to vector<1x16xf32>
    %109 = vector.extract_strided_slice %15 {offsets = [0, 5], sizes = [16, 1], strides = [1, 1]} : vector<16x24xf32> to vector<16x1xf32>
    %110 = vector.broadcast %108 : vector<1x16xf32> to vector<16x16xf32>
    %111 = vector.broadcast %109 : vector<16x1xf32> to vector<16x16xf32>
    %112 = arith.addf %110, %111 : vector<16x16xf32>
    %c1_45 = arith.constant 1 : index
    %c5 = arith.constant 5 : index
    %113 = memref.load %arg5[%c1_45, %c5] : memref<2x24xf32, #tpu.memory_space<smem>>
    %114 = vector.broadcast %113 : f32 to vector<16x16xf32>
    %115 = arith.mulf %1, %114 : vector<16x16xf32>
    %116 = arith.addf %112, %115 : vector<16x16xf32>
    %cst_46 = arith.constant 0.000000e+00 : f32
    %117 = vector.broadcast %cst_46 : f32 to vector<16x16xf32>
    %118 = arith.cmpf oge, %116, %117 : vector<16x16xf32>
    %cst_47 = arith.constant 2.000000e-01 : f32
    %119 = vector.broadcast %cst_47 : f32 to vector<16x16xf32>
    %120 = arith.mulf %119, %116 : vector<16x16xf32>
    %121 = arith.select %118, %116, %120 : vector<16x16xi1>, vector<16x16xf32>
    %c0_48 = arith.constant 0 : index
    %c5_49 = arith.constant 5 : index
    %122 = memref.load %arg5[%c0_48, %c5_49] : memref<2x24xf32, #tpu.memory_space<smem>>
    %123 = vector.broadcast %122 : f32 to vector<16x16xf32>
    %124 = arith.mulf %123, %121 : vector<16x16xf32>
    %125 = arith.addf %107, %124 : vector<16x16xf32>
    %126 = vector.extract_strided_slice %16 {offsets = [6, 0], sizes = [1, 16], strides = [1, 1]} : vector<24x16xf32> to vector<1x16xf32>
    %127 = vector.extract_strided_slice %15 {offsets = [0, 6], sizes = [16, 1], strides = [1, 1]} : vector<16x24xf32> to vector<16x1xf32>
    %128 = vector.broadcast %126 : vector<1x16xf32> to vector<16x16xf32>
    %129 = vector.broadcast %127 : vector<16x1xf32> to vector<16x16xf32>
    %130 = arith.addf %128, %129 : vector<16x16xf32>
    %c1_50 = arith.constant 1 : index
    %c6 = arith.constant 6 : index
    %131 = memref.load %arg5[%c1_50, %c6] : memref<2x24xf32, #tpu.memory_space<smem>>
    %132 = vector.broadcast %131 : f32 to vector<16x16xf32>
    %133 = arith.mulf %1, %132 : vector<16x16xf32>
    %134 = arith.addf %130, %133 : vector<16x16xf32>
    %cst_51 = arith.constant 0.000000e+00 : f32
    %135 = vector.broadcast %cst_51 : f32 to vector<16x16xf32>
    %136 = arith.cmpf oge, %134, %135 : vector<16x16xf32>
    %cst_52 = arith.constant 2.000000e-01 : f32
    %137 = vector.broadcast %cst_52 : f32 to vector<16x16xf32>
    %138 = arith.mulf %137, %134 : vector<16x16xf32>
    %139 = arith.select %136, %134, %138 : vector<16x16xi1>, vector<16x16xf32>
    %c0_53 = arith.constant 0 : index
    %c6_54 = arith.constant 6 : index
    %140 = memref.load %arg5[%c0_53, %c6_54] : memref<2x24xf32, #tpu.memory_space<smem>>
    %141 = vector.broadcast %140 : f32 to vector<16x16xf32>
    %142 = arith.mulf %141, %139 : vector<16x16xf32>
    %143 = arith.addf %125, %142 : vector<16x16xf32>
    %144 = vector.extract_strided_slice %16 {offsets = [7, 0], sizes = [1, 16], strides = [1, 1]} : vector<24x16xf32> to vector<1x16xf32>
    %145 = vector.extract_strided_slice %15 {offsets = [0, 7], sizes = [16, 1], strides = [1, 1]} : vector<16x24xf32> to vector<16x1xf32>
    %146 = vector.broadcast %144 : vector<1x16xf32> to vector<16x16xf32>
    %147 = vector.broadcast %145 : vector<16x1xf32> to vector<16x16xf32>
    %148 = arith.addf %146, %147 : vector<16x16xf32>
    %c1_55 = arith.constant 1 : index
    %c7 = arith.constant 7 : index
    %149 = memref.load %arg5[%c1_55, %c7] : memref<2x24xf32, #tpu.memory_space<smem>>
    %150 = vector.broadcast %149 : f32 to vector<16x16xf32>
    %151 = arith.mulf %1, %150 : vector<16x16xf32>
    %152 = arith.addf %148, %151 : vector<16x16xf32>
    %cst_56 = arith.constant 0.000000e+00 : f32
    %153 = vector.broadcast %cst_56 : f32 to vector<16x16xf32>
    %154 = arith.cmpf oge, %152, %153 : vector<16x16xf32>
    %cst_57 = arith.constant 2.000000e-01 : f32
    %155 = vector.broadcast %cst_57 : f32 to vector<16x16xf32>
    %156 = arith.mulf %155, %152 : vector<16x16xf32>
    %157 = arith.select %154, %152, %156 : vector<16x16xi1>, vector<16x16xf32>
    %c0_58 = arith.constant 0 : index
    %c7_59 = arith.constant 7 : index
    %158 = memref.load %arg5[%c0_58, %c7_59] : memref<2x24xf32, #tpu.memory_space<smem>>
    %159 = vector.broadcast %158 : f32 to vector<16x16xf32>
    %160 = arith.mulf %159, %157 : vector<16x16xf32>
    %161 = arith.addf %143, %160 : vector<16x16xf32>
    %162 = arith.addf %161, %2 : vector<16x16xf32>
    %cst_60 = arith.constant dense<0xFF800000> : vector<16xf32>
    %163 = vector.multi_reduction <maximumf>, %162, %cst_60 [1] : vector<16x16xf32> to vector<16xf32>
    %164 = vector.shape_cast %163 : vector<16xf32> to vector<16x1xf32>
    %165 = vector.broadcast %164 : vector<16x1xf32> to vector<16x16xf32>
    %166 = arith.subf %162, %165 : vector<16x16xf32>
    %167 = math.exp %166 : vector<16x16xf32>
    %cst_61 = arith.constant dense<0.000000e+00> : vector<16xf32>
    %168 = vector.multi_reduction <add>, %167, %cst_61 [1] : vector<16x16xf32> to vector<16xf32>
    %169 = vector.shape_cast %168 : vector<16xf32> to vector<16x1xf32>
    %170 = tpu.reciprocal %169 {approx = true} : vector<16x1xf32> -> vector<16x1xf32>
    %171 = vector.broadcast %170 : vector<16x1xf32> to vector<16x16xf32>
    %172 = arith.mulf %167, %171 : vector<16x16xf32>
    %173 = vector.extract_strided_slice %12 {offsets = [0, 0], sizes = [16, 8], strides = [1, 1]} : vector<16x24xf32> to vector<16x8xf32>
    %cst_62 = arith.constant dense<0.000000e+00> : vector<16x8xf32>
    %174 = tpu.matmul %172, %173, %cst_62 {dimension_numbers = #tpu.dot_dimension_numbers<[1], [0], [0], [1], [0, 0, 1, 1], [], []>} : vector<16x16xf32>, vector<16x8xf32>, vector<16x8xf32> -> vector<16x8xf32>
    %175 = vector.extract_strided_slice %9 {offsets = [0, 0], sizes = [1, 8], strides = [1, 1]} : vector<1x24xf32> to vector<1x8xf32>
    %176 = vector.broadcast %175 : vector<1x8xf32> to vector<16x8xf32>
    %177 = arith.addf %174, %176 : vector<16x8xf32>
    %cst_63 = arith.constant 0.000000e+00 : f32
    %178 = vector.broadcast %cst_63 : f32 to vector<16x8xf32>
    %179 = arith.cmpf ogt, %177, %178 : vector<16x8xf32>
    %cst_64 = arith.constant 0.000000e+00 : f32
    %180 = vector.broadcast %cst_64 : f32 to vector<16x8xf32>
    %181 = arith.minimumf %177, %180 : vector<16x8xf32>
    %182 = math.exp %181 : vector<16x8xf32>
    %cst_65 = arith.constant 1.000000e+00 : f32
    %183 = vector.broadcast %cst_65 : f32 to vector<16x8xf32>
    %184 = arith.subf %182, %183 : vector<16x8xf32>
    %185 = arith.select %179, %177, %184 : vector<16x8xi1>, vector<16x8xf32>
    %c0_66 = arith.constant 0 : index
    %c0_67 = arith.constant 0 : index
    %186 = vector.load %arg10[%c0_66, %c0_67] : memref<16x24xf32, #tpu.memory_space<vmem>>, vector<16x8xf32>
    tpu.vector_store %arg10[%c0_66, %c0_67], %185 {strides = array<i32>} : memref<16x24xf32, #tpu.memory_space<vmem>>, vector<16x8xf32>,
    %cst_68 = arith.constant 0.000000e+00 : f32
    %187 = vector.broadcast %cst_68 : f32 to vector<16x16xf32>
    %188 = vector.extract_strided_slice %16 {offsets = [8, 0], sizes = [1, 16], strides = [1, 1]} : vector<24x16xf32> to vector<1x16xf32>
    %189 = vector.extract_strided_slice %15 {offsets = [0, 8], sizes = [16, 1], strides = [1, 1]} : vector<16x24xf32> to vector<16x1xf32>
    %190 = vector.broadcast %188 : vector<1x16xf32> to vector<16x16xf32>
    %191 = vector.broadcast %189 : vector<16x1xf32> to vector<16x16xf32>
    %192 = arith.addf %190, %191 : vector<16x16xf32>
    %c1_69 = arith.constant 1 : index
    %c8 = arith.constant 8 : index
    %193 = memref.load %arg5[%c1_69, %c8] : memref<2x24xf32, #tpu.memory_space<smem>>
    %194 = vector.broadcast %193 : f32 to vector<16x16xf32>
    %195 = arith.mulf %1, %194 : vector<16x16xf32>
    %196 = arith.addf %192, %195 : vector<16x16xf32>
    %cst_70 = arith.constant 0.000000e+00 : f32
    %197 = vector.broadcast %cst_70 : f32 to vector<16x16xf32>
    %198 = arith.cmpf oge, %196, %197 : vector<16x16xf32>
    %cst_71 = arith.constant 2.000000e-01 : f32
    %199 = vector.broadcast %cst_71 : f32 to vector<16x16xf32>
    %200 = arith.mulf %199, %196 : vector<16x16xf32>
    %201 = arith.select %198, %196, %200 : vector<16x16xi1>, vector<16x16xf32>
    %c0_72 = arith.constant 0 : index
    %c8_73 = arith.constant 8 : index
    %202 = memref.load %arg5[%c0_72, %c8_73] : memref<2x24xf32, #tpu.memory_space<smem>>
    %203 = vector.broadcast %202 : f32 to vector<16x16xf32>
    %204 = arith.mulf %203, %201 : vector<16x16xf32>
    %205 = arith.addf %187, %204 : vector<16x16xf32>
    %206 = vector.extract_strided_slice %16 {offsets = [9, 0], sizes = [1, 16], strides = [1, 1]} : vector<24x16xf32> to vector<1x16xf32>
    %207 = vector.extract_strided_slice %15 {offsets = [0, 9], sizes = [16, 1], strides = [1, 1]} : vector<16x24xf32> to vector<16x1xf32>
    %208 = vector.broadcast %206 : vector<1x16xf32> to vector<16x16xf32>
    %209 = vector.broadcast %207 : vector<16x1xf32> to vector<16x16xf32>
    %210 = arith.addf %208, %209 : vector<16x16xf32>
    %c1_74 = arith.constant 1 : index
    %c9 = arith.constant 9 : index
    %211 = memref.load %arg5[%c1_74, %c9] : memref<2x24xf32, #tpu.memory_space<smem>>
    %212 = vector.broadcast %211 : f32 to vector<16x16xf32>
    %213 = arith.mulf %1, %212 : vector<16x16xf32>
    %214 = arith.addf %210, %213 : vector<16x16xf32>
    %cst_75 = arith.constant 0.000000e+00 : f32
    %215 = vector.broadcast %cst_75 : f32 to vector<16x16xf32>
    %216 = arith.cmpf oge, %214, %215 : vector<16x16xf32>
    %cst_76 = arith.constant 2.000000e-01 : f32
    %217 = vector.broadcast %cst_76 : f32 to vector<16x16xf32>
    %218 = arith.mulf %217, %214 : vector<16x16xf32>
    %219 = arith.select %216, %214, %218 : vector<16x16xi1>, vector<16x16xf32>
    %c0_77 = arith.constant 0 : index
    %c9_78 = arith.constant 9 : index
    %220 = memref.load %arg5[%c0_77, %c9_78] : memref<2x24xf32, #tpu.memory_space<smem>>
    %221 = vector.broadcast %220 : f32 to vector<16x16xf32>
    %222 = arith.mulf %221, %219 : vector<16x16xf32>
    %223 = arith.addf %205, %222 : vector<16x16xf32>
    %224 = vector.extract_strided_slice %16 {offsets = [10, 0], sizes = [1, 16], strides = [1, 1]} : vector<24x16xf32> to vector<1x16xf32>
    %225 = vector.extract_strided_slice %15 {offsets = [0, 10], sizes = [16, 1], strides = [1, 1]} : vector<16x24xf32> to vector<16x1xf32>
    %226 = vector.broadcast %224 : vector<1x16xf32> to vector<16x16xf32>
    %227 = vector.broadcast %225 : vector<16x1xf32> to vector<16x16xf32>
    %228 = arith.addf %226, %227 : vector<16x16xf32>
    %c1_79 = arith.constant 1 : index
    %c10 = arith.constant 10 : index
    %229 = memref.load %arg5[%c1_79, %c10] : memref<2x24xf32, #tpu.memory_space<smem>>
    %230 = vector.broadcast %229 : f32 to vector<16x16xf32>
    %231 = arith.mulf %1, %230 : vector<16x16xf32>
    %232 = arith.addf %228, %231 : vector<16x16xf32>
    %cst_80 = arith.constant 0.000000e+00 : f32
    %233 = vector.broadcast %cst_80 : f32 to vector<16x16xf32>
    %234 = arith.cmpf oge, %232, %233 : vector<16x16xf32>
    %cst_81 = arith.constant 2.000000e-01 : f32
    %235 = vector.broadcast %cst_81 : f32 to vector<16x16xf32>
    %236 = arith.mulf %235, %232 : vector<16x16xf32>
    %237 = arith.select %234, %232, %236 : vector<16x16xi1>, vector<16x16xf32>
    %c0_82 = arith.constant 0 : index
    %c10_83 = arith.constant 10 : index
    %238 = memref.load %arg5[%c0_82, %c10_83] : memref<2x24xf32, #tpu.memory_space<smem>>
    %239 = vector.broadcast %238 : f32 to vector<16x16xf32>
    %240 = arith.mulf %239, %237 : vector<16x16xf32>
    %241 = arith.addf %223, %240 : vector<16x16xf32>
    %242 = vector.extract_strided_slice %16 {offsets = [11, 0], sizes = [1, 16], strides = [1, 1]} : vector<24x16xf32> to vector<1x16xf32>
    %243 = vector.extract_strided_slice %15 {offsets = [0, 11], sizes = [16, 1], strides = [1, 1]} : vector<16x24xf32> to vector<16x1xf32>
    %244 = vector.broadcast %242 : vector<1x16xf32> to vector<16x16xf32>
    %245 = vector.broadcast %243 : vector<16x1xf32> to vector<16x16xf32>
    %246 = arith.addf %244, %245 : vector<16x16xf32>
    %c1_84 = arith.constant 1 : index
    %c11 = arith.constant 11 : index
    %247 = memref.load %arg5[%c1_84, %c11] : memref<2x24xf32, #tpu.memory_space<smem>>
    %248 = vector.broadcast %247 : f32 to vector<16x16xf32>
    %249 = arith.mulf %1, %248 : vector<16x16xf32>
    %250 = arith.addf %246, %249 : vector<16x16xf32>
    %cst_85 = arith.constant 0.000000e+00 : f32
    %251 = vector.broadcast %cst_85 : f32 to vector<16x16xf32>
    %252 = arith.cmpf oge, %250, %251 : vector<16x16xf32>
    %cst_86 = arith.constant 2.000000e-01 : f32
    %253 = vector.broadcast %cst_86 : f32 to vector<16x16xf32>
    %254 = arith.mulf %253, %250 : vector<16x16xf32>
    %255 = arith.select %252, %250, %254 : vector<16x16xi1>, vector<16x16xf32>
    %c0_87 = arith.constant 0 : index
    %c11_88 = arith.constant 11 : index
    %256 = memref.load %arg5[%c0_87, %c11_88] : memref<2x24xf32, #tpu.memory_space<smem>>
    %257 = vector.broadcast %256 : f32 to vector<16x16xf32>
    %258 = arith.mulf %257, %255 : vector<16x16xf32>
    %259 = arith.addf %241, %258 : vector<16x16xf32>
    %260 = vector.extract_strided_slice %16 {offsets = [12, 0], sizes = [1, 16], strides = [1, 1]} : vector<24x16xf32> to vector<1x16xf32>
    %261 = vector.extract_strided_slice %15 {offsets = [0, 12], sizes = [16, 1], strides = [1, 1]} : vector<16x24xf32> to vector<16x1xf32>
    %262 = vector.broadcast %260 : vector<1x16xf32> to vector<16x16xf32>
    %263 = vector.broadcast %261 : vector<16x1xf32> to vector<16x16xf32>
    %264 = arith.addf %262, %263 : vector<16x16xf32>
    %c1_89 = arith.constant 1 : index
    %c12 = arith.constant 12 : index
    %265 = memref.load %arg5[%c1_89, %c12] : memref<2x24xf32, #tpu.memory_space<smem>>
    %266 = vector.broadcast %265 : f32 to vector<16x16xf32>
    %267 = arith.mulf %1, %266 : vector<16x16xf32>
    %268 = arith.addf %264, %267 : vector<16x16xf32>
    %cst_90 = arith.constant 0.000000e+00 : f32
    %269 = vector.broadcast %cst_90 : f32 to vector<16x16xf32>
    %270 = arith.cmpf oge, %268, %269 : vector<16x16xf32>
    %cst_91 = arith.constant 2.000000e-01 : f32
    %271 = vector.broadcast %cst_91 : f32 to vector<16x16xf32>
    %272 = arith.mulf %271, %268 : vector<16x16xf32>
    %273 = arith.select %270, %268, %272 : vector<16x16xi1>, vector<16x16xf32>
    %c0_92 = arith.constant 0 : index
    %c12_93 = arith.constant 12 : index
    %274 = memref.load %arg5[%c0_92, %c12_93] : memref<2x24xf32, #tpu.memory_space<smem>>
    %275 = vector.broadcast %274 : f32 to vector<16x16xf32>
    %276 = arith.mulf %275, %273 : vector<16x16xf32>
    %277 = arith.addf %259, %276 : vector<16x16xf32>
    %278 = vector.extract_strided_slice %16 {offsets = [13, 0], sizes = [1, 16], strides = [1, 1]} : vector<24x16xf32> to vector<1x16xf32>
    %279 = vector.extract_strided_slice %15 {offsets = [0, 13], sizes = [16, 1], strides = [1, 1]} : vector<16x24xf32> to vector<16x1xf32>
    %280 = vector.broadcast %278 : vector<1x16xf32> to vector<16x16xf32>
    %281 = vector.broadcast %279 : vector<16x1xf32> to vector<16x16xf32>
    %282 = arith.addf %280, %281 : vector<16x16xf32>
    %c1_94 = arith.constant 1 : index
    %c13 = arith.constant 13 : index
    %283 = memref.load %arg5[%c1_94, %c13] : memref<2x24xf32, #tpu.memory_space<smem>>
    %284 = vector.broadcast %283 : f32 to vector<16x16xf32>
    %285 = arith.mulf %1, %284 : vector<16x16xf32>
    %286 = arith.addf %282, %285 : vector<16x16xf32>
    %cst_95 = arith.constant 0.000000e+00 : f32
    %287 = vector.broadcast %cst_95 : f32 to vector<16x16xf32>
    %288 = arith.cmpf oge, %286, %287 : vector<16x16xf32>
    %cst_96 = arith.constant 2.000000e-01 : f32
    %289 = vector.broadcast %cst_96 : f32 to vector<16x16xf32>
    %290 = arith.mulf %289, %286 : vector<16x16xf32>
    %291 = arith.select %288, %286, %290 : vector<16x16xi1>, vector<16x16xf32>
    %c0_97 = arith.constant 0 : index
    %c13_98 = arith.constant 13 : index
    %292 = memref.load %arg5[%c0_97, %c13_98] : memref<2x24xf32, #tpu.memory_space<smem>>
    %293 = vector.broadcast %292 : f32 to vector<16x16xf32>
    %294 = arith.mulf %293, %291 : vector<16x16xf32>
    %295 = arith.addf %277, %294 : vector<16x16xf32>
    %296 = vector.extract_strided_slice %16 {offsets = [14, 0], sizes = [1, 16], strides = [1, 1]} : vector<24x16xf32> to vector<1x16xf32>
    %297 = vector.extract_strided_slice %15 {offsets = [0, 14], sizes = [16, 1], strides = [1, 1]} : vector<16x24xf32> to vector<16x1xf32>
    %298 = vector.broadcast %296 : vector<1x16xf32> to vector<16x16xf32>
    %299 = vector.broadcast %297 : vector<16x1xf32> to vector<16x16xf32>
    %300 = arith.addf %298, %299 : vector<16x16xf32>
    %c1_99 = arith.constant 1 : index
    %c14 = arith.constant 14 : index
    %301 = memref.load %arg5[%c1_99, %c14] : memref<2x24xf32, #tpu.memory_space<smem>>
    %302 = vector.broadcast %301 : f32 to vector<16x16xf32>
    %303 = arith.mulf %1, %302 : vector<16x16xf32>
    %304 = arith.addf %300, %303 : vector<16x16xf32>
    %cst_100 = arith.constant 0.000000e+00 : f32
    %305 = vector.broadcast %cst_100 : f32 to vector<16x16xf32>
    %306 = arith.cmpf oge, %304, %305 : vector<16x16xf32>
    %cst_101 = arith.constant 2.000000e-01 : f32
    %307 = vector.broadcast %cst_101 : f32 to vector<16x16xf32>
    %308 = arith.mulf %307, %304 : vector<16x16xf32>
    %309 = arith.select %306, %304, %308 : vector<16x16xi1>, vector<16x16xf32>
    %c0_102 = arith.constant 0 : index
    %c14_103 = arith.constant 14 : index
    %310 = memref.load %arg5[%c0_102, %c14_103] : memref<2x24xf32, #tpu.memory_space<smem>>
    %311 = vector.broadcast %310 : f32 to vector<16x16xf32>
    %312 = arith.mulf %311, %309 : vector<16x16xf32>
    %313 = arith.addf %295, %312 : vector<16x16xf32>
    %314 = vector.extract_strided_slice %16 {offsets = [15, 0], sizes = [1, 16], strides = [1, 1]} : vector<24x16xf32> to vector<1x16xf32>
    %315 = vector.extract_strided_slice %15 {offsets = [0, 15], sizes = [16, 1], strides = [1, 1]} : vector<16x24xf32> to vector<16x1xf32>
    %316 = vector.broadcast %314 : vector<1x16xf32> to vector<16x16xf32>
    %317 = vector.broadcast %315 : vector<16x1xf32> to vector<16x16xf32>
    %318 = arith.addf %316, %317 : vector<16x16xf32>
    %c1_104 = arith.constant 1 : index
    %c15 = arith.constant 15 : index
    %319 = memref.load %arg5[%c1_104, %c15] : memref<2x24xf32, #tpu.memory_space<smem>>
    %320 = vector.broadcast %319 : f32 to vector<16x16xf32>
    %321 = arith.mulf %1, %320 : vector<16x16xf32>
    %322 = arith.addf %318, %321 : vector<16x16xf32>
    %cst_105 = arith.constant 0.000000e+00 : f32
    %323 = vector.broadcast %cst_105 : f32 to vector<16x16xf32>
    %324 = arith.cmpf oge, %322, %323 : vector<16x16xf32>
    %cst_106 = arith.constant 2.000000e-01 : f32
    %325 = vector.broadcast %cst_106 : f32 to vector<16x16xf32>
    %326 = arith.mulf %325, %322 : vector<16x16xf32>
    %327 = arith.select %324, %322, %326 : vector<16x16xi1>, vector<16x16xf32>
    %c0_107 = arith.constant 0 : index
    %c15_108 = arith.constant 15 : index
    %328 = memref.load %arg5[%c0_107, %c15_108] : memref<2x24xf32, #tpu.memory_space<smem>>
    %329 = vector.broadcast %328 : f32 to vector<16x16xf32>
    %330 = arith.mulf %329, %327 : vector<16x16xf32>
    %331 = arith.addf %313, %330 : vector<16x16xf32>
    %332 = arith.addf %331, %2 : vector<16x16xf32>
    %cst_109 = arith.constant dense<0xFF800000> : vector<16xf32>
    %333 = vector.multi_reduction <maximumf>, %332, %cst_109 [1] : vector<16x16xf32> to vector<16xf32>
    %334 = vector.shape_cast %333 : vector<16xf32> to vector<16x1xf32>
    %335 = vector.broadcast %334 : vector<16x1xf32> to vector<16x16xf32>
    %336 = arith.subf %332, %335 : vector<16x16xf32>
    %337 = math.exp %336 : vector<16x16xf32>
    %cst_110 = arith.constant dense<0.000000e+00> : vector<16xf32>
    %338 = vector.multi_reduction <add>, %337, %cst_110 [1] : vector<16x16xf32> to vector<16xf32>
    %339 = vector.shape_cast %338 : vector<16xf32> to vector<16x1xf32>
    %340 = tpu.reciprocal %339 {approx = true} : vector<16x1xf32> -> vector<16x1xf32>
    %341 = vector.broadcast %340 : vector<16x1xf32> to vector<16x16xf32>
    %342 = arith.mulf %337, %341 : vector<16x16xf32>
    %343 = vector.extract_strided_slice %12 {offsets = [0, 8], sizes = [16, 8], strides = [1, 1]} : vector<16x24xf32> to vector<16x8xf32>
    %cst_111 = arith.constant dense<0.000000e+00> : vector<16x8xf32>
    %344 = tpu.matmul %342, %343, %cst_111 {dimension_numbers = #tpu.dot_dimension_numbers<[1], [0], [0], [1], [0, 0, 1, 1], [], []>} : vector<16x16xf32>, vector<16x8xf32>, vector<16x8xf32> -> vector<16x8xf32>
    %345 = vector.extract_strided_slice %9 {offsets = [0, 8], sizes = [1, 8], strides = [1, 1]} : vector<1x24xf32> to vector<1x8xf32>
    %346 = vector.broadcast %345 : vector<1x8xf32> to vector<16x8xf32>
    %347 = arith.addf %344, %346 : vector<16x8xf32>
    %cst_112 = arith.constant 0.000000e+00 : f32
    %348 = vector.broadcast %cst_112 : f32 to vector<16x8xf32>
    %349 = arith.cmpf ogt, %347, %348 : vector<16x8xf32>
    %cst_113 = arith.constant 0.000000e+00 : f32
    %350 = vector.broadcast %cst_113 : f32 to vector<16x8xf32>
    %351 = arith.minimumf %347, %350 : vector<16x8xf32>
    %352 = math.exp %351 : vector<16x8xf32>
    %cst_114 = arith.constant 1.000000e+00 : f32
    %353 = vector.broadcast %cst_114 : f32 to vector<16x8xf32>
    %354 = arith.subf %352, %353 : vector<16x8xf32>
    %355 = arith.select %349, %347, %354 : vector<16x8xi1>, vector<16x8xf32>
    %c0_115 = arith.constant 0 : index
    %c8_116 = arith.constant 8 : index
    %356 = vector.load %arg10[%c0_115, %c8_116] : memref<16x24xf32, #tpu.memory_space<vmem>>, vector<16x8xf32>
    tpu.vector_store %arg10[%c0_115, %c8_116], %355 {strides = array<i32>} : memref<16x24xf32, #tpu.memory_space<vmem>>, vector<16x8xf32>,
    %cst_117 = arith.constant 0.000000e+00 : f32
    %357 = vector.broadcast %cst_117 : f32 to vector<16x16xf32>
    %358 = vector.extract_strided_slice %16 {offsets = [16, 0], sizes = [1, 16], strides = [1, 1]} : vector<24x16xf32> to vector<1x16xf32>
    %359 = vector.extract_strided_slice %15 {offsets = [0, 16], sizes = [16, 1], strides = [1, 1]} : vector<16x24xf32> to vector<16x1xf32>
    %360 = vector.broadcast %358 : vector<1x16xf32> to vector<16x16xf32>
    %361 = vector.broadcast %359 : vector<16x1xf32> to vector<16x16xf32>
    %362 = arith.addf %360, %361 : vector<16x16xf32>
    %c1_118 = arith.constant 1 : index
    %c16 = arith.constant 16 : index
    %363 = memref.load %arg5[%c1_118, %c16] : memref<2x24xf32, #tpu.memory_space<smem>>
    %364 = vector.broadcast %363 : f32 to vector<16x16xf32>
    %365 = arith.mulf %1, %364 : vector<16x16xf32>
    %366 = arith.addf %362, %365 : vector<16x16xf32>
    %cst_119 = arith.constant 0.000000e+00 : f32
    %367 = vector.broadcast %cst_119 : f32 to vector<16x16xf32>
    %368 = arith.cmpf oge, %366, %367 : vector<16x16xf32>
    %cst_120 = arith.constant 2.000000e-01 : f32
    %369 = vector.broadcast %cst_120 : f32 to vector<16x16xf32>
    %370 = arith.mulf %369, %366 : vector<16x16xf32>
    %371 = arith.select %368, %366, %370 : vector<16x16xi1>, vector<16x16xf32>
    %c0_121 = arith.constant 0 : index
    %c16_122 = arith.constant 16 : index
    %372 = memref.load %arg5[%c0_121, %c16_122] : memref<2x24xf32, #tpu.memory_space<smem>>
    %373 = vector.broadcast %372 : f32 to vector<16x16xf32>
    %374 = arith.mulf %373, %371 : vector<16x16xf32>
    %375 = arith.addf %357, %374 : vector<16x16xf32>
    %376 = vector.extract_strided_slice %16 {offsets = [17, 0], sizes = [1, 16], strides = [1, 1]} : vector<24x16xf32> to vector<1x16xf32>
    %377 = vector.extract_strided_slice %15 {offsets = [0, 17], sizes = [16, 1], strides = [1, 1]} : vector<16x24xf32> to vector<16x1xf32>
    %378 = vector.broadcast %376 : vector<1x16xf32> to vector<16x16xf32>
    %379 = vector.broadcast %377 : vector<16x1xf32> to vector<16x16xf32>
    %380 = arith.addf %378, %379 : vector<16x16xf32>
    %c1_123 = arith.constant 1 : index
    %c17 = arith.constant 17 : index
    %381 = memref.load %arg5[%c1_123, %c17] : memref<2x24xf32, #tpu.memory_space<smem>>
    %382 = vector.broadcast %381 : f32 to vector<16x16xf32>
    %383 = arith.mulf %1, %382 : vector<16x16xf32>
    %384 = arith.addf %380, %383 : vector<16x16xf32>
    %cst_124 = arith.constant 0.000000e+00 : f32
    %385 = vector.broadcast %cst_124 : f32 to vector<16x16xf32>
    %386 = arith.cmpf oge, %384, %385 : vector<16x16xf32>
    %cst_125 = arith.constant 2.000000e-01 : f32
    %387 = vector.broadcast %cst_125 : f32 to vector<16x16xf32>
    %388 = arith.mulf %387, %384 : vector<16x16xf32>
    %389 = arith.select %386, %384, %388 : vector<16x16xi1>, vector<16x16xf32>
    %c0_126 = arith.constant 0 : index
    %c17_127 = arith.constant 17 : index
    %390 = memref.load %arg5[%c0_126, %c17_127] : memref<2x24xf32, #tpu.memory_space<smem>>
    %391 = vector.broadcast %390 : f32 to vector<16x16xf32>
    %392 = arith.mulf %391, %389 : vector<16x16xf32>
    %393 = arith.addf %375, %392 : vector<16x16xf32>
    %394 = vector.extract_strided_slice %16 {offsets = [18, 0], sizes = [1, 16], strides = [1, 1]} : vector<24x16xf32> to vector<1x16xf32>
    %395 = vector.extract_strided_slice %15 {offsets = [0, 18], sizes = [16, 1], strides = [1, 1]} : vector<16x24xf32> to vector<16x1xf32>
    %396 = vector.broadcast %394 : vector<1x16xf32> to vector<16x16xf32>
    %397 = vector.broadcast %395 : vector<16x1xf32> to vector<16x16xf32>
    %398 = arith.addf %396, %397 : vector<16x16xf32>
    %c1_128 = arith.constant 1 : index
    %c18 = arith.constant 18 : index
    %399 = memref.load %arg5[%c1_128, %c18] : memref<2x24xf32, #tpu.memory_space<smem>>
    %400 = vector.broadcast %399 : f32 to vector<16x16xf32>
    %401 = arith.mulf %1, %400 : vector<16x16xf32>
    %402 = arith.addf %398, %401 : vector<16x16xf32>
    %cst_129 = arith.constant 0.000000e+00 : f32
    %403 = vector.broadcast %cst_129 : f32 to vector<16x16xf32>
    %404 = arith.cmpf oge, %402, %403 : vector<16x16xf32>
    %cst_130 = arith.constant 2.000000e-01 : f32
    %405 = vector.broadcast %cst_130 : f32 to vector<16x16xf32>
    %406 = arith.mulf %405, %402 : vector<16x16xf32>
    %407 = arith.select %404, %402, %406 : vector<16x16xi1>, vector<16x16xf32>
    %c0_131 = arith.constant 0 : index
    %c18_132 = arith.constant 18 : index
    %408 = memref.load %arg5[%c0_131, %c18_132] : memref<2x24xf32, #tpu.memory_space<smem>>
    %409 = vector.broadcast %408 : f32 to vector<16x16xf32>
    %410 = arith.mulf %409, %407 : vector<16x16xf32>
    %411 = arith.addf %393, %410 : vector<16x16xf32>
    %412 = vector.extract_strided_slice %16 {offsets = [19, 0], sizes = [1, 16], strides = [1, 1]} : vector<24x16xf32> to vector<1x16xf32>
    %413 = vector.extract_strided_slice %15 {offsets = [0, 19], sizes = [16, 1], strides = [1, 1]} : vector<16x24xf32> to vector<16x1xf32>
    %414 = vector.broadcast %412 : vector<1x16xf32> to vector<16x16xf32>
    %415 = vector.broadcast %413 : vector<16x1xf32> to vector<16x16xf32>
    %416 = arith.addf %414, %415 : vector<16x16xf32>
    %c1_133 = arith.constant 1 : index
    %c19 = arith.constant 19 : index
    %417 = memref.load %arg5[%c1_133, %c19] : memref<2x24xf32, #tpu.memory_space<smem>>
    %418 = vector.broadcast %417 : f32 to vector<16x16xf32>
    %419 = arith.mulf %1, %418 : vector<16x16xf32>
    %420 = arith.addf %416, %419 : vector<16x16xf32>
    %cst_134 = arith.constant 0.000000e+00 : f32
    %421 = vector.broadcast %cst_134 : f32 to vector<16x16xf32>
    %422 = arith.cmpf oge, %420, %421 : vector<16x16xf32>
    %cst_135 = arith.constant 2.000000e-01 : f32
    %423 = vector.broadcast %cst_135 : f32 to vector<16x16xf32>
    %424 = arith.mulf %423, %420 : vector<16x16xf32>
    %425 = arith.select %422, %420, %424 : vector<16x16xi1>, vector<16x16xf32>
    %c0_136 = arith.constant 0 : index
    %c19_137 = arith.constant 19 : index
    %426 = memref.load %arg5[%c0_136, %c19_137] : memref<2x24xf32, #tpu.memory_space<smem>>
    %427 = vector.broadcast %426 : f32 to vector<16x16xf32>
    %428 = arith.mulf %427, %425 : vector<16x16xf32>
    %429 = arith.addf %411, %428 : vector<16x16xf32>
    %430 = vector.extract_strided_slice %16 {offsets = [20, 0], sizes = [1, 16], strides = [1, 1]} : vector<24x16xf32> to vector<1x16xf32>
    %431 = vector.extract_strided_slice %15 {offsets = [0, 20], sizes = [16, 1], strides = [1, 1]} : vector<16x24xf32> to vector<16x1xf32>
    %432 = vector.broadcast %430 : vector<1x16xf32> to vector<16x16xf32>
    %433 = vector.broadcast %431 : vector<16x1xf32> to vector<16x16xf32>
    %434 = arith.addf %432, %433 : vector<16x16xf32>
    %c1_138 = arith.constant 1 : index
    %c20 = arith.constant 20 : index
    %435 = memref.load %arg5[%c1_138, %c20] : memref<2x24xf32, #tpu.memory_space<smem>>
    %436 = vector.broadcast %435 : f32 to vector<16x16xf32>
    %437 = arith.mulf %1, %436 : vector<16x16xf32>
    %438 = arith.addf %434, %437 : vector<16x16xf32>
    %cst_139 = arith.constant 0.000000e+00 : f32
    %439 = vector.broadcast %cst_139 : f32 to vector<16x16xf32>
    %440 = arith.cmpf oge, %438, %439 : vector<16x16xf32>
    %cst_140 = arith.constant 2.000000e-01 : f32
    %441 = vector.broadcast %cst_140 : f32 to vector<16x16xf32>
    %442 = arith.mulf %441, %438 : vector<16x16xf32>
    %443 = arith.select %440, %438, %442 : vector<16x16xi1>, vector<16x16xf32>
    %c0_141 = arith.constant 0 : index
    %c20_142 = arith.constant 20 : index
    %444 = memref.load %arg5[%c0_141, %c20_142] : memref<2x24xf32, #tpu.memory_space<smem>>
    %445 = vector.broadcast %444 : f32 to vector<16x16xf32>
    %446 = arith.mulf %445, %443 : vector<16x16xf32>
    %447 = arith.addf %429, %446 : vector<16x16xf32>
    %448 = vector.extract_strided_slice %16 {offsets = [21, 0], sizes = [1, 16], strides = [1, 1]} : vector<24x16xf32> to vector<1x16xf32>
    %449 = vector.extract_strided_slice %15 {offsets = [0, 21], sizes = [16, 1], strides = [1, 1]} : vector<16x24xf32> to vector<16x1xf32>
    %450 = vector.broadcast %448 : vector<1x16xf32> to vector<16x16xf32>
    %451 = vector.broadcast %449 : vector<16x1xf32> to vector<16x16xf32>
    %452 = arith.addf %450, %451 : vector<16x16xf32>
    %c1_143 = arith.constant 1 : index
    %c21 = arith.constant 21 : index
    %453 = memref.load %arg5[%c1_143, %c21] : memref<2x24xf32, #tpu.memory_space<smem>>
    %454 = vector.broadcast %453 : f32 to vector<16x16xf32>
    %455 = arith.mulf %1, %454 : vector<16x16xf32>
    %456 = arith.addf %452, %455 : vector<16x16xf32>
    %cst_144 = arith.constant 0.000000e+00 : f32
    %457 = vector.broadcast %cst_144 : f32 to vector<16x16xf32>
    %458 = arith.cmpf oge, %456, %457 : vector<16x16xf32>
    %cst_145 = arith.constant 2.000000e-01 : f32
    %459 = vector.broadcast %cst_145 : f32 to vector<16x16xf32>
    %460 = arith.mulf %459, %456 : vector<16x16xf32>
    %461 = arith.select %458, %456, %460 : vector<16x16xi1>, vector<16x16xf32>
    %c0_146 = arith.constant 0 : index
    %c21_147 = arith.constant 21 : index
    %462 = memref.load %arg5[%c0_146, %c21_147] : memref<2x24xf32, #tpu.memory_space<smem>>
    %463 = vector.broadcast %462 : f32 to vector<16x16xf32>
    %464 = arith.mulf %463, %461 : vector<16x16xf32>
    %465 = arith.addf %447, %464 : vector<16x16xf32>
    %466 = vector.extract_strided_slice %16 {offsets = [22, 0], sizes = [1, 16], strides = [1, 1]} : vector<24x16xf32> to vector<1x16xf32>
    %467 = vector.extract_strided_slice %15 {offsets = [0, 22], sizes = [16, 1], strides = [1, 1]} : vector<16x24xf32> to vector<16x1xf32>
    %468 = vector.broadcast %466 : vector<1x16xf32> to vector<16x16xf32>
    %469 = vector.broadcast %467 : vector<16x1xf32> to vector<16x16xf32>
    %470 = arith.addf %468, %469 : vector<16x16xf32>
    %c1_148 = arith.constant 1 : index
    %c22 = arith.constant 22 : index
    %471 = memref.load %arg5[%c1_148, %c22] : memref<2x24xf32, #tpu.memory_space<smem>>
    %472 = vector.broadcast %471 : f32 to vector<16x16xf32>
    %473 = arith.mulf %1, %472 : vector<16x16xf32>
    %474 = arith.addf %470, %473 : vector<16x16xf32>
    %cst_149 = arith.constant 0.000000e+00 : f32
    %475 = vector.broadcast %cst_149 : f32 to vector<16x16xf32>
    %476 = arith.cmpf oge, %474, %475 : vector<16x16xf32>
    %cst_150 = arith.constant 2.000000e-01 : f32
    %477 = vector.broadcast %cst_150 : f32 to vector<16x16xf32>
    %478 = arith.mulf %477, %474 : vector<16x16xf32>
    %479 = arith.select %476, %474, %478 : vector<16x16xi1>, vector<16x16xf32>
    %c0_151 = arith.constant 0 : index
    %c22_152 = arith.constant 22 : index
    %480 = memref.load %arg5[%c0_151, %c22_152] : memref<2x24xf32, #tpu.memory_space<smem>>
    %481 = vector.broadcast %480 : f32 to vector<16x16xf32>
    %482 = arith.mulf %481, %479 : vector<16x16xf32>
    %483 = arith.addf %465, %482 : vector<16x16xf32>
    %484 = vector.extract_strided_slice %16 {offsets = [23, 0], sizes = [1, 16], strides = [1, 1]} : vector<24x16xf32> to vector<1x16xf32>
    %485 = vector.extract_strided_slice %15 {offsets = [0, 23], sizes = [16, 1], strides = [1, 1]} : vector<16x24xf32> to vector<16x1xf32>
    %486 = vector.broadcast %484 : vector<1x16xf32> to vector<16x16xf32>
    %487 = vector.broadcast %485 : vector<16x1xf32> to vector<16x16xf32>
    %488 = arith.addf %486, %487 : vector<16x16xf32>
    %c1_153 = arith.constant 1 : index
    %c23 = arith.constant 23 : index
    %489 = memref.load %arg5[%c1_153, %c23] : memref<2x24xf32, #tpu.memory_space<smem>>
    %490 = vector.broadcast %489 : f32 to vector<16x16xf32>
    %491 = arith.mulf %1, %490 : vector<16x16xf32>
    %492 = arith.addf %488, %491 : vector<16x16xf32>
    %cst_154 = arith.constant 0.000000e+00 : f32
    %493 = vector.broadcast %cst_154 : f32 to vector<16x16xf32>
    %494 = arith.cmpf oge, %492, %493 : vector<16x16xf32>
    %cst_155 = arith.constant 2.000000e-01 : f32
    %495 = vector.broadcast %cst_155 : f32 to vector<16x16xf32>
    %496 = arith.mulf %495, %492 : vector<16x16xf32>
    %497 = arith.select %494, %492, %496 : vector<16x16xi1>, vector<16x16xf32>
    %c0_156 = arith.constant 0 : index
    %c23_157 = arith.constant 23 : index
    %498 = memref.load %arg5[%c0_156, %c23_157] : memref<2x24xf32, #tpu.memory_space<smem>>
    %499 = vector.broadcast %498 : f32 to vector<16x16xf32>
    %500 = arith.mulf %499, %497 : vector<16x16xf32>
    %501 = arith.addf %483, %500 : vector<16x16xf32>
    %502 = arith.addf %501, %2 : vector<16x16xf32>
    %cst_158 = arith.constant dense<0xFF800000> : vector<16xf32>
    %503 = vector.multi_reduction <maximumf>, %502, %cst_158 [1] : vector<16x16xf32> to vector<16xf32>
    %504 = vector.shape_cast %503 : vector<16xf32> to vector<16x1xf32>
    %505 = vector.broadcast %504 : vector<16x1xf32> to vector<16x16xf32>
    %506 = arith.subf %502, %505 : vector<16x16xf32>
    %507 = math.exp %506 : vector<16x16xf32>
    %cst_159 = arith.constant dense<0.000000e+00> : vector<16xf32>
    %508 = vector.multi_reduction <add>, %507, %cst_159 [1] : vector<16x16xf32> to vector<16xf32>
    %509 = vector.shape_cast %508 : vector<16xf32> to vector<16x1xf32>
    %510 = tpu.reciprocal %509 {approx = true} : vector<16x1xf32> -> vector<16x1xf32>
    %511 = vector.broadcast %510 : vector<16x1xf32> to vector<16x16xf32>
    %512 = arith.mulf %507, %511 : vector<16x16xf32>
    %513 = vector.extract_strided_slice %12 {offsets = [0, 16], sizes = [16, 8], strides = [1, 1]} : vector<16x24xf32> to vector<16x8xf32>
    %cst_160 = arith.constant dense<0.000000e+00> : vector<16x8xf32>
    %514 = tpu.matmul %512, %513, %cst_160 {dimension_numbers = #tpu.dot_dimension_numbers<[1], [0], [0], [1], [0, 0, 1, 1], [], []>} : vector<16x16xf32>, vector<16x8xf32>, vector<16x8xf32> -> vector<16x8xf32>
    %515 = vector.extract_strided_slice %9 {offsets = [0, 16], sizes = [1, 8], strides = [1, 1]} : vector<1x24xf32> to vector<1x8xf32>
    %516 = vector.broadcast %515 : vector<1x8xf32> to vector<16x8xf32>
    %517 = arith.addf %514, %516 : vector<16x8xf32>
    %cst_161 = arith.constant 0.000000e+00 : f32
    %518 = vector.broadcast %cst_161 : f32 to vector<16x8xf32>
    %519 = arith.cmpf ogt, %517, %518 : vector<16x8xf32>
    %cst_162 = arith.constant 0.000000e+00 : f32
    %520 = vector.broadcast %cst_162 : f32 to vector<16x8xf32>
    %521 = arith.minimumf %517, %520 : vector<16x8xf32>
    %522 = math.exp %521 : vector<16x8xf32>
    %cst_163 = arith.constant 1.000000e+00 : f32
    %523 = vector.broadcast %cst_163 : f32 to vector<16x8xf32>
    %524 = arith.subf %522, %523 : vector<16x8xf32>
    %525 = arith.select %519, %517, %524 : vector<16x8xi1>, vector<16x8xf32>
    %c0_164 = arith.constant 0 : index
    %c16_165 = arith.constant 16 : index
    %526 = vector.load %arg10[%c0_164, %c16_165] : memref<16x24xf32, #tpu.memory_space<vmem>>, vector<16x8xf32>
    tpu.vector_store %arg10[%c0_164, %c16_165], %525 {strides = array<i32>} : memref<16x24xf32, #tpu.memory_space<vmem>>, vector<16x8xf32>,
    %c0_166 = arith.constant 0 : index
    %c0_167 = arith.constant 0 : index
    %527 = vector.load %arg10[%c0_166, %c0_167] : memref<16x24xf32, #tpu.memory_space<vmem>>, vector<16x24xf32>
    %c0_168 = arith.constant 0 : index
    %c0_169 = arith.constant 0 : index
    %c0_170 = arith.constant 0 : index
    %528 = vector.load %arg6[%c0_168, %c0_169, %c0_170] : memref<2x24x8xf32, #tpu.memory_space<vmem>>, vector<1x24x8xf32>
    %529 = vector.shape_cast %528 : vector<1x24x8xf32> to vector<24x8xf32>
    %c1_171 = arith.constant 1 : index
    %c0_172 = arith.constant 0 : index
    %c0_173 = arith.constant 0 : index
    %530 = vector.load %arg6[%c1_171, %c0_172, %c0_173] : memref<2x24x8xf32, #tpu.memory_space<vmem>>, vector<1x24x8xf32>
    %531 = vector.shape_cast %530 : vector<1x24x8xf32> to vector<24x8xf32>
    %c0_174 = arith.constant 0 : index
    %c0_175 = arith.constant 0 : index
    %532 = vector.load %arg7[%c0_174, %c0_175] : memref<3x8xf32, #tpu.memory_space<vmem>>, vector<1x8xf32>
    %c1_176 = arith.constant 1 : index
    %c0_177 = arith.constant 0 : index
    %533 = vector.load %arg7[%c1_176, %c0_177] : memref<3x8xf32, #tpu.memory_space<vmem>>, vector<1x8xf32>
    %c2_178 = arith.constant 2 : index
    %c0_179 = arith.constant 0 : index
    %534 = vector.load %arg7[%c2_178, %c0_179] : memref<3x8xf32, #tpu.memory_space<vmem>>, vector<1x8xf32>
    %cst_180 = arith.constant dense<0.000000e+00> : vector<16x8xf32>
    %535 = tpu.matmul %527, %529, %cst_180 {dimension_numbers = #tpu.dot_dimension_numbers<[1], [0], [0], [1], [0, 0, 1, 1], [], []>} : vector<16x24xf32>, vector<24x8xf32>, vector<16x8xf32> -> vector<16x8xf32>
    %536 = vector.broadcast %532 : vector<1x8xf32> to vector<16x8xf32>
    %537 = arith.addf %535, %536 : vector<16x8xf32>
    %cst_181 = arith.constant dense<0.000000e+00> : vector<16x8xf32>
    %538 = tpu.matmul %527, %531, %cst_181 {dimension_numbers = #tpu.dot_dimension_numbers<[1], [0], [0], [1], [0, 0, 1, 1], [], []>} : vector<16x24xf32>, vector<24x8xf32>, vector<16x8xf32> -> vector<16x8xf32>
    %539 = vector.broadcast %533 : vector<1x8xf32> to vector<16x8xf32>
    %540 = arith.addf %538, %539 : vector<16x8xf32>
    %541 = tpu.transpose %537, [1, 0] : vector<16x8xf32> -> vector<8x16xf32>
    %cst_182 = arith.constant 0.000000e+00 : f32
    %542 = vector.broadcast %cst_182 : f32 to vector<16x16xf32>
    %543 = vector.extract_strided_slice %541 {offsets = [0, 0], sizes = [1, 16], strides = [1, 1]} : vector<8x16xf32> to vector<1x16xf32>
    %544 = vector.extract_strided_slice %540 {offsets = [0, 0], sizes = [16, 1], strides = [1, 1]} : vector<16x8xf32> to vector<16x1xf32>
    %545 = vector.broadcast %543 : vector<1x16xf32> to vector<16x16xf32>
    %546 = vector.broadcast %544 : vector<16x1xf32> to vector<16x16xf32>
    %547 = arith.addf %545, %546 : vector<16x16xf32>
    %c1_183 = arith.constant 1 : index
    %c0_184 = arith.constant 0 : index
    %548 = memref.load %arg8[%c1_183, %c0_184] : memref<2x8xf32, #tpu.memory_space<smem>>
    %549 = vector.broadcast %548 : f32 to vector<16x16xf32>
    %550 = arith.mulf %1, %549 : vector<16x16xf32>
    %551 = arith.addf %547, %550 : vector<16x16xf32>
    %cst_185 = arith.constant 0.000000e+00 : f32
    %552 = vector.broadcast %cst_185 : f32 to vector<16x16xf32>
    %553 = arith.cmpf oge, %551, %552 : vector<16x16xf32>
    %cst_186 = arith.constant 2.000000e-01 : f32
    %554 = vector.broadcast %cst_186 : f32 to vector<16x16xf32>
    %555 = arith.mulf %554, %551 : vector<16x16xf32>
    %556 = arith.select %553, %551, %555 : vector<16x16xi1>, vector<16x16xf32>
    %c0_187 = arith.constant 0 : index
    %c0_188 = arith.constant 0 : index
    %557 = memref.load %arg8[%c0_187, %c0_188] : memref<2x8xf32, #tpu.memory_space<smem>>
    %558 = vector.broadcast %557 : f32 to vector<16x16xf32>
    %559 = arith.mulf %558, %556 : vector<16x16xf32>
    %560 = arith.addf %542, %559 : vector<16x16xf32>
    %561 = vector.extract_strided_slice %541 {offsets = [1, 0], sizes = [1, 16], strides = [1, 1]} : vector<8x16xf32> to vector<1x16xf32>
    %562 = vector.extract_strided_slice %540 {offsets = [0, 1], sizes = [16, 1], strides = [1, 1]} : vector<16x8xf32> to vector<16x1xf32>
    %563 = vector.broadcast %561 : vector<1x16xf32> to vector<16x16xf32>
    %564 = vector.broadcast %562 : vector<16x1xf32> to vector<16x16xf32>
    %565 = arith.addf %563, %564 : vector<16x16xf32>
    %c1_189 = arith.constant 1 : index
    %c1_190 = arith.constant 1 : index
    %566 = memref.load %arg8[%c1_189, %c1_190] : memref<2x8xf32, #tpu.memory_space<smem>>
    %567 = vector.broadcast %566 : f32 to vector<16x16xf32>
    %568 = arith.mulf %1, %567 : vector<16x16xf32>
    %569 = arith.addf %565, %568 : vector<16x16xf32>
    %cst_191 = arith.constant 0.000000e+00 : f32
    %570 = vector.broadcast %cst_191 : f32 to vector<16x16xf32>
    %571 = arith.cmpf oge, %569, %570 : vector<16x16xf32>
    %cst_192 = arith.constant 2.000000e-01 : f32
    %572 = vector.broadcast %cst_192 : f32 to vector<16x16xf32>
    %573 = arith.mulf %572, %569 : vector<16x16xf32>
    %574 = arith.select %571, %569, %573 : vector<16x16xi1>, vector<16x16xf32>
    %c0_193 = arith.constant 0 : index
    %c1_194 = arith.constant 1 : index
    %575 = memref.load %arg8[%c0_193, %c1_194] : memref<2x8xf32, #tpu.memory_space<smem>>
    %576 = vector.broadcast %575 : f32 to vector<16x16xf32>
    %577 = arith.mulf %576, %574 : vector<16x16xf32>
    %578 = arith.addf %560, %577 : vector<16x16xf32>
    %579 = vector.extract_strided_slice %541 {offsets = [2, 0], sizes = [1, 16], strides = [1, 1]} : vector<8x16xf32> to vector<1x16xf32>
    %580 = vector.extract_strided_slice %540 {offsets = [0, 2], sizes = [16, 1], strides = [1, 1]} : vector<16x8xf32> to vector<16x1xf32>
    %581 = vector.broadcast %579 : vector<1x16xf32> to vector<16x16xf32>
    %582 = vector.broadcast %580 : vector<16x1xf32> to vector<16x16xf32>
    %583 = arith.addf %581, %582 : vector<16x16xf32>
    %c1_195 = arith.constant 1 : index
    %c2_196 = arith.constant 2 : index
    %584 = memref.load %arg8[%c1_195, %c2_196] : memref<2x8xf32, #tpu.memory_space<smem>>
    %585 = vector.broadcast %584 : f32 to vector<16x16xf32>
    %586 = arith.mulf %1, %585 : vector<16x16xf32>
    %587 = arith.addf %583, %586 : vector<16x16xf32>
    %cst_197 = arith.constant 0.000000e+00 : f32
    %588 = vector.broadcast %cst_197 : f32 to vector<16x16xf32>
    %589 = arith.cmpf oge, %587, %588 : vector<16x16xf32>
    %cst_198 = arith.constant 2.000000e-01 : f32
    %590 = vector.broadcast %cst_198 : f32 to vector<16x16xf32>
    %591 = arith.mulf %590, %587 : vector<16x16xf32>
    %592 = arith.select %589, %587, %591 : vector<16x16xi1>, vector<16x16xf32>
    %c0_199 = arith.constant 0 : index
    %c2_200 = arith.constant 2 : index
    %593 = memref.load %arg8[%c0_199, %c2_200] : memref<2x8xf32, #tpu.memory_space<smem>>
    %594 = vector.broadcast %593 : f32 to vector<16x16xf32>
    %595 = arith.mulf %594, %592 : vector<16x16xf32>
    %596 = arith.addf %578, %595 : vector<16x16xf32>
    %597 = vector.extract_strided_slice %541 {offsets = [3, 0], sizes = [1, 16], strides = [1, 1]} : vector<8x16xf32> to vector<1x16xf32>
    %598 = vector.extract_strided_slice %540 {offsets = [0, 3], sizes = [16, 1], strides = [1, 1]} : vector<16x8xf32> to vector<16x1xf32>
    %599 = vector.broadcast %597 : vector<1x16xf32> to vector<16x16xf32>
    %600 = vector.broadcast %598 : vector<16x1xf32> to vector<16x16xf32>
    %601 = arith.addf %599, %600 : vector<16x16xf32>
    %c1_201 = arith.constant 1 : index
    %c3_202 = arith.constant 3 : index
    %602 = memref.load %arg8[%c1_201, %c3_202] : memref<2x8xf32, #tpu.memory_space<smem>>
    %603 = vector.broadcast %602 : f32 to vector<16x16xf32>
    %604 = arith.mulf %1, %603 : vector<16x16xf32>
    %605 = arith.addf %601, %604 : vector<16x16xf32>
    %cst_203 = arith.constant 0.000000e+00 : f32
    %606 = vector.broadcast %cst_203 : f32 to vector<16x16xf32>
    %607 = arith.cmpf oge, %605, %606 : vector<16x16xf32>
    %cst_204 = arith.constant 2.000000e-01 : f32
    %608 = vector.broadcast %cst_204 : f32 to vector<16x16xf32>
    %609 = arith.mulf %608, %605 : vector<16x16xf32>
    %610 = arith.select %607, %605, %609 : vector<16x16xi1>, vector<16x16xf32>
    %c0_205 = arith.constant 0 : index
    %c3_206 = arith.constant 3 : index
    %611 = memref.load %arg8[%c0_205, %c3_206] : memref<2x8xf32, #tpu.memory_space<smem>>
    %612 = vector.broadcast %611 : f32 to vector<16x16xf32>
    %613 = arith.mulf %612, %610 : vector<16x16xf32>
    %614 = arith.addf %596, %613 : vector<16x16xf32>
    %615 = vector.extract_strided_slice %541 {offsets = [4, 0], sizes = [1, 16], strides = [1, 1]} : vector<8x16xf32> to vector<1x16xf32>
    %616 = vector.extract_strided_slice %540 {offsets = [0, 4], sizes = [16, 1], strides = [1, 1]} : vector<16x8xf32> to vector<16x1xf32>
    %617 = vector.broadcast %615 : vector<1x16xf32> to vector<16x16xf32>
    %618 = vector.broadcast %616 : vector<16x1xf32> to vector<16x16xf32>
    %619 = arith.addf %617, %618 : vector<16x16xf32>
    %c1_207 = arith.constant 1 : index
    %c4_208 = arith.constant 4 : index
    %620 = memref.load %arg8[%c1_207, %c4_208] : memref<2x8xf32, #tpu.memory_space<smem>>
    %621 = vector.broadcast %620 : f32 to vector<16x16xf32>
    %622 = arith.mulf %1, %621 : vector<16x16xf32>
    %623 = arith.addf %619, %622 : vector<16x16xf32>
    %cst_209 = arith.constant 0.000000e+00 : f32
    %624 = vector.broadcast %cst_209 : f32 to vector<16x16xf32>
    %625 = arith.cmpf oge, %623, %624 : vector<16x16xf32>
    %cst_210 = arith.constant 2.000000e-01 : f32
    %626 = vector.broadcast %cst_210 : f32 to vector<16x16xf32>
    %627 = arith.mulf %626, %623 : vector<16x16xf32>
    %628 = arith.select %625, %623, %627 : vector<16x16xi1>, vector<16x16xf32>
    %c0_211 = arith.constant 0 : index
    %c4_212 = arith.constant 4 : index
    %629 = memref.load %arg8[%c0_211, %c4_212] : memref<2x8xf32, #tpu.memory_space<smem>>
    %630 = vector.broadcast %629 : f32 to vector<16x16xf32>
    %631 = arith.mulf %630, %628 : vector<16x16xf32>
    %632 = arith.addf %614, %631 : vector<16x16xf32>
    %633 = vector.extract_strided_slice %541 {offsets = [5, 0], sizes = [1, 16], strides = [1, 1]} : vector<8x16xf32> to vector<1x16xf32>
    %634 = vector.extract_strided_slice %540 {offsets = [0, 5], sizes = [16, 1], strides = [1, 1]} : vector<16x8xf32> to vector<16x1xf32>
    %635 = vector.broadcast %633 : vector<1x16xf32> to vector<16x16xf32>
    %636 = vector.broadcast %634 : vector<16x1xf32> to vector<16x16xf32>
    %637 = arith.addf %635, %636 : vector<16x16xf32>
    %c1_213 = arith.constant 1 : index
    %c5_214 = arith.constant 5 : index
    %638 = memref.load %arg8[%c1_213, %c5_214] : memref<2x8xf32, #tpu.memory_space<smem>>
    %639 = vector.broadcast %638 : f32 to vector<16x16xf32>
    %640 = arith.mulf %1, %639 : vector<16x16xf32>
    %641 = arith.addf %637, %640 : vector<16x16xf32>
    %cst_215 = arith.constant 0.000000e+00 : f32
    %642 = vector.broadcast %cst_215 : f32 to vector<16x16xf32>
    %643 = arith.cmpf oge, %641, %642 : vector<16x16xf32>
    %cst_216 = arith.constant 2.000000e-01 : f32
    %644 = vector.broadcast %cst_216 : f32 to vector<16x16xf32>
    %645 = arith.mulf %644, %641 : vector<16x16xf32>
    %646 = arith.select %643, %641, %645 : vector<16x16xi1>, vector<16x16xf32>
    %c0_217 = arith.constant 0 : index
    %c5_218 = arith.constant 5 : index
    %647 = memref.load %arg8[%c0_217, %c5_218] : memref<2x8xf32, #tpu.memory_space<smem>>
    %648 = vector.broadcast %647 : f32 to vector<16x16xf32>
    %649 = arith.mulf %648, %646 : vector<16x16xf32>
    %650 = arith.addf %632, %649 : vector<16x16xf32>
    %651 = vector.extract_strided_slice %541 {offsets = [6, 0], sizes = [1, 16], strides = [1, 1]} : vector<8x16xf32> to vector<1x16xf32>
    %652 = vector.extract_strided_slice %540 {offsets = [0, 6], sizes = [16, 1], strides = [1, 1]} : vector<16x8xf32> to vector<16x1xf32>
    %653 = vector.broadcast %651 : vector<1x16xf32> to vector<16x16xf32>
    %654 = vector.broadcast %652 : vector<16x1xf32> to vector<16x16xf32>
    %655 = arith.addf %653, %654 : vector<16x16xf32>
    %c1_219 = arith.constant 1 : index
    %c6_220 = arith.constant 6 : index
    %656 = memref.load %arg8[%c1_219, %c6_220] : memref<2x8xf32, #tpu.memory_space<smem>>
    %657 = vector.broadcast %656 : f32 to vector<16x16xf32>
    %658 = arith.mulf %1, %657 : vector<16x16xf32>
    %659 = arith.addf %655, %658 : vector<16x16xf32>
    %cst_221 = arith.constant 0.000000e+00 : f32
    %660 = vector.broadcast %cst_221 : f32 to vector<16x16xf32>
    %661 = arith.cmpf oge, %659, %660 : vector<16x16xf32>
    %cst_222 = arith.constant 2.000000e-01 : f32
    %662 = vector.broadcast %cst_222 : f32 to vector<16x16xf32>
    %663 = arith.mulf %662, %659 : vector<16x16xf32>
    %664 = arith.select %661, %659, %663 : vector<16x16xi1>, vector<16x16xf32>
    %c0_223 = arith.constant 0 : index
    %c6_224 = arith.constant 6 : index
    %665 = memref.load %arg8[%c0_223, %c6_224] : memref<2x8xf32, #tpu.memory_space<smem>>
    %666 = vector.broadcast %665 : f32 to vector<16x16xf32>
    %667 = arith.mulf %666, %664 : vector<16x16xf32>
    %668 = arith.addf %650, %667 : vector<16x16xf32>
    %669 = vector.extract_strided_slice %541 {offsets = [7, 0], sizes = [1, 16], strides = [1, 1]} : vector<8x16xf32> to vector<1x16xf32>
    %670 = vector.extract_strided_slice %540 {offsets = [0, 7], sizes = [16, 1], strides = [1, 1]} : vector<16x8xf32> to vector<16x1xf32>
    %671 = vector.broadcast %669 : vector<1x16xf32> to vector<16x16xf32>
    %672 = vector.broadcast %670 : vector<16x1xf32> to vector<16x16xf32>
    %673 = arith.addf %671, %672 : vector<16x16xf32>
    %c1_225 = arith.constant 1 : index
    %c7_226 = arith.constant 7 : index
    %674 = memref.load %arg8[%c1_225, %c7_226] : memref<2x8xf32, #tpu.memory_space<smem>>
    %675 = vector.broadcast %674 : f32 to vector<16x16xf32>
    %676 = arith.mulf %1, %675 : vector<16x16xf32>
    %677 = arith.addf %673, %676 : vector<16x16xf32>
    %cst_227 = arith.constant 0.000000e+00 : f32
    %678 = vector.broadcast %cst_227 : f32 to vector<16x16xf32>
    %679 = arith.cmpf oge, %677, %678 : vector<16x16xf32>
    %cst_228 = arith.constant 2.000000e-01 : f32
    %680 = vector.broadcast %cst_228 : f32 to vector<16x16xf32>
    %681 = arith.mulf %680, %677 : vector<16x16xf32>
    %682 = arith.select %679, %677, %681 : vector<16x16xi1>, vector<16x16xf32>
    %c0_229 = arith.constant 0 : index
    %c7_230 = arith.constant 7 : index
    %683 = memref.load %arg8[%c0_229, %c7_230] : memref<2x8xf32, #tpu.memory_space<smem>>
    %684 = vector.broadcast %683 : f32 to vector<16x16xf32>
    %685 = arith.mulf %684, %682 : vector<16x16xf32>
    %686 = arith.addf %668, %685 : vector<16x16xf32>
    %687 = arith.addf %686, %2 : vector<16x16xf32>
    %cst_231 = arith.constant dense<0xFF800000> : vector<16xf32>
    %688 = vector.multi_reduction <maximumf>, %687, %cst_231 [1] : vector<16x16xf32> to vector<16xf32>
    %689 = vector.shape_cast %688 : vector<16xf32> to vector<16x1xf32>
    %690 = vector.broadcast %689 : vector<16x1xf32> to vector<16x16xf32>
    %691 = arith.subf %687, %690 : vector<16x16xf32>
    %692 = math.exp %691 : vector<16x16xf32>
    %cst_232 = arith.constant dense<0.000000e+00> : vector<16xf32>
    %693 = vector.multi_reduction <add>, %692, %cst_232 [1] : vector<16x16xf32> to vector<16xf32>
    %694 = vector.shape_cast %693 : vector<16xf32> to vector<16x1xf32>
    %695 = tpu.reciprocal %694 {approx = true} : vector<16x1xf32> -> vector<16x1xf32>
    %696 = vector.broadcast %695 : vector<16x1xf32> to vector<16x16xf32>
    %697 = arith.mulf %692, %696 : vector<16x16xf32>
    %cst_233 = arith.constant dense<0.000000e+00> : vector<16x8xf32>
    %698 = tpu.matmul %697, %537, %cst_233 {dimension_numbers = #tpu.dot_dimension_numbers<[1], [0], [0], [1], [0, 0, 1, 1], [], []>} : vector<16x16xf32>, vector<16x8xf32>, vector<16x8xf32> -> vector<16x8xf32>
    %699 = vector.broadcast %534 : vector<1x8xf32> to vector<16x8xf32>
    %700 = arith.addf %698, %699 : vector<16x8xf32>
    %cst_234 = arith.constant 0.000000e+00 : f32
    %701 = vector.broadcast %cst_234 : f32 to vector<16x8xf32>
    %702 = arith.cmpf ogt, %700, %701 : vector<16x8xf32>
    %cst_235 = arith.constant 0.000000e+00 : f32
    %703 = vector.broadcast %cst_235 : f32 to vector<16x8xf32>
    %704 = arith.minimumf %700, %703 : vector<16x8xf32>
    %705 = math.exp %704 : vector<16x8xf32>
    %cst_236 = arith.constant 1.000000e+00 : f32
    %706 = vector.broadcast %cst_236 : f32 to vector<16x8xf32>
    %707 = arith.subf %705, %706 : vector<16x8xf32>
    %708 = arith.select %702, %700, %707 : vector<16x8xi1>, vector<16x8xf32>
    %c0_237 = arith.constant 0 : index
    %c0_238 = arith.constant 0 : index
    %709 = vector.load %arg9[%c0_237, %c0_238] : memref<16x8xf32, #tpu.memory_space<vmem>>, vector<16x8xf32>
    tpu.vector_store %arg9[%c0_237, %c0_238], %708 {strides = array<i32>} : memref<16x8xf32, #tpu.memory_space<vmem>>, vector<16x8xf32>,
    return
  }
}

</mosaic_0001>

<llo_original>
// kernel: affinity_gat_forward.1
$region0: #{affinity_gat_forward.1}
  #allocation0 [shape = 'u32[]', space=smem, size = 0x4, offset = 0x4, fixed_abs, tag = 'smem constant byte address 0x4 - core index']
  #allocation1 [shape = 'u32[144,128]{1,0:T(1,128)}', space=vmem, size = 0x12000, scoped, tag = 'internal scratch']
  #allocation2 [shape = 'f32[16,24]{1,0:T(8,128)}', space=vmem, size = 0x2000, scoped, tag = 'scratch operand']
  %s0 = inlined_call_operand.vmem [shape: f32[16,8], index: 0, kind: input, shape index: {}]
  %s1 = inlined_call_operand.vmem [shape: f32[16,16], index: 1, kind: input, shape index: {}]
  %s2 = inlined_call_operand.vmem [shape: f32[16,16], index: 2, kind: input, shape index: {}]
  %s3 = inlined_call_operand.vmem [shape: f32[2,8,24], index: 3, kind: input, shape index: {}]
  %s4 = inlined_call_operand.vmem [shape: f32[3,24], index: 4, kind: input, shape index: {}]
  %s5 = inlined_call_operand.vmem [shape: f32[2,24], index: 5, kind: input, shape index: {}]
  %s6 = inlined_call_operand.vmem [shape: f32[2,24,8], index: 6, kind: input, shape index: {}]
  %s7 = inlined_call_operand.vmem [shape: f32[3,8], index: 7, kind: input, shape index: {}]
  %s8 = inlined_call_operand.vmem [shape: f32[2,8], index: 8, kind: input, shape index: {}]
  %s9 = inlined_call_operand.vmem [shape: f32[16,8], index: 9, kind: output, shape index: {}]
  %s10 = sld [smem:[#allocation0]]
  $region54: #{affinity_gat_forward.1} parent=0
    _
  %s12 = ssub.s32 1, %s10
  %s13 = scalar_select 0, %s12, %s10
  $region1: #{affinity_gat_forward.1} parent=0
    #allocation3 [shape = 'u8[1024]{0}', space=smem, size = 0x400, scoped, tag = 'input window, operand 5, single buffered']
    #allocation4 [shape = 's32[1]{0}', space=sflag, size = 0x4, scoped, tag = 'scoped memory for affinity_gat_forward.1']
    #allocation5 [shape = 'u8[1024]{0}', space=smem, size = 0x400, scoped, tag = 'input window, operand 8, single buffered']
    #allocation6 [shape = 's32[1]{0}', space=sflag, size = 0x4, scoped, tag = 'scoped memory for affinity_gat_forward.1']
    %14 = vsyncpa [#allocation4], 0
    %15 = vsyncpa [#allocation6], 0
    // Predicated region
    $region2: #{affinity_gat_forward.1} parent=1 // pred_check
      _
    $region3: #{affinity_gat_forward.1} parent=1 // pred_check_branch
      %17 = sbr.rel (0) target = $region5
    $region4: #{affinity_gat_forward.1} parent=1 // pred_region
      _
    $region5: #{affinity_gat_forward.1} parent=1 // pred_fallthru
      _
    // Predicated region
    $region6: #{affinity_gat_forward.1} parent=1 // pred_check
      _
    $region7: #{affinity_gat_forward.1} parent=1 // pred_check_branch
      %19 = sbr.rel (0) target = $region9
    $region8: #{affinity_gat_forward.1} parent=1 // pred_region
      _
    $region9: #{affinity_gat_forward.1} parent=1 // pred_fallthru
      _
    // Predicated region
    $region10: #{affinity_gat_forward.1} parent=1 // pred_check
      _
    $region11: #{affinity_gat_forward.1} parent=1 // pred_check_branch
      %21 = sbr.rel (0) target = $region13
    $region12: #{affinity_gat_forward.1} parent=1 // pred_region
      _
    $region13: #{affinity_gat_forward.1} parent=1 // pred_fallthru
      _
    // Predicated region
    $region14: #{affinity_gat_forward.1} parent=1 // pred_check
      _
    $region15: #{affinity_gat_forward.1} parent=1 // pred_check_branch
      %23 = sbr.rel (0) target = $region17
    $region16: #{affinity_gat_forward.1} parent=1 // pred_region
      _
    $region17: #{affinity_gat_forward.1} parent=1 // pred_fallthru
      _
    // Predicated region
    $region18: #{affinity_gat_forward.1} parent=1 // pred_check
      _
    $region19: #{affinity_gat_forward.1} parent=1 // pred_check_branch
      %25 = sbr.rel (0) target = $region21
    $region20: #{affinity_gat_forward.1} parent=1 // pred_region
      _
    $region21: #{affinity_gat_forward.1} parent=1 // pred_fallthru
      _
    // Predicated region
    $region22: #{affinity_gat_forward.1} parent=1 // pred_check
      _
    $region23: #{affinity_gat_forward.1} parent=1 // pred_check_branch
      %27 = sbr.rel (0) target = $region25
    $region24: #{affinity_gat_forward.1} parent=1 // pred_region
      %s29 = ssub.s32 32, 32
      %30 = vsyncadd [#allocation4], %s29
      %s32 = sshll.u32 %s5, 4
      %s33 = int_to_ptr.vmem [resolvable:$true] %s32
      %35 = dma.vmem_to_smem %s33, 32, [#allocation3], [#allocation4]
    $region25: #{affinity_gat_forward.1} parent=1 // pred_fallthru
      _
    // Predicated region
    $region26: #{affinity_gat_forward.1} parent=1 // pred_check
      _
    $region27: #{affinity_gat_forward.1} parent=1 // pred_check_branch
      %37 = sbr.rel (0) target = $region29
    $region28: #{affinity_gat_forward.1} parent=1 // pred_region
      _
    $region29: #{affinity_gat_forward.1} parent=1 // pred_fallthru
      _
    // Predicated region
    $region30: #{affinity_gat_forward.1} parent=1 // pred_check
      _
    $region31: #{affinity_gat_forward.1} parent=1 // pred_check_branch
      %39 = sbr.rel (0) target = $region33
    $region32: #{affinity_gat_forward.1} parent=1 // pred_region
      _
    $region33: #{affinity_gat_forward.1} parent=1 // pred_fallthru
      _
    // Predicated region
    $region34: #{affinity_gat_forward.1} parent=1 // pred_check
      _
    $region35: #{affinity_gat_forward.1} parent=1 // pred_check_branch
      %41 = sbr.rel (0) target = $region37
    $region36: #{affinity_gat_forward.1} parent=1 // pred_region
      %s43 = ssub.s32 32, 32
      %44 = vsyncadd [#allocation6], %s43
      %s46 = sshll.u32 %s8, 4
      %s47 = int_to_ptr.vmem [resolvable:$true] %s46
      %49 = dma.vmem_to_smem %s47, 32, [#allocation5], [#allocation6]
    $region37: #{affinity_gat_forward.1} parent=1 // pred_fallthru
      _
    // Predicated region
    $region38: #{affinity_gat_forward.1} parent=1 // pred_check
      _
    $region39: #{affinity_gat_forward.1} parent=1 // pred_check_branch
      %51 = sbr.rel (0) target = $region41
    $region40: #{affinity_gat_forward.1} parent=1 // pred_region
      %52 = dma.done [#allocation4], 32
    $region41: #{affinity_gat_forward.1} parent=1 // pred_fallthru
      _
    // Predicated region
    $region42: #{affinity_gat_forward.1} parent=1 // pred_check
      _
    $region43: #{affinity_gat_forward.1} parent=1 // pred_check_branch
      %54 = sbr.rel (0) target = $region45
    $region44: #{affinity_gat_forward.1} parent=1 // pred_region
      %55 = dma.done [#allocation6], 32
    $region45: #{affinity_gat_forward.1} parent=1 // pred_fallthru
      _
    %56 = sfence
    %v57 = vld [vmem:[%s0] sm:$0xff]
    %v58 = vld [vmem:[%s0 + $0x8] sm:$0xff]
    %v59 = vld [vmem:[%s1] sm:$0xff]
    %v60 = vld [vmem:[%s1 + $0x8] sm:$0xff]
    %v61 = vld [vmem:[%s2] sm:$0xff]
    %v62 = vld [vmem:[%s2 + $0x8] sm:$0xff]
    %v63 = vld [vmem:[%s3] sm:$0xff]
    %s64 = scalar_lea.vmem %s3, 8
    %v65 = vld [vmem:[%s64] sm:$0xff]
    %v66 = vld [vmem:[%s4] sm:$0x1]
    %v67 = vld [vmem:[%s4 + $0x1] sm:$0x1]
    %v68 = vld [vmem:[%s4 + $0x2] sm:$0x1]
    %v69 = vlaneseq
    %v70 = vshrl.u32 %v69, 7
    %v71 = vsub.s32 0, %v70
    %v72 = vrot.slane %v66, %v71
    %vm73 = vcmask 64512
    %v75 = vsel %vm73, %v57, 0
    %v78 = vsel %vm73, %v58, 0
    %80 = vmatprep.subr.mxu0 0.0
    %81 = vmatpush1.msra.mxu0 0.0
    %82 = vmatprep.subr.mxu0 0.0
    %83 = vmatpush1.msra.mxu0 0.0
    %84 = vmatprep.subr.mxu0 0.0
    %85 = vmatpush1.msra.mxu0 0.0
    %86 = vmatprep.subr.mxu0 0.0
    %87 = vmatpush1.msra.mxu0 0.0
    %88 = vmatprep.subr.mxu0 0.0
    %89 = vmatpush1.msra.mxu0 0.0
    %90 = vmatprep.subr.mxu0 0.0
    %91 = vmatpush1.msra.mxu0 0.0
    %92 = vmatprep.subr.mxu0 0.0
    %93 = vmatpush1.msra.mxu0 0.0
    %94 = vmatprep.subr.mxu0 0.0
    %95 = vmatpush1.msra.mxu0 0.0
    %96 = vmatprep.subr.mxu0 0.0
    %97 = vmatpush1.msra.mxu0 0.0
    %98 = vmatprep.subr.mxu0 0.0
    %99 = vmatpush1.msra.mxu0 0.0
    %100 = vmatprep.subr.mxu0 0.0
    %101 = vmatpush1.msra.mxu0 0.0
    %102 = vmatprep.subr.mxu0 0.0
    %103 = vmatpush1.msra.mxu0 0.0
    %104 = vmatprep.subr.mxu0 0.0
    %105 = vmatpush1.msra.mxu0 0.0
    %106 = vmatprep.subr.mxu0 0.0
    %107 = vmatpush1.msra.mxu0 0.0
    %108 = vmatprep.subr.mxu0 0.0
    %109 = vmatpush1.msra.mxu0 0.0
    %110 = vmatprep.subr.mxu0 0.0
    %111 = vmatpush1.msra.mxu0 %v63
    %112 = vmatprep.subr.mxu0 0.0
    %113 = vmatpush2.msra.mxu0 0.0
    %114 = vmatprep.subr.mxu0 0.0
    %115 = vmatpush2.msra.mxu0 0.0
    %116 = vmatprep.subr.mxu0 0.0
    %117 = vmatpush2.msra.mxu0 0.0
    %118 = vmatprep.subr.mxu0 0.0
    %119 = vmatpush2.msra.mxu0 0.0
    %120 = vmatprep.subr.mxu0 0.0
    %121 = vmatpush2.msra.mxu0 0.0
    %122 = vmatprep.subr.mxu0 0.0
    %123 = vmatpush2.msra.mxu0 0.0
    %124 = vmatprep.subr.mxu0 0.0
    %125 = vmatpush2.msra.mxu0 0.0
    %126 = vmatprep.subr.mxu0 0.0
    %127 = vmatpush2.msra.mxu0 0.0
    %128 = vmatprep.subr.mxu0 0.0
    %129 = vmatpush2.msra.mxu0 0.0
    %130 = vmatprep.subr.mxu0 0.0
    %131 = vmatpush2.msra.mxu0 0.0
    %132 = vmatprep.subr.mxu0 0.0
    %133 = vmatpush2.msra.mxu0 0.0
    %134 = vmatprep.subr.mxu0 0.0
    %135 = vmatpush2.msra.mxu0 0.0
    %136 = vmatprep.subr.mxu0 0.0
    %137 = vmatpush2.msra.mxu0 0.0
    %138 = vmatprep.subr.mxu0 0.0
    %139 = vmatpush2.msra.mxu0 0.0
    %140 = vmatprep.subr.mxu0 0.0
    %141 = vmatpush2.msra.mxu0 0.0
    %142 = vmatprep.subr.mxu0 0.0
    %143 = vmatpush2.msra.mxu0 0.0
    %144 = vmatprep.mubr.f32.mxu0 0.0
    %145 = vmatmul.mubr.f32.gmra.mxu0 %v75
    %v146 = vpop.f32.mrf.mxu0
    %v147 = vadd.f32 %v72, %v146
    %v148 = vpop.f32.mrf.mxu0
    %149 = vmatprep.mubr.f32.mxu0 0.0
    %150 = vmatmul.mubr.f32.gmra.mxu0 %v78
    %v151 = vpop.f32.mrf.mxu0
    %v152 = vadd.f32 %v72, %v151
    %v153 = vpop.f32.mrf.mxu0
    %154 = vdwg.mxu0
    %v155 = vlaneseq
    %v156 = vshrl.u32 %v155, 7
    %v157 = vsub.s32 0, %v156
    %v158 = vrot.slane %v67, %v157
    %159 = vmatprep.subr.mxu0 0.0
    %160 = vmatpush1.msra.mxu0 0.0
    %161 = vmatprep.subr.mxu0 0.0
    %162 = vmatpush1.msra.mxu0 0.0
    %163 = vmatprep.subr.mxu0 0.0
    %164 = vmatpush1.msra.mxu0 0.0
    %165 = vmatprep.subr.mxu0 0.0
    %166 = vmatpush1.msra.mxu0 0.0
    %167 = vmatprep.subr.mxu0 0.0
    %168 = vmatpush1.msra.mxu0 0.0
    %169 = vmatprep.subr.mxu0 0.0
    %170 = vmatpush1.msra.mxu0 0.0
    %171 = vmatprep.subr.mxu0 0.0
    %172 = vmatpush1.msra.mxu0 0.0
    %173 = vmatprep.subr.mxu0 0.0
    %174 = vmatpush1.msra.mxu0 0.0
    %175 = vmatprep.subr.mxu0 0.0
    %176 = vmatpush1.msra.mxu0 0.0
    %177 = vmatprep.subr.mxu0 0.0
    %178 = vmatpush1.msra.mxu0 0.0
    %179 = vmatprep.subr.mxu0 0.0
    %180 = vmatpush1.msra.mxu0 0.0
    %181 = vmatprep.subr.mxu0 0.0
    %182 = vmatpush1.msra.mxu0 0.0
    %183 = vmatprep.subr.mxu0 0.0
    %184 = vmatpush1.msra.mxu0 0.0
    %185 = vmatprep.subr.mxu0 0.0
    %186 = vmatpush1.msra.mxu0 0.0
    %187 = vmatprep.subr.mxu0 0.0
    %188 = vmatpush1.msra.mxu0 0.0
    %189 = vmatprep.subr.mxu0 0.0
    %190 = vmatpush1.msra.mxu0 %v65
    %191 = vmatprep.subr.mxu0 0.0
    %192 = vmatpush2.msra.mxu0 0.0
    %193 = vmatprep.subr.mxu0 0.0
    %194 = vmatpush2.msra.mxu0 0.0
    %195 = vmatprep.subr.mxu0 0.0
    %196 = vmatpush2.msra.mxu0 0.0
    %197 = vmatprep.subr.mxu0 0.0
    %198 = vmatpush2.msra.mxu0 0.0
    %199 = vmatprep.subr.mxu0 0.0
    %200 = vmatpush2.msra.mxu0 0.0
    %201 = vmatprep.subr.mxu0 0.0
    %202 = vmatpush2.msra.mxu0 0.0
    %203 = vmatprep.subr.mxu0 0.0
    %204 = vmatpush2.msra.mxu0 0.0
    %205 = vmatprep.subr.mxu0 0.0
    %206 = vmatpush2.msra.mxu0 0.0
    %207 = vmatprep.subr.mxu0 0.0
    %208 = vmatpush2.msra.mxu0 0.0
    %209 = vmatprep.subr.mxu0 0.0
    %210 = vmatpush2.msra.mxu0 0.0
    %211 = vmatprep.subr.mxu0 0.0
    %212 = vmatpush2.msra.mxu0 0.0
    %213 = vmatprep.subr.mxu0 0.0
    %214 = vmatpush2.msra.mxu0 0.0
    %215 = vmatprep.subr.mxu0 0.0
    %216 = vmatpush2.msra.mxu0 0.0
    %217 = vmatprep.subr.mxu0 0.0
    %218 = vmatpush2.msra.mxu0 0.0
    %219 = vmatprep.subr.mxu0 0.0
    %220 = vmatpush2.msra.mxu0 0.0
    %221 = vmatprep.subr.mxu0 0.0
    %222 = vmatpush2.msra.mxu0 0.0
    %223 = vmatprep.mubr.f32.mxu0 0.0
    %224 = vmatmul.mubr.f32.gmra.mxu0 %v75
    %v225 = vpop.f32.mrf.mxu0
    %v226 = vadd.f32 %v158, %v225
    %v227 = vpop.f32.mrf.mxu0
    %228 = vmatprep.mubr.f32.mxu0 0.0
    %229 = vmatmul.mubr.f32.gmra.mxu0 %v78
    %v230 = vpop.f32.mrf.mxu0
    %v231 = vadd.f32 %v158, %v230
    %v232 = vpop.f32.mrf.mxu0
    %233 = vdwg.mxu0
    %234 = vxpose.xlu0.b32.start [1/16] %v147, 128
    %235 = vxpose.xlu0.b32.cont [2/16] %v152, 128
    %236 = vxpose.xlu0.b32.cont [3/16] 0.0, 128
    %237 = vxpose.xlu0.b32.cont [4/16] 0.0, 128
    %238 = vxpose.xlu0.b32.cont [5/16] 0.0, 128
    %239 = vxpose.xlu0.b32.cont [6/16] 0.0, 128
    %240 = vxpose.xlu0.b32.cont [7/16] 0.0, 128
    %241 = vxpose.xlu0.b32.cont [8/16] 0.0, 128
    %242 = vxpose.xlu0.b32.cont [9/16] 0.0, 128
    %243 = vxpose.xlu0.b32.cont [10/16] 0.0, 128
    %244 = vxpose.xlu0.b32.cont [11/16] 0.0, 128
    %245 = vxpose.xlu0.b32.cont [12/16] 0.0, 128
    %246 = vxpose.xlu0.b32.cont [13/16] 0.0, 128
    %247 = vxpose.xlu0.b32.cont [14/16] 0.0, 128
    %248 = vxpose.xlu0.b32.cont [15/16] 0.0, 128
    %249 = vxpose.xlu0.b32.end [16/16] 0.0, 128
    %v250 = vpop.trf.xlu0
    %v251 = vpop.trf.xlu0
    %v252 = vpop.trf.xlu0
    %v253 = vpop.trf.xlu0
    %v254 = vpop.trf.xlu0
    %v255 = vpop.trf.xlu0
    %v256 = vpop.trf.xlu0
    %v257 = vpop.trf.xlu0
    %v258 = vpop.trf.xlu0
    %v259 = vpop.trf.xlu0
    %v260 = vpop.trf.xlu0
    %v261 = vpop.trf.xlu0
    %v262 = vpop.trf.xlu0
    %v263 = vpop.trf.xlu0
    %v264 = vpop.trf.xlu0
    %v265 = vpop.trf.xlu0
    %v266 = vlaneseq
    %v267 = vshrl.u32 %v266, 7
    %v268 = vsub.s32 0, %v267
    %v269 = vrot.slane %v250, %v268
    %271 = vset.pattern.permute.xlu0 0
    %272 = vperm.xlu0 %271, %v226
    %v273 = vpop.permute.xlu0 %272
    %276 = vset.pattern.permute.xlu0 0
    %277 = vperm.xlu0 %276, %v231
    %v278 = vpop.permute.xlu0 %277
    %v280 = vadd.f32 %v269, %v273
    %v281 = vadd.f32 %v269, %v278
    %s282 = sld [smem:[#allocation3 + $0x80]]
    %v283 = vstv %s282
    %v284 = vmul.f32 %v59, %v283
    %v285 = vmul.f32 %v60, %v283
    %v286 = vadd.f32 %v280, %v284
    %v287 = vadd.f32 %v281, %v285
    %vm288 = vcmp.ge.f32.partialorder %v286, 0.0
    %vm289 = vcmp.ge.f32.partialorder %v287, 0.0
    %v290 = vmul.f32 %v286, 0.2
    %v291 = vmul.f32 %v287, 0.2
    %v292 = vsel %vm288, %v286, %v290
    %v293 = vsel %vm289, %v287, %v291
    %s294 = sld [smem:[#allocation3]]
    %v295 = vstv %s294
    %v296 = vmul.f32 %v295, %v292
    %v297 = vmul.f32 %v295, %v293
    %v298 = vadd.f32 %v296, 0.0
    %v299 = vadd.f32 %v297, 0.0
    %v300 = vlaneseq
    %v301 = vshrl.u32 %v300, 7
    %v302 = vsub.s32 1, %v301
    %v303 = vrot.slane %v250, %v302
    %304 = vset.pattern.permute.xlu0 1
    %305 = vperm.xlu0 %304, %v226
    %v306 = vpop.permute.xlu0 %305
    %308 = vset.pattern.permute.xlu0 1
    %309 = vperm.xlu0 %308, %v231
    %v310 = vpop.permute.xlu0 %309
    %v312 = vadd.f32 %v303, %v306
    %v313 = vadd.f32 %v303, %v310
    %s314 = sld [smem:[#allocation3 + $0x81]]
    %v315 = vstv %s314
    %v316 = vmul.f32 %v59, %v315
    %v317 = vmul.f32 %v60, %v315
    %v318 = vadd.f32 %v312, %v316
    %v319 = vadd.f32 %v313, %v317
    %vm320 = vcmp.ge.f32.partialorder %v318, 0.0
    %vm321 = vcmp.ge.f32.partialorder %v319, 0.0
    %v322 = vmul.f32 %v318, 0.2
    %v323 = vmul.f32 %v319, 0.2
    %v324 = vsel %vm320, %v318, %v322
    %v325 = vsel %vm321, %v319, %v323
    %s326 = sld [smem:[#allocation3 + $0x1]]
    %v327 = vstv %s326
    %v328 = vmul.f32 %v327, %v324
    %v329 = vmul.f32 %v327, %v325
    %v330 = vadd.f32 %v298, %v328
    %v331 = vadd.f32 %v299, %v329
    %v332 = vlaneseq
    %v333 = vshrl.u32 %v332, 7
    %v334 = vsub.s32 2, %v333
    %v335 = vrot.slane %v250, %v334
    %336 = vset.pattern.permute.xlu0 2
    %337 = vperm.xlu0 %336, %v226
    %v338 = vpop.permute.xlu0 %337
    %340 = vset.pattern.permute.xlu0 2
    %341 = vperm.xlu0 %340, %v231
    %v342 = vpop.permute.xlu0 %341
    %v344 = vadd.f32 %v335, %v338
    %v345 = vadd.f32 %v335, %v342
    %s346 = sld [smem:[#allocation3 + $0x82]]
    %v347 = vstv %s346
    %v348 = vmul.f32 %v59, %v347
    %v349 = vmul.f32 %v60, %v347
    %v350 = vadd.f32 %v344, %v348
    %v351 = vadd.f32 %v345, %v349
    %vm352 = vcmp.ge.f32.partialorder %v350, 0.0
    %vm353 = vcmp.ge.f32.partialorder %v351, 0.0
    %v354 = vmul.f32 %v350, 0.2
    %v355 = vmul.f32 %v351, 0.2
    %v356 = vsel %vm352, %v350, %v354
    %v357 = vsel %vm353, %v351, %v355
    %s358 = sld [smem:[#allocation3 + $0x2]]
    %v359 = vstv %s358
    %v360 = vmul.f32 %v359, %v356
    %v361 = vmul.f32 %v359, %v357
    %v362 = vadd.f32 %v330, %v360
    %v363 = vadd.f32 %v331, %v361
    %v364 = vlaneseq
    %v365 = vshrl.u32 %v364, 7
    %v366 = vsub.s32 3, %v365
    %v367 = vrot.slane %v250, %v366
    %368 = vset.pattern.permute.xlu0 3
    %369 = vperm.xlu0 %368, %v226
    %v370 = vpop.permute.xlu0 %369
    %372 = vset.pattern.permute.xlu0 3
    %373 = vperm.xlu0 %372, %v231
    %v374 = vpop.permute.xlu0 %373
    %v376 = vadd.f32 %v367, %v370
    %v377 = vadd.f32 %v367, %v374
    %s378 = sld [smem:[#allocation3 + $0x83]]
    %v379 = vstv %s378
    %v380 = vmul.f32 %v59, %v379
    %v381 = vmul.f32 %v60, %v379
    %v382 = vadd.f32 %v376, %v380
    %v383 = vadd.f32 %v377, %v381
    %vm384 = vcmp.ge.f32.partialorder %v382, 0.0
    %vm385 = vcmp.ge.f32.partialorder %v383, 0.0
    %v386 = vmul.f32 %v382, 0.2
    %v387 = vmul.f32 %v383, 0.2
    %v388 = vsel %vm384, %v382, %v386
    %v389 = vsel %vm385, %v383, %v387
    %s390 = sld [smem:[#allocation3 + $0x3]]
    %v391 = vstv %s390
    %v392 = vmul.f32 %v391, %v388
    %v393 = vmul.f32 %v391, %v389
    %v394 = vadd.f32 %v362, %v392
    %v395 = vadd.f32 %v363, %v393
    %v396 = vlaneseq
    %v397 = vshrl.u32 %v396, 7
    %v398 = vsub.s32 4, %v397
    %v399 = vrot.slane %v250, %v398
    %400 = vset.pattern.permute.xlu0 4
    %401 = vperm.xlu0 %400, %v226
    %v402 = vpop.permute.xlu0 %401
    %404 = vset.pattern.permute.xlu0 4
    %405 = vperm.xlu0 %404, %v231
    %v406 = vpop.permute.xlu0 %405
    %v408 = vadd.f32 %v399, %v402
    %v409 = vadd.f32 %v399, %v406
    %s410 = sld [smem:[#allocation3 + $0x84]]
    %v411 = vstv %s410
    %v412 = vmul.f32 %v59, %v411
    %v413 = vmul.f32 %v60, %v411
    %v414 = vadd.f32 %v408, %v412
    %v415 = vadd.f32 %v409, %v413
    %vm416 = vcmp.ge.f32.partialorder %v414, 0.0
    %vm417 = vcmp.ge.f32.partialorder %v415, 0.0
    %v418 = vmul.f32 %v414, 0.2
    %v419 = vmul.f32 %v415, 0.2
    %v420 = vsel %vm416, %v414, %v418
    %v421 = vsel %vm417, %v415, %v419
    %s422 = sld [smem:[#allocation3 + $0x4]]
    %v423 = vstv %s422
    %v424 = vmul.f32 %v423, %v420
    %v425 = vmul.f32 %v423, %v421
    %v426 = vadd.f32 %v394, %v424
    %v427 = vadd.f32 %v395, %v425
    %v428 = vlaneseq
    %v429 = vshrl.u32 %v428, 7
    %v430 = vsub.s32 5, %v429
    %v431 = vrot.slane %v250, %v430
    %432 = vset.pattern.permute.xlu0 5
    %433 = vperm.xlu0 %432, %v226
    %v434 = vpop.permute.xlu0 %433
    %436 = vset.pattern.permute.xlu0 5
    %437 = vperm.xlu0 %436, %v231
    %v438 = vpop.permute.xlu0 %437
    %v440 = vadd.f32 %v431, %v434
    %v441 = vadd.f32 %v431, %v438
    %s442 = sld [smem:[#allocation3 + $0x85]]
    %v443 = vstv %s442
    %v444 = vmul.f32 %v59, %v443
    %v445 = vmul.f32 %v60, %v443
    %v446 = vadd.f32 %v440, %v444
    %v447 = vadd.f32 %v441, %v445
    %vm448 = vcmp.ge.f32.partialorder %v446, 0.0
    %vm449 = vcmp.ge.f32.partialorder %v447, 0.0
    %v450 = vmul.f32 %v446, 0.2
    %v451 = vmul.f32 %v447, 0.2
    %v452 = vsel %vm448, %v446, %v450
    %v453 = vsel %vm449, %v447, %v451
    %s454 = sld [smem:[#allocation3 + $0x5]]
    %v455 = vstv %s454
    %v456 = vmul.f32 %v455, %v452
    %v457 = vmul.f32 %v455, %v453
    %v458 = vadd.f32 %v426, %v456
    %v459 = vadd.f32 %v427, %v457
    %v460 = vlaneseq
    %v461 = vshrl.u32 %v460, 7
    %v462 = vsub.s32 6, %v461
    %v463 = vrot.slane %v250, %v462
    %464 = vset.pattern.permute.xlu0 6
    %465 = vperm.xlu0 %464, %v226
    %v466 = vpop.permute.xlu0 %465
    %468 = vset.pattern.permute.xlu0 6
    %469 = vperm.xlu0 %468, %v231
    %v470 = vpop.permute.xlu0 %469
    %v472 = vadd.f32 %v463, %v466
    %v473 = vadd.f32 %v463, %v470
    %s474 = sld [smem:[#allocation3 + $0x86]]
    %v475 = vstv %s474
    %v476 = vmul.f32 %v59, %v475
    %v477 = vmul.f32 %v60, %v475
    %v478 = vadd.f32 %v472, %v476
    %v479 = vadd.f32 %v473, %v477
    %vm480 = vcmp.ge.f32.partialorder %v478, 0.0
    %vm481 = vcmp.ge.f32.partialorder %v479, 0.0
    %v482 = vmul.f32 %v478, 0.2
    %v483 = vmul.f32 %v479, 0.2
    %v484 = vsel %vm480, %v478, %v482
    %v485 = vsel %vm481, %v479, %v483
    %s486 = sld [smem:[#allocation3 + $0x6]]
    %v487 = vstv %s486
    %v488 = vmul.f32 %v487, %v484
    %v489 = vmul.f32 %v487, %v485
    %v490 = vadd.f32 %v458, %v488
    %v491 = vadd.f32 %v459, %v489
    %v492 = vlaneseq
    %v493 = vshrl.u32 %v492, 7
    %v494 = vsub.s32 7, %v493
    %v495 = vrot.slane %v250, %v494
    %496 = vset.pattern.permute.xlu0 7
    %497 = vperm.xlu0 %496, %v226
    %v498 = vpop.permute.xlu0 %497
    %500 = vset.pattern.permute.xlu0 7
    %501 = vperm.xlu0 %500, %v231
    %v502 = vpop.permute.xlu0 %501
    %v504 = vadd.f32 %v495, %v498
    %v505 = vadd.f32 %v495, %v502
    %s506 = sld [smem:[#allocation3 + $0x87]]
    %v507 = vstv %s506
    %v508 = vmul.f32 %v59, %v507
    %v509 = vmul.f32 %v60, %v507
    %v510 = vadd.f32 %v504, %v508
    %v511 = vadd.f32 %v505, %v509
    %vm512 = vcmp.ge.f32.partialorder %v510, 0.0
    %vm513 = vcmp.ge.f32.partialorder %v511, 0.0
    %v514 = vmul.f32 %v510, 0.2
    %v515 = vmul.f32 %v511, 0.2
    %v516 = vsel %vm512, %v510, %v514
    %v517 = vsel %vm513, %v511, %v515
    %s518 = sld [smem:[#allocation3 + $0x7]]
    %v519 = vstv %s518
    %v520 = vmul.f32 %v519, %v516
    %v521 = vmul.f32 %v519, %v517
    %v522 = vadd.f32 %v490, %v520
    %v523 = vadd.f32 %v491, %v521
    %v524 = vadd.f32 %v522, %v61
    %v525 = vadd.f32 %v523, %v62
    %vm526 = vcmask 130048
    %v527 = vsel %vm526, %v524, -inf
    %528 = vmax.xlane.f32.xlu0 %v527
    %v529 = vpop.xlane.xlu0 %528
    %v530 = vsel %vm526, %v525, -inf
    %531 = vmax.xlane.f32.xlu0 %v530
    %v532 = vpop.xlane.xlu0 %531
    %v533 = vsub.f32 %v524, %v529
    %v534 = vsub.f32 %v525, %v532
    %v535 = vmul.f32 %v533, 1.442695
    %v536 = vpow.pop %v535
    %v537 = vmul.f32 %v534, 1.442695
    %v538 = vpow.pop %v537
    %v539 = vsel %vm526, %v536, 0.0
    %540 = vadd.xlane.f32.xlu0 %v539
    %v541 = vpop.xlane.xlu0 %540
    %v542 = vsel %vm526, %v538, 0.0
    %543 = vadd.xlane.f32.xlu0 %v542
    %v544 = vpop.xlane.xlu0 %543
    %v545 = vrcp.pop %v541
    %v546 = vrcp.pop %v544
    %v547 = vmul.f32 %v536, %v545
    %v548 = vmul.f32 %v538, %v546
    %v549 = vlaneseq
    %v550 = vshrl.u32 %v549, 7
    %v551 = vsub.s32 0, %v550
    %v552 = vrot.slane %v68, %v551
    %v554 = vsel %vm526, %v547, 0
    %v557 = vsel %vm526, %v548, 0
    %559 = vmatprep.subr.mxu0 0.0
    %560 = vmatpush1.msra.mxu0 0.0
    %561 = vmatprep.subr.mxu0 0.0
    %562 = vmatpush1.msra.mxu0 0.0
    %563 = vmatprep.subr.mxu0 0.0
    %564 = vmatpush1.msra.mxu0 0.0
    %565 = vmatprep.subr.mxu0 0.0
    %566 = vmatpush1.msra.mxu0 0.0
    %567 = vmatprep.subr.mxu0 0.0
    %568 = vmatpush1.msra.mxu0 0.0
    %569 = vmatprep.subr.mxu0 0.0
    %570 = vmatpush1.msra.mxu0 0.0
    %571 = vmatprep.subr.mxu0 0.0
    %572 = vmatpush1.msra.mxu0 0.0
    %573 = vmatprep.subr.mxu0 0.0
    %574 = vmatpush1.msra.mxu0 0.0
    %575 = vmatprep.subr.mxu0 0.0
    %576 = vmatpush1.msra.mxu0 0.0
    %577 = vmatprep.subr.mxu0 0.0
    %578 = vmatpush1.msra.mxu0 0.0
    %579 = vmatprep.subr.mxu0 0.0
    %580 = vmatpush1.msra.mxu0 0.0
    %581 = vmatprep.subr.mxu0 0.0
    %582 = vmatpush1.msra.mxu0 0.0
    %583 = vmatprep.subr.mxu0 0.0
    %584 = vmatpush1.msra.mxu0 0.0
    %585 = vmatprep.subr.mxu0 0.0
    %586 = vmatpush1.msra.mxu0 0.0
    %587 = vmatprep.subr.mxu0 0.0
    %588 = vmatpush1.msra.mxu0 %v152
    %589 = vmatprep.subr.mxu0 0.0
    %590 = vmatpush1.msra.mxu0 %v147
    %591 = vmatprep.subr.mxu0 0.0
    %592 = vmatpush2.msra.mxu0 0.0
    %593 = vmatprep.subr.mxu0 0.0
    %594 = vmatpush2.msra.mxu0 0.0
    %595 = vmatprep.subr.mxu0 0.0
    %596 = vmatpush2.msra.mxu0 0.0
    %597 = vmatprep.subr.mxu0 0.0
    %598 = vmatpush2.msra.mxu0 0.0
    %599 = vmatprep.subr.mxu0 0.0
    %600 = vmatpush2.msra.mxu0 0.0
    %601 = vmatprep.subr.mxu0 0.0
    %602 = vmatpush2.msra.mxu0 0.0
    %603 = vmatprep.subr.mxu0 0.0
    %604 = vmatpush2.msra.mxu0 0.0
    %605 = vmatprep.subr.mxu0 0.0
    %606 = vmatpush2.msra.mxu0 0.0
    %607 = vmatprep.subr.mxu0 0.0
    %608 = vmatpush2.msra.mxu0 0.0
    %609 = vmatprep.subr.mxu0 0.0
    %610 = vmatpush2.msra.mxu0 0.0
    %611 = vmatprep.subr.mxu0 0.0
    %612 = vmatpush2.msra.mxu0 0.0
    %613 = vmatprep.subr.mxu0 0.0
    %614 = vmatpush2.msra.mxu0 0.0
    %615 = vmatprep.subr.mxu0 0.0
    %616 = vmatpush2.msra.mxu0 0.0
    %617 = vmatprep.subr.mxu0 0.0
    %618 = vmatpush2.msra.mxu0 0.0
    %619 = vmatprep.subr.mxu0 0.0
    %620 = vmatpush2.msra.mxu0 0.0
    %621 = vmatprep.subr.mxu0 0.0
    %622 = vmatpush2.msra.mxu0 0.0
    %623 = vmatprep.mubr.f32.mxu0 0.0
    %624 = vmatmul.mubr.f32.gmra.mxu0 %v554
    %v625 = vpop.f32.mrf.mxu0
    %v626 = vadd.f32 %v552, %v625
    %v627 = vpop.f32.mrf.mxu0
    %628 = vmatprep.mubr.f32.mxu0 0.0
    %629 = vmatmul.mubr.f32.gmra.mxu0 %v557
    %v630 = vpop.f32.mrf.mxu0
    %v631 = vadd.f32 %v552, %v630
    %v632 = vpop.f32.mrf.mxu0
    %633 = vdwg.mxu0
    %vm634 = vcmp.gt.f32.partialorder %v626, 0.0
    %vm635 = vcmp.gt.f32.partialorder %v631, 0.0
    %v636 = vmin.f32 %v626, 0.0
    %v637 = vmin.f32 %v631, 0.0
    %v638 = vmul.f32 %v636, 1.442695
    %v639 = vpow.pop %v638
    %v640 = vmul.f32 %v637, 1.442695
    %v641 = vpow.pop %v640
    %v642 = vsub.f32 %v639, 1.0
    %v643 = vsub.f32 %v641, 1.0
    %v644 = vsel %vm634, %v626, %v642
    %v645 = vsel %vm635, %v631, %v643
    %646 = vst.msk [vmem:[#allocation2] sm:$0xff] %vm73, %v644
    %647 = vst.msk [vmem:[#allocation2 + $0x8] sm:$0xff] %vm73, %v645
    %v648 = vlaneseq
    %v649 = vshrl.u32 %v648, 7
    %v650 = vsub.s32 0, %v649
    %v651 = vrot.slane %v251, %v650
    %652 = vset.pattern.permute.xlu0 8
    %653 = vperm.xlu0 %652, %v226
    %v654 = vpop.permute.xlu0 %653
    %656 = vset.pattern.permute.xlu0 8
    %657 = vperm.xlu0 %656, %v231
    %v658 = vpop.permute.xlu0 %657
    %v660 = vadd.f32 %v651, %v654
    %v661 = vadd.f32 %v651, %v658
    %s662 = sld [smem:[#allocation3 + $0x88]]
    %v663 = vstv %s662
    %v664 = vmul.f32 %v59, %v663
    %v665 = vmul.f32 %v60, %v663
    %v666 = vadd.f32 %v660, %v664
    %v667 = vadd.f32 %v661, %v665
    %vm668 = vcmp.ge.f32.partialorder %v666, 0.0
    %vm669 = vcmp.ge.f32.partialorder %v667, 0.0
    %v670 = vmul.f32 %v666, 0.2
    %v671 = vmul.f32 %v667, 0.2
    %v672 = vsel %vm668, %v666, %v670
    %v673 = vsel %vm669, %v667, %v671
    %s674 = sld [smem:[#allocation3 + $0x8]]
    %v675 = vstv %s674
    %v676 = vmul.f32 %v675, %v672
    %v677 = vmul.f32 %v675, %v673
    %v678 = vadd.f32 %v676, 0.0
    %v679 = vadd.f32 %v677, 0.0
    %v680 = vlaneseq
    %v681 = vshrl.u32 %v680, 7
    %v682 = vsub.s32 1, %v681
    %v683 = vrot.slane %v251, %v682
    %684 = vset.pattern.permute.xlu0 9
    %685 = vperm.xlu0 %684, %v226
    %v686 = vpop.permute.xlu0 %685
    %688 = vset.pattern.permute.xlu0 9
    %689 = vperm.xlu0 %688, %v231
    %v690 = vpop.permute.xlu0 %689
    %v692 = vadd.f32 %v683, %v686
    %v693 = vadd.f32 %v683, %v690
    %s694 = sld [smem:[#allocation3 + $0x89]]
    %v695 = vstv %s694
    %v696 = vmul.f32 %v59, %v695
    %v697 = vmul.f32 %v60, %v695
    %v698 = vadd.f32 %v692, %v696
    %v699 = vadd.f32 %v693, %v697
    %vm700 = vcmp.ge.f32.partialorder %v698, 0.0
    %vm701 = vcmp.ge.f32.partialorder %v699, 0.0
    %v702 = vmul.f32 %v698, 0.2
    %v703 = vmul.f32 %v699, 0.2
    %v704 = vsel %vm700, %v698, %v702
    %v705 = vsel %vm701, %v699, %v703
    %s706 = sld [smem:[#allocation3 + $0x9]]
    %v707 = vstv %s706
    %v708 = vmul.f32 %v707, %v704
    %v709 = vmul.f32 %v707, %v705
    %v710 = vadd.f32 %v678, %v708
    %v711 = vadd.f32 %v679, %v709
    %v712 = vlaneseq
    %v713 = vshrl.u32 %v712, 7
    %v714 = vsub.s32 2, %v713
    %v715 = vrot.slane %v251, %v714
    %716 = vset.pattern.permute.xlu0 10
    %717 = vperm.xlu0 %716, %v226
    %v718 = vpop.permute.xlu0 %717
    %720 = vset.pattern.permute.xlu0 10
    %721 = vperm.xlu0 %720, %v231
    %v722 = vpop.permute.xlu0 %721
    %v724 = vadd.f32 %v715, %v718
    %v725 = vadd.f32 %v715, %v722
    %s726 = sld [smem:[#allocation3 + $0x8a]]
    %v727 = vstv %s726
    %v728 = vmul.f32 %v59, %v727
    %v729 = vmul.f32 %v60, %v727
    %v730 = vadd.f32 %v724, %v728
    %v731 = vadd.f32 %v725, %v729
    %vm732 = vcmp.ge.f32.partialorder %v730, 0.0
    %vm733 = vcmp.ge.f32.partialorder %v731, 0.0
    %v734 = vmul.f32 %v730, 0.2
    %v735 = vmul.f32 %v731, 0.2
    %v736 = vsel %vm732, %v730, %v734
    %v737 = vsel %vm733, %v731, %v735
    %s738 = sld [smem:[#allocation3 + $0xa]]
    %v739 = vstv %s738
    %v740 = vmul.f32 %v739, %v736
    %v741 = vmul.f32 %v739, %v737
    %v742 = vadd.f32 %v710, %v740
    %v743 = vadd.f32 %v711, %v741
    %v744 = vlaneseq
    %v745 = vshrl.u32 %v744, 7
    %v746 = vsub.s32 3, %v745
    %v747 = vrot.slane %v251, %v746
    %748 = vset.pattern.permute.xlu0 11
    %749 = vperm.xlu0 %748, %v226
    %v750 = vpop.permute.xlu0 %749
    %752 = vset.pattern.permute.xlu0 11
    %753 = vperm.xlu0 %752, %v231
    %v754 = vpop.permute.xlu0 %753
    %v756 = vadd.f32 %v747, %v750
    %v757 = vadd.f32 %v747, %v754
    %s758 = sld [smem:[#allocation3 + $0x8b]]
    %v759 = vstv %s758
    %v760 = vmul.f32 %v59, %v759
    %v761 = vmul.f32 %v60, %v759
    %v762 = vadd.f32 %v756, %v760
    %v763 = vadd.f32 %v757, %v761
    %vm764 = vcmp.ge.f32.partialorder %v762, 0.0
    %vm765 = vcmp.ge.f32.partialorder %v763, 0.0
    %v766 = vmul.f32 %v762, 0.2
    %v767 = vmul.f32 %v763, 0.2
    %v768 = vsel %vm764, %v762, %v766
    %v769 = vsel %vm765, %v763, %v767
    %s770 = sld [smem:[#allocation3 + $0xb]]
    %v771 = vstv %s770
    %v772 = vmul.f32 %v771, %v768
    %v773 = vmul.f32 %v771, %v769
    %v774 = vadd.f32 %v742, %v772
    %v775 = vadd.f32 %v743, %v773
    %v776 = vlaneseq
    %v777 = vshrl.u32 %v776, 7
    %v778 = vsub.s32 4, %v777
    %v779 = vrot.slane %v251, %v778
    %780 = vset.pattern.permute.xlu0 12
    %781 = vperm.xlu0 %780, %v226
    %v782 = vpop.permute.xlu0 %781
    %784 = vset.pattern.permute.xlu0 12
    %785 = vperm.xlu0 %784, %v231
    %v786 = vpop.permute.xlu0 %785
    %v788 = vadd.f32 %v779, %v782
    %v789 = vadd.f32 %v779, %v786
    %s790 = sld [smem:[#allocation3 + $0x8c]]
    %v791 = vstv %s790
    %v792 = vmul.f32 %v59, %v791
    %v793 = vmul.f32 %v60, %v791
    %v794 = vadd.f32 %v788, %v792
    %v795 = vadd.f32 %v789, %v793
    %vm796 = vcmp.ge.f32.partialorder %v794, 0.0
    %vm797 = vcmp.ge.f32.partialorder %v795, 0.0
    %v798 = vmul.f32 %v794, 0.2
    %v799 = vmul.f32 %v795, 0.2
    %v800 = vsel %vm796, %v794, %v798
    %v801 = vsel %vm797, %v795, %v799
    %s802 = sld [smem:[#allocation3 + $0xc]]
    %v803 = vstv %s802
    %v804 = vmul.f32 %v803, %v800
    %v805 = vmul.f32 %v803, %v801
    %v806 = vadd.f32 %v774, %v804
    %v807 = vadd.f32 %v775, %v805
    %v808 = vlaneseq
    %v809 = vshrl.u32 %v808, 7
    %v810 = vsub.s32 5, %v809
    %v811 = vrot.slane %v251, %v810
    %812 = vset.pattern.permute.xlu0 13
    %813 = vperm.xlu0 %812, %v226
    %v814 = vpop.permute.xlu0 %813
    %816 = vset.pattern.permute.xlu0 13
    %817 = vperm.xlu0 %816, %v231
    %v818 = vpop.permute.xlu0 %817
    %v820 = vadd.f32 %v811, %v814
    %v821 = vadd.f32 %v811, %v818
    %s822 = sld [smem:[#allocation3 + $0x8d]]
    %v823 = vstv %s822
    %v824 = vmul.f32 %v59, %v823
    %v825 = vmul.f32 %v60, %v823
    %v826 = vadd.f32 %v820, %v824
    %v827 = vadd.f32 %v821, %v825
    %vm828 = vcmp.ge.f32.partialorder %v826, 0.0
    %vm829 = vcmp.ge.f32.partialorder %v827, 0.0
    %v830 = vmul.f32 %v826, 0.2
    %v831 = vmul.f32 %v827, 0.2
    %v832 = vsel %vm828, %v826, %v830
    %v833 = vsel %vm829, %v827, %v831
    %s834 = sld [smem:[#allocation3 + $0xd]]
    %v835 = vstv %s834
    %v836 = vmul.f32 %v835, %v832
    %v837 = vmul.f32 %v835, %v833
    %v838 = vadd.f32 %v806, %v836
    %v839 = vadd.f32 %v807, %v837
    %v840 = vlaneseq
    %v841 = vshrl.u32 %v840, 7
    %v842 = vsub.s32 6, %v841
    %v843 = vrot.slane %v251, %v842
    %844 = vset.pattern.permute.xlu0 14
    %845 = vperm.xlu0 %844, %v226
    %v846 = vpop.permute.xlu0 %845
    %848 = vset.pattern.permute.xlu0 14
    %849 = vperm.xlu0 %848, %v231
    %v850 = vpop.permute.xlu0 %849
    %v852 = vadd.f32 %v843, %v846
    %v853 = vadd.f32 %v843, %v850
    %s854 = sld [smem:[#allocation3 + $0x8e]]
    %v855 = vstv %s854
    %v856 = vmul.f32 %v59, %v855
    %v857 = vmul.f32 %v60, %v855
    %v858 = vadd.f32 %v852, %v856
    %v859 = vadd.f32 %v853, %v857
    %vm860 = vcmp.ge.f32.partialorder %v858, 0.0
    %vm861 = vcmp.ge.f32.partialorder %v859, 0.0
    %v862 = vmul.f32 %v858, 0.2
    %v863 = vmul.f32 %v859, 0.2
    %v864 = vsel %vm860, %v858, %v862
    %v865 = vsel %vm861, %v859, %v863
    %s866 = sld [smem:[#allocation3 + $0xe]]
    %v867 = vstv %s866
    %v868 = vmul.f32 %v867, %v864
    %v869 = vmul.f32 %v867, %v865
    %v870 = vadd.f32 %v838, %v868
    %v871 = vadd.f32 %v839, %v869
    %v872 = vlaneseq
    %v873 = vshrl.u32 %v872, 7
    %v874 = vsub.s32 7, %v873
    %v875 = vrot.slane %v251, %v874
    %876 = vset.pattern.permute.xlu0 15
    %877 = vperm.xlu0 %876, %v226
    %v878 = vpop.permute.xlu0 %877
    %880 = vset.pattern.permute.xlu0 15
    %881 = vperm.xlu0 %880, %v231
    %v882 = vpop.permute.xlu0 %881
    %v884 = vadd.f32 %v875, %v878
    %v885 = vadd.f32 %v875, %v882
    %s886 = sld [smem:[#allocation3 + $0x8f]]
    %v887 = vstv %s886
    %v888 = vmul.f32 %v59, %v887
    %v889 = vmul.f32 %v60, %v887
    %v890 = vadd.f32 %v884, %v888
    %v891 = vadd.f32 %v885, %v889
    %vm892 = vcmp.ge.f32.partialorder %v890, 0.0
    %vm893 = vcmp.ge.f32.partialorder %v891, 0.0
    %v894 = vmul.f32 %v890, 0.2
    %v895 = vmul.f32 %v891, 0.2
    %v896 = vsel %vm892, %v890, %v894
    %v897 = vsel %vm893, %v891, %v895
    %s898 = sld [smem:[#allocation3 + $0xf]]
    %v899 = vstv %s898
    %v900 = vmul.f32 %v899, %v896
    %v901 = vmul.f32 %v899, %v897
    %v902 = vadd.f32 %v870, %v900
    %v903 = vadd.f32 %v871, %v901
    %v904 = vadd.f32 %v902, %v61
    %v905 = vadd.f32 %v903, %v62
    %v906 = vsel %vm526, %v904, -inf
    %907 = vmax.xlane.f32.xlu0 %v906
    %v908 = vpop.xlane.xlu0 %907
    %v909 = vsel %vm526, %v905, -inf
    %910 = vmax.xlane.f32.xlu0 %v909
    %v911 = vpop.xlane.xlu0 %910
    %v912 = vsub.f32 %v904, %v908
    %v913 = vsub.f32 %v905, %v911
    %v914 = vmul.f32 %v912, 1.442695
    %v915 = vpow.pop %v914
    %v916 = vmul.f32 %v913, 1.442695
    %v917 = vpow.pop %v916
    %v918 = vsel %vm526, %v915, 0.0
    %919 = vadd.xlane.f32.xlu0 %v918
    %v920 = vpop.xlane.xlu0 %919
    %v921 = vsel %vm526, %v917, 0.0
    %922 = vadd.xlane.f32.xlu0 %v921
    %v923 = vpop.xlane.xlu0 %922
    %v924 = vrcp.pop %v920
    %v925 = vrcp.pop %v923
    %v926 = vmul.f32 %v915, %v924
    %v927 = vmul.f32 %v917, %v925
    %930 = vrot.lane.b32.xlu0 %v147, 120
    %v931 = vpop.permute.xlu0 %930
    %932 = vrot.lane.b32.xlu0 %v152, 120
    %v933 = vpop.permute.xlu0 %932
    %937 = vrot.lane.b32.xlu0 %v552, 120
    %v938 = vpop.permute.xlu0 %937
    %v941 = vsel %vm526, %v926, 0
    %v944 = vsel %vm526, %v927, 0
    %946 = vmatprep.subr.mxu0 0.0
    %947 = vmatpush1.msra.mxu0 0.0
    %948 = vmatprep.subr.mxu0 0.0
    %949 = vmatpush1.msra.mxu0 0.0
    %950 = vmatprep.subr.mxu0 0.0
    %951 = vmatpush1.msra.mxu0 0.0
    %952 = vmatprep.subr.mxu0 0.0
    %953 = vmatpush1.msra.mxu0 0.0
    %954 = vmatprep.subr.mxu0 0.0
    %955 = vmatpush1.msra.mxu0 0.0
    %956 = vmatprep.subr.mxu0 0.0
    %957 = vmatpush1.msra.mxu0 0.0
    %958 = vmatprep.subr.mxu0 0.0
    %959 = vmatpush1.msra.mxu0 0.0
    %960 = vmatprep.subr.mxu0 0.0
    %961 = vmatpush1.msra.mxu0 0.0
    %962 = vmatprep.subr.mxu0 0.0
    %963 = vmatpush1.msra.mxu0 0.0
    %964 = vmatprep.subr.mxu0 0.0
    %965 = vmatpush1.msra.mxu0 0.0
    %966 = vmatprep.subr.mxu0 0.0
    %967 = vmatpush1.msra.mxu0 0.0
    %968 = vmatprep.subr.mxu0 0.0
    %969 = vmatpush1.msra.mxu0 0.0
    %970 = vmatprep.subr.mxu0 0.0
    %971 = vmatpush1.msra.mxu0 0.0
    %972 = vmatprep.subr.mxu0 0.0
    %973 = vmatpush1.msra.mxu0 0.0
    %974 = vmatprep.subr.mxu0 0.0
    %975 = vmatpush1.msra.mxu0 %v933
    %976 = vmatprep.subr.mxu0 0.0
    %977 = vmatpush1.msra.mxu0 %v931
    %978 = vmatprep.subr.mxu0 0.0
    %979 = vmatpush2.msra.mxu0 0.0
    %980 = vmatprep.subr.mxu0 0.0
    %981 = vmatpush2.msra.mxu0 0.0
    %982 = vmatprep.subr.mxu0 0.0
    %983 = vmatpush2.msra.mxu0 0.0
    %984 = vmatprep.subr.mxu0 0.0
    %985 = vmatpush2.msra.mxu0 0.0
    %986 = vmatprep.subr.mxu0 0.0
    %987 = vmatpush2.msra.mxu0 0.0
    %988 = vmatprep.subr.mxu0 0.0
    %989 = vmatpush2.msra.mxu0 0.0
    %990 = vmatprep.subr.mxu0 0.0
    %991 = vmatpush2.msra.mxu0 0.0
    %992 = vmatprep.subr.mxu0 0.0
    %993 = vmatpush2.msra.mxu0 0.0
    %994 = vmatprep.subr.mxu0 0.0
    %995 = vmatpush2.msra.mxu0 0.0
    %996 = vmatprep.subr.mxu0 0.0
    %997 = vmatpush2.msra.mxu0 0.0
    %998 = vmatprep.subr.mxu0 0.0
    %999 = vmatpush2.msra.mxu0 0.0
    %1000 = vmatprep.subr.mxu0 0.0
    %1001 = vmatpush2.msra.mxu0 0.0
    %1002 = vmatprep.subr.mxu0 0.0
    %1003 = vmatpush2.msra.mxu0 0.0
    %1004 = vmatprep.subr.mxu0 0.0
    %1005 = vmatpush2.msra.mxu0 0.0
    %1006 = vmatprep.subr.mxu0 0.0
    %1007 = vmatpush2.msra.mxu0 0.0
    %1008 = vmatprep.subr.mxu0 0.0
    %1009 = vmatpush2.msra.mxu0 0.0
    %1010 = vmatprep.mubr.f32.mxu0 0.0
    %1011 = vmatmul.mubr.f32.gmra.mxu0 %v941
    %v1012 = vpop.f32.mrf.mxu0
    %v1013 = vadd.f32 %v938, %v1012
    %v1014 = vpop.f32.mrf.mxu0
    %1015 = vmatprep.mubr.f32.mxu0 0.0
    %1016 = vmatmul.mubr.f32.gmra.mxu0 %v944
    %v1017 = vpop.f32.mrf.mxu0
    %v1018 = vadd.f32 %v938, %v1017
    %v1019 = vpop.f32.mrf.mxu0
    %1020 = vdwg.mxu0
    %vm1021 = vcmp.gt.f32.partialorder %v1013, 0.0
    %vm1022 = vcmp.gt.f32.partialorder %v1018, 0.0
    %v1023 = vmin.f32 %v1013, 0.0
    %v1024 = vmin.f32 %v1018, 0.0
    %v1025 = vmul.f32 %v1023, 1.442695
    %v1026 = vpow.pop %v1025
    %v1027 = vmul.f32 %v1024, 1.442695
    %v1028 = vpow.pop %v1027
    %v1029 = vsub.f32 %v1026, 1.0
    %v1030 = vsub.f32 %v1028, 1.0
    %v1031 = vsel %vm1021, %v1013, %v1029
    %v1032 = vsel %vm1022, %v1018, %v1030
    %1035 = vrot.lane.b32.xlu0 %v1031, 8
    %v1036 = vpop.permute.xlu0 %1035
    %1037 = vrot.lane.b32.xlu0 %v1032, 8
    %v1038 = vpop.permute.xlu0 %1037
    %vm1041 = vcmask 130112
    %1042 = vst.msk [vmem:[#allocation2] sm:$0xff] %vm1041, %v1036
    %1043 = vst.msk [vmem:[#allocation2 + $0x8] sm:$0xff] %vm1041, %v1038
    %v1044 = vlaneseq
    %v1045 = vshrl.u32 %v1044, 7
    %v1046 = vsub.s32 0, %v1045
    %v1047 = vrot.slane %v252, %v1046
    %1048 = vset.pattern.permute.xlu0 16
    %1049 = vperm.xlu0 %1048, %v226
    %v1050 = vpop.permute.xlu0 %1049
    %1052 = vset.pattern.permute.xlu0 16
    %1053 = vperm.xlu0 %1052, %v231
    %v1054 = vpop.permute.xlu0 %1053
    %v1056 = vadd.f32 %v1047, %v1050
    %v1057 = vadd.f32 %v1047, %v1054
    %s1058 = sld [smem:[#allocation3 + $0x90]]
    %v1059 = vstv %s1058
    %v1060 = vmul.f32 %v59, %v1059
    %v1061 = vmul.f32 %v60, %v1059
    %v1062 = vadd.f32 %v1056, %v1060
    %v1063 = vadd.f32 %v1057, %v1061
    %vm1064 = vcmp.ge.f32.partialorder %v1062, 0.0
    %vm1065 = vcmp.ge.f32.partialorder %v1063, 0.0
    %v1066 = vmul.f32 %v1062, 0.2
    %v1067 = vmul.f32 %v1063, 0.2
    %v1068 = vsel %vm1064, %v1062, %v1066
    %v1069 = vsel %vm1065, %v1063, %v1067
    %s1070 = sld [smem:[#allocation3 + $0x10]]
    %v1071 = vstv %s1070
    %v1072 = vmul.f32 %v1071, %v1068
    %v1073 = vmul.f32 %v1071, %v1069
    %v1074 = vadd.f32 %v1072, 0.0
    %v1075 = vadd.f32 %v1073, 0.0
    %v1076 = vlaneseq
    %v1077 = vshrl.u32 %v1076, 7
    %v1078 = vsub.s32 1, %v1077
    %v1079 = vrot.slane %v252, %v1078
    %1080 = vset.pattern.permute.xlu0 17
    %1081 = vperm.xlu0 %1080, %v226
    %v1082 = vpop.permute.xlu0 %1081
    %1084 = vset.pattern.permute.xlu0 17
    %1085 = vperm.xlu0 %1084, %v231
    %v1086 = vpop.permute.xlu0 %1085
    %v1088 = vadd.f32 %v1079, %v1082
    %v1089 = vadd.f32 %v1079, %v1086
    %s1090 = sld [smem:[#allocation3 + $0x91]]
    %v1091 = vstv %s1090
    %v1092 = vmul.f32 %v59, %v1091
    %v1093 = vmul.f32 %v60, %v1091
    %v1094 = vadd.f32 %v1088, %v1092
    %v1095 = vadd.f32 %v1089, %v1093
    %vm1096 = vcmp.ge.f32.partialorder %v1094, 0.0
    %vm1097 = vcmp.ge.f32.partialorder %v1095, 0.0
    %v1098 = vmul.f32 %v1094, 0.2
    %v1099 = vmul.f32 %v1095, 0.2
    %v1100 = vsel %vm1096, %v1094, %v1098
    %v1101 = vsel %vm1097, %v1095, %v1099
    %s1102 = sld [smem:[#allocation3 + $0x11]]
    %v1103 = vstv %s1102
    %v1104 = vmul.f32 %v1103, %v1100
    %v1105 = vmul.f32 %v1103, %v1101
    %v1106 = vadd.f32 %v1074, %v1104
    %v1107 = vadd.f32 %v1075, %v1105
    %v1108 = vlaneseq
    %v1109 = vshrl.u32 %v1108, 7
    %v1110 = vsub.s32 2, %v1109
    %v1111 = vrot.slane %v252, %v1110
    %1112 = vset.pattern.permute.xlu0 18
    %1113 = vperm.xlu0 %1112, %v226
    %v1114 = vpop.permute.xlu0 %1113
    %1116 = vset.pattern.permute.xlu0 18
    %1117 = vperm.xlu0 %1116, %v231
    %v1118 = vpop.permute.xlu0 %1117
    %v1120 = vadd.f32 %v1111, %v1114
    %v1121 = vadd.f32 %v1111, %v1118
    %s1122 = sld [smem:[#allocation3 + $0x92]]
    %v1123 = vstv %s1122
    %v1124 = vmul.f32 %v59, %v1123
    %v1125 = vmul.f32 %v60, %v1123
    %v1126 = vadd.f32 %v1120, %v1124
    %v1127 = vadd.f32 %v1121, %v1125
    %vm1128 = vcmp.ge.f32.partialorder %v1126, 0.0
    %vm1129 = vcmp.ge.f32.partialorder %v1127, 0.0
    %v1130 = vmul.f32 %v1126, 0.2
    %v1131 = vmul.f32 %v1127, 0.2
    %v1132 = vsel %vm1128, %v1126, %v1130
    %v1133 = vsel %vm1129, %v1127, %v1131
    %s1134 = sld [smem:[#allocation3 + $0x12]]
    %v1135 = vstv %s1134
    %v1136 = vmul.f32 %v1135, %v1132
    %v1137 = vmul.f32 %v1135, %v1133
    %v1138 = vadd.f32 %v1106, %v1136
    %v1139 = vadd.f32 %v1107, %v1137
    %v1140 = vlaneseq
    %v1141 = vshrl.u32 %v1140, 7
    %v1142 = vsub.s32 3, %v1141
    %v1143 = vrot.slane %v252, %v1142
    %1144 = vset.pattern.permute.xlu0 19
    %1145 = vperm.xlu0 %1144, %v226
    %v1146 = vpop.permute.xlu0 %1145
    %1148 = vset.pattern.permute.xlu0 19
    %1149 = vperm.xlu0 %1148, %v231
    %v1150 = vpop.permute.xlu0 %1149
    %v1152 = vadd.f32 %v1143, %v1146
    %v1153 = vadd.f32 %v1143, %v1150
    %s1154 = sld [smem:[#allocation3 + $0x93]]
    %v1155 = vstv %s1154
    %v1156 = vmul.f32 %v59, %v1155
    %v1157 = vmul.f32 %v60, %v1155
    %v1158 = vadd.f32 %v1152, %v1156
    %v1159 = vadd.f32 %v1153, %v1157
    %vm1160 = vcmp.ge.f32.partialorder %v1158, 0.0
    %vm1161 = vcmp.ge.f32.partialorder %v1159, 0.0
    %v1162 = vmul.f32 %v1158, 0.2
    %v1163 = vmul.f32 %v1159, 0.2
    %v1164 = vsel %vm1160, %v1158, %v1162
    %v1165 = vsel %vm1161, %v1159, %v1163
    %s1166 = sld [smem:[#allocation3 + $0x13]]
    %v1167 = vstv %s1166
    %v1168 = vmul.f32 %v1167, %v1164
    %v1169 = vmul.f32 %v1167, %v1165
    %v1170 = vadd.f32 %v1138, %v1168
    %v1171 = vadd.f32 %v1139, %v1169
    %v1172 = vlaneseq
    %v1173 = vshrl.u32 %v1172, 7
    %v1174 = vsub.s32 4, %v1173
    %v1175 = vrot.slane %v252, %v1174
    %1176 = vset.pattern.permute.xlu0 20
    %1177 = vperm.xlu0 %1176, %v226
    %v1178 = vpop.permute.xlu0 %1177
    %1180 = vset.pattern.permute.xlu0 20
    %1181 = vperm.xlu0 %1180, %v231
    %v1182 = vpop.permute.xlu0 %1181
    %v1184 = vadd.f32 %v1175, %v1178
    %v1185 = vadd.f32 %v1175, %v1182
    %s1186 = sld [smem:[#allocation3 + $0x94]]
    %v1187 = vstv %s1186
    %v1188 = vmul.f32 %v59, %v1187
    %v1189 = vmul.f32 %v60, %v1187
    %v1190 = vadd.f32 %v1184, %v1188
    %v1191 = vadd.f32 %v1185, %v1189
    %vm1192 = vcmp.ge.f32.partialorder %v1190, 0.0
    %vm1193 = vcmp.ge.f32.partialorder %v1191, 0.0
    %v1194 = vmul.f32 %v1190, 0.2
    %v1195 = vmul.f32 %v1191, 0.2
    %v1196 = vsel %vm1192, %v1190, %v1194
    %v1197 = vsel %vm1193, %v1191, %v1195
    %s1198 = sld [smem:[#allocation3 + $0x14]]
    %v1199 = vstv %s1198
    %v1200 = vmul.f32 %v1199, %v1196
    %v1201 = vmul.f32 %v1199, %v1197
    %v1202 = vadd.f32 %v1170, %v1200
    %v1203 = vadd.f32 %v1171, %v1201
    %v1204 = vlaneseq
    %v1205 = vshrl.u32 %v1204, 7
    %v1206 = vsub.s32 5, %v1205
    %v1207 = vrot.slane %v252, %v1206
    %1208 = vset.pattern.permute.xlu0 21
    %1209 = vperm.xlu0 %1208, %v226
    %v1210 = vpop.permute.xlu0 %1209
    %1212 = vset.pattern.permute.xlu0 21
    %1213 = vperm.xlu0 %1212, %v231
    %v1214 = vpop.permute.xlu0 %1213
    %v1216 = vadd.f32 %v1207, %v1210
    %v1217 = vadd.f32 %v1207, %v1214
    %s1218 = sld [smem:[#allocation3 + $0x95]]
    %v1219 = vstv %s1218
    %v1220 = vmul.f32 %v59, %v1219
    %v1221 = vmul.f32 %v60, %v1219
    %v1222 = vadd.f32 %v1216, %v1220
    %v1223 = vadd.f32 %v1217, %v1221
    %vm1224 = vcmp.ge.f32.partialorder %v1222, 0.0
    %vm1225 = vcmp.ge.f32.partialorder %v1223, 0.0
    %v1226 = vmul.f32 %v1222, 0.2
    %v1227 = vmul.f32 %v1223, 0.2
    %v1228 = vsel %vm1224, %v1222, %v1226
    %v1229 = vsel %vm1225, %v1223, %v1227
    %s1230 = sld [smem:[#allocation3 + $0x15]]
    %v1231 = vstv %s1230
    %v1232 = vmul.f32 %v1231, %v1228
    %v1233 = vmul.f32 %v1231, %v1229
    %v1234 = vadd.f32 %v1202, %v1232
    %v1235 = vadd.f32 %v1203, %v1233
    %v1236 = vlaneseq
    %v1237 = vshrl.u32 %v1236, 7
    %v1238 = vsub.s32 6, %v1237
    %v1239 = vrot.slane %v252, %v1238
    %1240 = vset.pattern.permute.xlu0 22
    %1241 = vperm.xlu0 %1240, %v226
    %v1242 = vpop.permute.xlu0 %1241
    %1244 = vset.pattern.permute.xlu0 22
    %1245 = vperm.xlu0 %1244, %v231
    %v1246 = vpop.permute.xlu0 %1245
    %v1248 = vadd.f32 %v1239, %v1242
    %v1249 = vadd.f32 %v1239, %v1246
    %s1250 = sld [smem:[#allocation3 + $0x96]]
    %v1251 = vstv %s1250
    %v1252 = vmul.f32 %v59, %v1251
    %v1253 = vmul.f32 %v60, %v1251
    %v1254 = vadd.f32 %v1248, %v1252
    %v1255 = vadd.f32 %v1249, %v1253
    %vm1256 = vcmp.ge.f32.partialorder %v1254, 0.0
    %vm1257 = vcmp.ge.f32.partialorder %v1255, 0.0
    %v1258 = vmul.f32 %v1254, 0.2
    %v1259 = vmul.f32 %v1255, 0.2
    %v1260 = vsel %vm1256, %v1254, %v1258
    %v1261 = vsel %vm1257, %v1255, %v1259
    %s1262 = sld [smem:[#allocation3 + $0x16]]
    %v1263 = vstv %s1262
    %v1264 = vmul.f32 %v1263, %v1260
    %v1265 = vmul.f32 %v1263, %v1261
    %v1266 = vadd.f32 %v1234, %v1264
    %v1267 = vadd.f32 %v1235, %v1265
    %v1268 = vlaneseq
    %v1269 = vshrl.u32 %v1268, 7
    %v1270 = vsub.s32 7, %v1269
    %v1271 = vrot.slane %v252, %v1270
    %1272 = vset.pattern.permute.xlu0 23
    %1273 = vperm.xlu0 %1272, %v226
    %v1274 = vpop.permute.xlu0 %1273
    %1276 = vset.pattern.permute.xlu0 23
    %1277 = vperm.xlu0 %1276, %v231
    %v1278 = vpop.permute.xlu0 %1277
    %v1280 = vadd.f32 %v1271, %v1274
    %v1281 = vadd.f32 %v1271, %v1278
    %s1282 = sld [smem:[#allocation3 + $0x97]]
    %v1283 = vstv %s1282
    %v1284 = vmul.f32 %v59, %v1283
    %v1285 = vmul.f32 %v60, %v1283
    %v1286 = vadd.f32 %v1280, %v1284
    %v1287 = vadd.f32 %v1281, %v1285
    %vm1288 = vcmp.ge.f32.partialorder %v1286, 0.0
    %vm1289 = vcmp.ge.f32.partialorder %v1287, 0.0
    %v1290 = vmul.f32 %v1286, 0.2
    %v1291 = vmul.f32 %v1287, 0.2
    %v1292 = vsel %vm1288, %v1286, %v1290
    %v1293 = vsel %vm1289, %v1287, %v1291
    %s1294 = sld [smem:[#allocation3 + $0x17]]
    %v1295 = vstv %s1294
    %v1296 = vmul.f32 %v1295, %v1292
    %v1297 = vmul.f32 %v1295, %v1293
    %v1298 = vadd.f32 %v1266, %v1296
    %v1299 = vadd.f32 %v1267, %v1297
    %v1300 = vadd.f32 %v1298, %v61
    %v1301 = vadd.f32 %v1299, %v62
    %v1302 = vsel %vm526, %v1300, -inf
    %1303 = vmax.xlane.f32.xlu0 %v1302
    %v1304 = vpop.xlane.xlu0 %1303
    %v1305 = vsel %vm526, %v1301, -inf
    %1306 = vmax.xlane.f32.xlu0 %v1305
    %v1307 = vpop.xlane.xlu0 %1306
    %v1308 = vsub.f32 %v1300, %v1304
    %v1309 = vsub.f32 %v1301, %v1307
    %v1310 = vmul.f32 %v1308, 1.442695
    %v1311 = vpow.pop %v1310
    %v1312 = vmul.f32 %v1309, 1.442695
    %v1313 = vpow.pop %v1312
    %v1314 = vsel %vm526, %v1311, 0.0
    %1315 = vadd.xlane.f32.xlu0 %v1314
    %v1316 = vpop.xlane.xlu0 %1315
    %v1317 = vsel %vm526, %v1313, 0.0
    %1318 = vadd.xlane.f32.xlu0 %v1317
    %v1319 = vpop.xlane.xlu0 %1318
    %v1320 = vrcp.pop %v1316
    %v1321 = vrcp.pop %v1319
    %v1322 = vmul.f32 %v1311, %v1320
    %v1323 = vmul.f32 %v1313, %v1321
    %1324 = vrot.lane.b32.xlu0 %v147, 112
    %v1325 = vpop.permute.xlu0 %1324
    %1326 = vrot.lane.b32.xlu0 %v152, 112
    %v1327 = vpop.permute.xlu0 %1326
    %1330 = vrot.lane.b32.xlu0 %v552, 112
    %v1331 = vpop.permute.xlu0 %1330
    %v1334 = vsel %vm526, %v1322, 0
    %v1337 = vsel %vm526, %v1323, 0
    %1339 = vmatprep.subr.mxu0 0.0
    %1340 = vmatpush1.msra.mxu0 0.0
    %1341 = vmatprep.subr.mxu0 0.0
    %1342 = vmatpush1.msra.mxu0 0.0
    %1343 = vmatprep.subr.mxu0 0.0
    %1344 = vmatpush1.msra.mxu0 0.0
    %1345 = vmatprep.subr.mxu0 0.0
    %1346 = vmatpush1.msra.mxu0 0.0
    %1347 = vmatprep.subr.mxu0 0.0
    %1348 = vmatpush1.msra.mxu0 0.0
    %1349 = vmatprep.subr.mxu0 0.0
    %1350 = vmatpush1.msra.mxu0 0.0
    %1351 = vmatprep.subr.mxu0 0.0
    %1352 = vmatpush1.msra.mxu0 0.0
    %1353 = vmatprep.subr.mxu0 0.0
    %1354 = vmatpush1.msra.mxu0 0.0
    %1355 = vmatprep.subr.mxu0 0.0
    %1356 = vmatpush1.msra.mxu0 0.0
    %1357 = vmatprep.subr.mxu0 0.0
    %1358 = vmatpush1.msra.mxu0 0.0
    %1359 = vmatprep.subr.mxu0 0.0
    %1360 = vmatpush1.msra.mxu0 0.0
    %1361 = vmatprep.subr.mxu0 0.0
    %1362 = vmatpush1.msra.mxu0 0.0
    %1363 = vmatprep.subr.mxu0 0.0
    %1364 = vmatpush1.msra.mxu0 0.0
    %1365 = vmatprep.subr.mxu0 0.0
    %1366 = vmatpush1.msra.mxu0 0.0
    %1367 = vmatprep.subr.mxu0 0.0
    %1368 = vmatpush1.msra.mxu0 %v1327
    %1369 = vmatprep.subr.mxu0 0.0
    %1370 = vmatpush1.msra.mxu0 %v1325
    %1371 = vmatprep.subr.mxu0 0.0
    %1372 = vmatpush2.msra.mxu0 0.0
    %1373 = vmatprep.subr.mxu0 0.0
    %1374 = vmatpush2.msra.mxu0 0.0
    %1375 = vmatprep.subr.mxu0 0.0
    %1376 = vmatpush2.msra.mxu0 0.0
    %1377 = vmatprep.subr.mxu0 0.0
    %1378 = vmatpush2.msra.mxu0 0.0
    %1379 = vmatprep.subr.mxu0 0.0
    %1380 = vmatpush2.msra.mxu0 0.0
    %1381 = vmatprep.subr.mxu0 0.0
    %1382 = vmatpush2.msra.mxu0 0.0
    %1383 = vmatprep.subr.mxu0 0.0
    %1384 = vmatpush2.msra.mxu0 0.0
    %1385 = vmatprep.subr.mxu0 0.0
    %1386 = vmatpush2.msra.mxu0 0.0
    %1387 = vmatprep.subr.mxu0 0.0
    %1388 = vmatpush2.msra.mxu0 0.0
    %1389 = vmatprep.subr.mxu0 0.0
    %1390 = vmatpush2.msra.mxu0 0.0
    %1391 = vmatprep.subr.mxu0 0.0
    %1392 = vmatpush2.msra.mxu0 0.0
    %1393 = vmatprep.subr.mxu0 0.0
    %1394 = vmatpush2.msra.mxu0 0.0
    %1395 = vmatprep.subr.mxu0 0.0
    %1396 = vmatpush2.msra.mxu0 0.0
    %1397 = vmatprep.subr.mxu0 0.0
    %1398 = vmatpush2.msra.mxu0 0.0
    %1399 = vmatprep.subr.mxu0 0.0
    %1400 = vmatpush2.msra.mxu0 0.0
    %1401 = vmatprep.subr.mxu0 0.0
    %1402 = vmatpush2.msra.mxu0 0.0
    %1403 = vmatprep.mubr.f32.mxu0 0.0
    %1404 = vmatmul.mubr.f32.gmra.mxu0 %v1334
    %v1405 = vpop.f32.mrf.mxu0
    %v1406 = vadd.f32 %v1331, %v1405
    %v1407 = vpop.f32.mrf.mxu0
    %1408 = vmatprep.mubr.f32.mxu0 0.0
    %1409 = vmatmul.mubr.f32.gmra.mxu0 %v1337
    %v1410 = vpop.f32.mrf.mxu0
    %v1411 = vadd.f32 %v1331, %v1410
    %v1412 = vpop.f32.mrf.mxu0
    %1413 = vdwg.mxu0
    %vm1414 = vcmp.gt.f32.partialorder %v1406, 0.0
    %vm1415 = vcmp.gt.f32.partialorder %v1411, 0.0
    %v1416 = vmin.f32 %v1406, 0.0
    %v1417 = vmin.f32 %v1411, 0.0
    %v1418 = vmul.f32 %v1416, 1.442695
    %v1419 = vpow.pop %v1418
    %v1420 = vmul.f32 %v1417, 1.442695
    %v1421 = vpow.pop %v1420
    %v1422 = vsub.f32 %v1419, 1.0
    %v1423 = vsub.f32 %v1421, 1.0
    %v1424 = vsel %vm1414, %v1406, %v1422
    %v1425 = vsel %vm1415, %v1411, %v1423
    %1428 = vrot.lane.b32.xlu0 %v1424, 16
    %v1429 = vpop.permute.xlu0 %1428
    %1430 = vrot.lane.b32.xlu0 %v1425, 16
    %v1431 = vpop.permute.xlu0 %1430
    %vm1434 = vcmask 195712
    %1435 = vst.msk [vmem:[#allocation2] sm:$0xff] %vm1434, %v1429
    %1436 = vst.msk [vmem:[#allocation2 + $0x8] sm:$0xff] %vm1434, %v1431
    %v1437 = vld [vmem:[#allocation2] sm:$0xff]
    %v1438 = vld [vmem:[#allocation2 + $0x8] sm:$0xff]
    %v1439 = vld [vmem:[%s6] sm:$0xff]
    %v1440 = vld [vmem:[%s6 + $0x8] sm:$0xff]
    %v1441 = vld [vmem:[%s6 + $0x10] sm:$0xff]
    %s1442 = scalar_lea.vmem %s6, 24
    %v1443 = vld [vmem:[%s1442] sm:$0xff]
    %v1444 = vld [vmem:[%s1442 + $0x8] sm:$0xff]
    %v1445 = vld [vmem:[%s1442 + $0x10] sm:$0xff]
    %v1446 = vld [vmem:[%s7] sm:$0x1]
    %v1447 = vld [vmem:[%s7 + $0x1] sm:$0x1]
    %v1448 = vld [vmem:[%s7 + $0x2] sm:$0x1]
    %v1449 = vlaneseq
    %v1450 = vshrl.u32 %v1449, 7
    %v1451 = vsub.s32 0, %v1450
    %v1452 = vrot.slane %v1446, %v1451
    %vm1453 = vcmask 195584
    %v1455 = vsel %vm1453, %v1437, 0
    %v1458 = vsel %vm1453, %v1438, 0
    %1460 = vmatprep.subr.mxu0 0.0
    %1461 = vmatpush1.msra.mxu0 0.0
    %1462 = vmatprep.subr.mxu0 0.0
    %1463 = vmatpush1.msra.mxu0 0.0
    %1464 = vmatprep.subr.mxu0 0.0
    %1465 = vmatpush1.msra.mxu0 0.0
    %1466 = vmatprep.subr.mxu0 0.0
    %1467 = vmatpush1.msra.mxu0 0.0
    %1468 = vmatprep.subr.mxu0 0.0
    %1469 = vmatpush1.msra.mxu0 0.0
    %1470 = vmatprep.subr.mxu0 0.0
    %1471 = vmatpush1.msra.mxu0 0.0
    %1472 = vmatprep.subr.mxu0 0.0
    %1473 = vmatpush1.msra.mxu0 0.0
    %1474 = vmatprep.subr.mxu0 0.0
    %1475 = vmatpush1.msra.mxu0 0.0
    %1476 = vmatprep.subr.mxu0 0.0
    %1477 = vmatpush1.msra.mxu0 0.0
    %1478 = vmatprep.subr.mxu0 0.0
    %1479 = vmatpush1.msra.mxu0 0.0
    %1480 = vmatprep.subr.mxu0 0.0
    %1481 = vmatpush1.msra.mxu0 0.0
    %1482 = vmatprep.subr.mxu0 0.0
    %1483 = vmatpush1.msra.mxu0 0.0
    %1484 = vmatprep.subr.mxu0 0.0
    %1485 = vmatpush1.msra.mxu0 0.0
    %1486 = vmatprep.subr.mxu0 0.0
    %1487 = vmatpush1.msra.mxu0 %v1441
    %1488 = vmatprep.subr.mxu0 0.0
    %1489 = vmatpush1.msra.mxu0 %v1440
    %1490 = vmatprep.subr.mxu0 0.0
    %1491 = vmatpush1.msra.mxu0 %v1439
    %1492 = vmatprep.subr.mxu0 0.0
    %1493 = vmatpush2.msra.mxu0 0.0
    %1494 = vmatprep.subr.mxu0 0.0
    %1495 = vmatpush2.msra.mxu0 0.0
    %1496 = vmatprep.subr.mxu0 0.0
    %1497 = vmatpush2.msra.mxu0 0.0
    %1498 = vmatprep.subr.mxu0 0.0
    %1499 = vmatpush2.msra.mxu0 0.0
    %1500 = vmatprep.subr.mxu0 0.0
    %1501 = vmatpush2.msra.mxu0 0.0
    %1502 = vmatprep.subr.mxu0 0.0
    %1503 = vmatpush2.msra.mxu0 0.0
    %1504 = vmatprep.subr.mxu0 0.0
    %1505 = vmatpush2.msra.mxu0 0.0
    %1506 = vmatprep.subr.mxu0 0.0
    %1507 = vmatpush2.msra.mxu0 0.0
    %1508 = vmatprep.subr.mxu0 0.0
    %1509 = vmatpush2.msra.mxu0 0.0
    %1510 = vmatprep.subr.mxu0 0.0
    %1511 = vmatpush2.msra.mxu0 0.0
    %1512 = vmatprep.subr.mxu0 0.0
    %1513 = vmatpush2.msra.mxu0 0.0
    %1514 = vmatprep.subr.mxu0 0.0
    %1515 = vmatpush2.msra.mxu0 0.0
    %1516 = vmatprep.subr.mxu0 0.0
    %1517 = vmatpush2.msra.mxu0 0.0
    %1518 = vmatprep.subr.mxu0 0.0
    %1519 = vmatpush2.msra.mxu0 0.0
    %1520 = vmatprep.subr.mxu0 0.0
    %1521 = vmatpush2.msra.mxu0 0.0
    %1522 = vmatprep.subr.mxu0 0.0
    %1523 = vmatpush2.msra.mxu0 0.0
    %1524 = vmatprep.mubr.f32.mxu0 0.0
    %1525 = vmatmul.mubr.f32.gmra.mxu0 %v1455
    %v1526 = vpop.f32.mrf.mxu0
    %v1527 = vadd.f32 %v1452, %v1526
    %v1528 = vpop.f32.mrf.mxu0
    %1529 = vmatprep.mubr.f32.mxu0 0.0
    %1530 = vmatmul.mubr.f32.gmra.mxu0 %v1458
    %v1531 = vpop.f32.mrf.mxu0
    %v1532 = vadd.f32 %v1452, %v1531
    %v1533 = vpop.f32.mrf.mxu0
    %1534 = vdwg.mxu0
    %v1535 = vlaneseq
    %v1536 = vshrl.u32 %v1535, 7
    %v1537 = vsub.s32 0, %v1536
    %v1538 = vrot.slane %v1447, %v1537
    %1539 = vmatprep.subr.mxu0 0.0
    %1540 = vmatpush1.msra.mxu0 0.0
    %1541 = vmatprep.subr.mxu0 0.0
    %1542 = vmatpush1.msra.mxu0 0.0
    %1543 = vmatprep.subr.mxu0 0.0
    %1544 = vmatpush1.msra.mxu0 0.0
    %1545 = vmatprep.subr.mxu0 0.0
    %1546 = vmatpush1.msra.mxu0 0.0
    %1547 = vmatprep.subr.mxu0 0.0
    %1548 = vmatpush1.msra.mxu0 0.0
    %1549 = vmatprep.subr.mxu0 0.0
    %1550 = vmatpush1.msra.mxu0 0.0
    %1551 = vmatprep.subr.mxu0 0.0
    %1552 = vmatpush1.msra.mxu0 0.0
    %1553 = vmatprep.subr.mxu0 0.0
    %1554 = vmatpush1.msra.mxu0 0.0
    %1555 = vmatprep.subr.mxu0 0.0
    %1556 = vmatpush1.msra.mxu0 0.0
    %1557 = vmatprep.subr.mxu0 0.0
    %1558 = vmatpush1.msra.mxu0 0.0
    %1559 = vmatprep.subr.mxu0 0.0
    %1560 = vmatpush1.msra.mxu0 0.0
    %1561 = vmatprep.subr.mxu0 0.0
    %1562 = vmatpush1.msra.mxu0 0.0
    %1563 = vmatprep.subr.mxu0 0.0
    %1564 = vmatpush1.msra.mxu0 0.0
    %1565 = vmatprep.subr.mxu0 0.0
    %1566 = vmatpush1.msra.mxu0 %v1445
    %1567 = vmatprep.subr.mxu0 0.0
    %1568 = vmatpush1.msra.mxu0 %v1444
    %1569 = vmatprep.subr.mxu0 0.0
    %1570 = vmatpush1.msra.mxu0 %v1443
    %1571 = vmatprep.subr.mxu0 0.0
    %1572 = vmatpush2.msra.mxu0 0.0
    %1573 = vmatprep.subr.mxu0 0.0
    %1574 = vmatpush2.msra.mxu0 0.0
    %1575 = vmatprep.subr.mxu0 0.0
    %1576 = vmatpush2.msra.mxu0 0.0
    %1577 = vmatprep.subr.mxu0 0.0
    %1578 = vmatpush2.msra.mxu0 0.0
    %1579 = vmatprep.subr.mxu0 0.0
    %1580 = vmatpush2.msra.mxu0 0.0
    %1581 = vmatprep.subr.mxu0 0.0
    %1582 = vmatpush2.msra.mxu0 0.0
    %1583 = vmatprep.subr.mxu0 0.0
    %1584 = vmatpush2.msra.mxu0 0.0
    %1585 = vmatprep.subr.mxu0 0.0
    %1586 = vmatpush2.msra.mxu0 0.0
    %1587 = vmatprep.subr.mxu0 0.0
    %1588 = vmatpush2.msra.mxu0 0.0
    %1589 = vmatprep.subr.mxu0 0.0
    %1590 = vmatpush2.msra.mxu0 0.0
    %1591 = vmatprep.subr.mxu0 0.0
    %1592 = vmatpush2.msra.mxu0 0.0
    %1593 = vmatprep.subr.mxu0 0.0
    %1594 = vmatpush2.msra.mxu0 0.0
    %1595 = vmatprep.subr.mxu0 0.0
    %1596 = vmatpush2.msra.mxu0 0.0
    %1597 = vmatprep.subr.mxu0 0.0
    %1598 = vmatpush2.msra.mxu0 0.0
    %1599 = vmatprep.subr.mxu0 0.0
    %1600 = vmatpush2.msra.mxu0 0.0
    %1601 = vmatprep.subr.mxu0 0.0
    %1602 = vmatpush2.msra.mxu0 0.0
    %1603 = vmatprep.mubr.f32.mxu0 0.0
    %1604 = vmatmul.mubr.f32.gmra.mxu0 %v1455
    %v1605 = vpop.f32.mrf.mxu0
    %v1606 = vadd.f32 %v1538, %v1605
    %v1607 = vpop.f32.mrf.mxu0
    %1608 = vmatprep.mubr.f32.mxu0 0.0
    %1609 = vmatmul.mubr.f32.gmra.mxu0 %v1458
    %v1610 = vpop.f32.mrf.mxu0
    %v1611 = vadd.f32 %v1538, %v1610
    %v1612 = vpop.f32.mrf.mxu0
    %1613 = vdwg.mxu0
    %1614 = vxpose.xlu0.b32.start [1/16] %v1527, 128
    %1615 = vxpose.xlu0.b32.cont [2/16] %v1532, 128
    %1616 = vxpose.xlu0.b32.cont [3/16] 0.0, 128
    %1617 = vxpose.xlu0.b32.cont [4/16] 0.0, 128
    %1618 = vxpose.xlu0.b32.cont [5/16] 0.0, 128
    %1619 = vxpose.xlu0.b32.cont [6/16] 0.0, 128
    %1620 = vxpose.xlu0.b32.cont [7/16] 0.0, 128
    %1621 = vxpose.xlu0.b32.cont [8/16] 0.0, 128
    %1622 = vxpose.xlu0.b32.cont [9/16] 0.0, 128
    %1623 = vxpose.xlu0.b32.cont [10/16] 0.0, 128
    %1624 = vxpose.xlu0.b32.cont [11/16] 0.0, 128
    %1625 = vxpose.xlu0.b32.cont [12/16] 0.0, 128
    %1626 = vxpose.xlu0.b32.cont [13/16] 0.0, 128
    %1627 = vxpose.xlu0.b32.cont [14/16] 0.0, 128
    %1628 = vxpose.xlu0.b32.cont [15/16] 0.0, 128
    %1629 = vxpose.xlu0.b32.end [16/16] 0.0, 128
    %v1630 = vpop.trf.xlu0
    %v1631 = vpop.trf.xlu0
    %v1632 = vpop.trf.xlu0
    %v1633 = vpop.trf.xlu0
    %v1634 = vpop.trf.xlu0
    %v1635 = vpop.trf.xlu0
    %v1636 = vpop.trf.xlu0
    %v1637 = vpop.trf.xlu0
    %v1638 = vpop.trf.xlu0
    %v1639 = vpop.trf.xlu0
    %v1640 = vpop.trf.xlu0
    %v1641 = vpop.trf.xlu0
    %v1642 = vpop.trf.xlu0
    %v1643 = vpop.trf.xlu0
    %v1644 = vpop.trf.xlu0
    %v1645 = vpop.trf.xlu0
    %v1646 = vlaneseq
    %v1647 = vshrl.u32 %v1646, 7
    %v1648 = vsub.s32 0, %v1647
    %v1649 = vrot.slane %v1630, %v1648
    %1651 = vset.pattern.permute.xlu0 0
    %1652 = vperm.xlu0 %1651, %v1606
    %v1653 = vpop.permute.xlu0 %1652
    %1656 = vset.pattern.permute.xlu0 0
    %1657 = vperm.xlu0 %1656, %v1611
    %v1658 = vpop.permute.xlu0 %1657
    %v1660 = vadd.f32 %v1649, %v1653
    %v1661 = vadd.f32 %v1649, %v1658
    %s1662 = sld [smem:[#allocation5 + $0x80]]
    %v1663 = vstv %s1662
    %v1664 = vmul.f32 %v59, %v1663
    %v1665 = vmul.f32 %v60, %v1663
    %v1666 = vadd.f32 %v1660, %v1664
    %v1667 = vadd.f32 %v1661, %v1665
    %vm1668 = vcmp.ge.f32.partialorder %v1666, 0.0
    %vm1669 = vcmp.ge.f32.partialorder %v1667, 0.0
    %v1670 = vmul.f32 %v1666, 0.2
    %v1671 = vmul.f32 %v1667, 0.2
    %v1672 = vsel %vm1668, %v1666, %v1670
    %v1673 = vsel %vm1669, %v1667, %v1671
    %s1674 = sld [smem:[#allocation5]]
    %v1675 = vstv %s1674
    %v1676 = vmul.f32 %v1675, %v1672
    %v1677 = vmul.f32 %v1675, %v1673
    %v1678 = vadd.f32 %v1676, 0.0
    %v1679 = vadd.f32 %v1677, 0.0
    %v1680 = vlaneseq
    %v1681 = vshrl.u32 %v1680, 7
    %v1682 = vsub.s32 1, %v1681
    %v1683 = vrot.slane %v1630, %v1682
    %1684 = vset.pattern.permute.xlu0 1
    %1685 = vperm.xlu0 %1684, %v1606
    %v1686 = vpop.permute.xlu0 %1685
    %1688 = vset.pattern.permute.xlu0 1
    %1689 = vperm.xlu0 %1688, %v1611
    %v1690 = vpop.permute.xlu0 %1689
    %v1692 = vadd.f32 %v1683, %v1686
    %v1693 = vadd.f32 %v1683, %v1690
    %s1694 = sld [smem:[#allocation5 + $0x81]]
    %v1695 = vstv %s1694
    %v1696 = vmul.f32 %v59, %v1695
    %v1697 = vmul.f32 %v60, %v1695
    %v1698 = vadd.f32 %v1692, %v1696
    %v1699 = vadd.f32 %v1693, %v1697
    %vm1700 = vcmp.ge.f32.partialorder %v1698, 0.0
    %vm1701 = vcmp.ge.f32.partialorder %v1699, 0.0
    %v1702 = vmul.f32 %v1698, 0.2
    %v1703 = vmul.f32 %v1699, 0.2
    %v1704 = vsel %vm1700, %v1698, %v1702
    %v1705 = vsel %vm1701, %v1699, %v1703
    %s1706 = sld [smem:[#allocation5 + $0x1]]
    %v1707 = vstv %s1706
    %v1708 = vmul.f32 %v1707, %v1704
    %v1709 = vmul.f32 %v1707, %v1705
    %v1710 = vadd.f32 %v1678, %v1708
    %v1711 = vadd.f32 %v1679, %v1709
    %v1712 = vlaneseq
    %v1713 = vshrl.u32 %v1712, 7
    %v1714 = vsub.s32 2, %v1713
    %v1715 = vrot.slane %v1630, %v1714
    %1716 = vset.pattern.permute.xlu0 2
    %1717 = vperm.xlu0 %1716, %v1606
    %v1718 = vpop.permute.xlu0 %1717
    %1720 = vset.pattern.permute.xlu0 2
    %1721 = vperm.xlu0 %1720, %v1611
    %v1722 = vpop.permute.xlu0 %1721
    %v1724 = vadd.f32 %v1715, %v1718
    %v1725 = vadd.f32 %v1715, %v1722
    %s1726 = sld [smem:[#allocation5 + $0x82]]
    %v1727 = vstv %s1726
    %v1728 = vmul.f32 %v59, %v1727
    %v1729 = vmul.f32 %v60, %v1727
    %v1730 = vadd.f32 %v1724, %v1728
    %v1731 = vadd.f32 %v1725, %v1729
    %vm1732 = vcmp.ge.f32.partialorder %v1730, 0.0
    %vm1733 = vcmp.ge.f32.partialorder %v1731, 0.0
    %v1734 = vmul.f32 %v1730, 0.2
    %v1735 = vmul.f32 %v1731, 0.2
    %v1736 = vsel %vm1732, %v1730, %v1734
    %v1737 = vsel %vm1733, %v1731, %v1735
    %s1738 = sld [smem:[#allocation5 + $0x2]]
    %v1739 = vstv %s1738
    %v1740 = vmul.f32 %v1739, %v1736
    %v1741 = vmul.f32 %v1739, %v1737
    %v1742 = vadd.f32 %v1710, %v1740
    %v1743 = vadd.f32 %v1711, %v1741
    %v1744 = vlaneseq
    %v1745 = vshrl.u32 %v1744, 7
    %v1746 = vsub.s32 3, %v1745
    %v1747 = vrot.slane %v1630, %v1746
    %1748 = vset.pattern.permute.xlu0 3
    %1749 = vperm.xlu0 %1748, %v1606
    %v1750 = vpop.permute.xlu0 %1749
    %1752 = vset.pattern.permute.xlu0 3
    %1753 = vperm.xlu0 %1752, %v1611
    %v1754 = vpop.permute.xlu0 %1753
    %v1756 = vadd.f32 %v1747, %v1750
    %v1757 = vadd.f32 %v1747, %v1754
    %s1758 = sld [smem:[#allocation5 + $0x83]]
    %v1759 = vstv %s1758
    %v1760 = vmul.f32 %v59, %v1759
    %v1761 = vmul.f32 %v60, %v1759
    %v1762 = vadd.f32 %v1756, %v1760
    %v1763 = vadd.f32 %v1757, %v1761
    %vm1764 = vcmp.ge.f32.partialorder %v1762, 0.0
    %vm1765 = vcmp.ge.f32.partialorder %v1763, 0.0
    %v1766 = vmul.f32 %v1762, 0.2
    %v1767 = vmul.f32 %v1763, 0.2
    %v1768 = vsel %vm1764, %v1762, %v1766
    %v1769 = vsel %vm1765, %v1763, %v1767
    %s1770 = sld [smem:[#allocation5 + $0x3]]
    %v1771 = vstv %s1770
    %v1772 = vmul.f32 %v1771, %v1768
    %v1773 = vmul.f32 %v1771, %v1769
    %v1774 = vadd.f32 %v1742, %v1772
    %v1775 = vadd.f32 %v1743, %v1773
    %v1776 = vlaneseq
    %v1777 = vshrl.u32 %v1776, 7
    %v1778 = vsub.s32 4, %v1777
    %v1779 = vrot.slane %v1630, %v1778
    %1780 = vset.pattern.permute.xlu0 4
    %1781 = vperm.xlu0 %1780, %v1606
    %v1782 = vpop.permute.xlu0 %1781
    %1784 = vset.pattern.permute.xlu0 4
    %1785 = vperm.xlu0 %1784, %v1611
    %v1786 = vpop.permute.xlu0 %1785
    %v1788 = vadd.f32 %v1779, %v1782
    %v1789 = vadd.f32 %v1779, %v1786
    %s1790 = sld [smem:[#allocation5 + $0x84]]
    %v1791 = vstv %s1790
    %v1792 = vmul.f32 %v59, %v1791
    %v1793 = vmul.f32 %v60, %v1791
    %v1794 = vadd.f32 %v1788, %v1792
    %v1795 = vadd.f32 %v1789, %v1793
    %vm1796 = vcmp.ge.f32.partialorder %v1794, 0.0
    %vm1797 = vcmp.ge.f32.partialorder %v1795, 0.0
    %v1798 = vmul.f32 %v1794, 0.2
    %v1799 = vmul.f32 %v1795, 0.2
    %v1800 = vsel %vm1796, %v1794, %v1798
    %v1801 = vsel %vm1797, %v1795, %v1799
    %s1802 = sld [smem:[#allocation5 + $0x4]]
    %v1803 = vstv %s1802
    %v1804 = vmul.f32 %v1803, %v1800
    %v1805 = vmul.f32 %v1803, %v1801
    %v1806 = vadd.f32 %v1774, %v1804
    %v1807 = vadd.f32 %v1775, %v1805
    %v1808 = vlaneseq
    %v1809 = vshrl.u32 %v1808, 7
    %v1810 = vsub.s32 5, %v1809
    %v1811 = vrot.slane %v1630, %v1810
    %1812 = vset.pattern.permute.xlu0 5
    %1813 = vperm.xlu0 %1812, %v1606
    %v1814 = vpop.permute.xlu0 %1813
    %1816 = vset.pattern.permute.xlu0 5
    %1817 = vperm.xlu0 %1816, %v1611
    %v1818 = vpop.permute.xlu0 %1817
    %v1820 = vadd.f32 %v1811, %v1814
    %v1821 = vadd.f32 %v1811, %v1818
    %s1822 = sld [smem:[#allocation5 + $0x85]]
    %v1823 = vstv %s1822
    %v1824 = vmul.f32 %v59, %v1823
    %v1825 = vmul.f32 %v60, %v1823
    %v1826 = vadd.f32 %v1820, %v1824
    %v1827 = vadd.f32 %v1821, %v1825
    %vm1828 = vcmp.ge.f32.partialorder %v1826, 0.0
    %vm1829 = vcmp.ge.f32.partialorder %v1827, 0.0
    %v1830 = vmul.f32 %v1826, 0.2
    %v1831 = vmul.f32 %v1827, 0.2
    %v1832 = vsel %vm1828, %v1826, %v1830
    %v1833 = vsel %vm1829, %v1827, %v1831
    %s1834 = sld [smem:[#allocation5 + $0x5]]
    %v1835 = vstv %s1834
    %v1836 = vmul.f32 %v1835, %v1832
    %v1837 = vmul.f32 %v1835, %v1833
    %v1838 = vadd.f32 %v1806, %v1836
    %v1839 = vadd.f32 %v1807, %v1837
    %v1840 = vlaneseq
    %v1841 = vshrl.u32 %v1840, 7
    %v1842 = vsub.s32 6, %v1841
    %v1843 = vrot.slane %v1630, %v1842
    %1844 = vset.pattern.permute.xlu0 6
    %1845 = vperm.xlu0 %1844, %v1606
    %v1846 = vpop.permute.xlu0 %1845
    %1848 = vset.pattern.permute.xlu0 6
    %1849 = vperm.xlu0 %1848, %v1611
    %v1850 = vpop.permute.xlu0 %1849
    %v1852 = vadd.f32 %v1843, %v1846
    %v1853 = vadd.f32 %v1843, %v1850
    %s1854 = sld [smem:[#allocation5 + $0x86]]
    %v1855 = vstv %s1854
    %v1856 = vmul.f32 %v59, %v1855
    %v1857 = vmul.f32 %v60, %v1855
    %v1858 = vadd.f32 %v1852, %v1856
    %v1859 = vadd.f32 %v1853, %v1857
    %vm1860 = vcmp.ge.f32.partialorder %v1858, 0.0
    %vm1861 = vcmp.ge.f32.partialorder %v1859, 0.0
    %v1862 = vmul.f32 %v1858, 0.2
    %v1863 = vmul.f32 %v1859, 0.2
    %v1864 = vsel %vm1860, %v1858, %v1862
    %v1865 = vsel %vm1861, %v1859, %v1863
    %s1866 = sld [smem:[#allocation5 + $0x6]]
    %v1867 = vstv %s1866
    %v1868 = vmul.f32 %v1867, %v1864
    %v1869 = vmul.f32 %v1867, %v1865
    %v1870 = vadd.f32 %v1838, %v1868
    %v1871 = vadd.f32 %v1839, %v1869
    %v1872 = vlaneseq
    %v1873 = vshrl.u32 %v1872, 7
    %v1874 = vsub.s32 7, %v1873
    %v1875 = vrot.slane %v1630, %v1874
    %1876 = vset.pattern.permute.xlu0 7
    %1877 = vperm.xlu0 %1876, %v1606
    %v1878 = vpop.permute.xlu0 %1877
    %1880 = vset.pattern.permute.xlu0 7
    %1881 = vperm.xlu0 %1880, %v1611
    %v1882 = vpop.permute.xlu0 %1881
    %v1884 = vadd.f32 %v1875, %v1878
    %v1885 = vadd.f32 %v1875, %v1882
    %s1886 = sld [smem:[#allocation5 + $0x87]]
    %v1887 = vstv %s1886
    %v1888 = vmul.f32 %v59, %v1887
    %v1889 = vmul.f32 %v60, %v1887
    %v1890 = vadd.f32 %v1884, %v1888
    %v1891 = vadd.f32 %v1885, %v1889
    %vm1892 = vcmp.ge.f32.partialorder %v1890, 0.0
    %vm1893 = vcmp.ge.f32.partialorder %v1891, 0.0
    %v1894 = vmul.f32 %v1890, 0.2
    %v1895 = vmul.f32 %v1891, 0.2
    %v1896 = vsel %vm1892, %v1890, %v1894
    %v1897 = vsel %vm1893, %v1891, %v1895
    %s1898 = sld [smem:[#allocation5 + $0x7]]
    %v1899 = vstv %s1898
    %v1900 = vmul.f32 %v1899, %v1896
    %v1901 = vmul.f32 %v1899, %v1897
    %v1902 = vadd.f32 %v1870, %v1900
    %v1903 = vadd.f32 %v1871, %v1901
    %v1904 = vadd.f32 %v1902, %v61
    %v1905 = vadd.f32 %v1903, %v62
    %v1906 = vsel %vm526, %v1904, -inf
    %1907 = vmax.xlane.f32.xlu0 %v1906
    %v1908 = vpop.xlane.xlu0 %1907
    %v1909 = vsel %vm526, %v1905, -inf
    %1910 = vmax.xlane.f32.xlu0 %v1909
    %v1911 = vpop.xlane.xlu0 %1910
    %v1912 = vsub.f32 %v1904, %v1908
    %v1913 = vsub.f32 %v1905, %v1911
    %v1914 = vmul.f32 %v1912, 1.442695
    %v1915 = vpow.pop %v1914
    %v1916 = vmul.f32 %v1913, 1.442695
    %v1917 = vpow.pop %v1916
    %v1918 = vsel %vm526, %v1915, 0.0
    %1919 = vadd.xlane.f32.xlu0 %v1918
    %v1920 = vpop.xlane.xlu0 %1919
    %v1921 = vsel %vm526, %v1917, 0.0
    %1922 = vadd.xlane.f32.xlu0 %v1921
    %v1923 = vpop.xlane.xlu0 %1922
    %v1924 = vrcp.pop %v1920
    %v1925 = vrcp.pop %v1923
    %v1926 = vmul.f32 %v1915, %v1924
    %v1927 = vmul.f32 %v1917, %v1925
    %v1928 = vlaneseq
    %v1929 = vshrl.u32 %v1928, 7
    %v1930 = vsub.s32 0, %v1929
    %v1931 = vrot.slane %v1448, %v1930
    %v1933 = vsel %vm526, %v1926, 0
    %v1936 = vsel %vm526, %v1927, 0
    %1938 = vmatprep.subr.mxu0 0.0
    %1939 = vmatpush1.msra.mxu0 0.0
    %1940 = vmatprep.subr.mxu0 0.0
    %1941 = vmatpush1.msra.mxu0 0.0
    %1942 = vmatprep.subr.mxu0 0.0
    %1943 = vmatpush1.msra.mxu0 0.0
    %1944 = vmatprep.subr.mxu0 0.0
    %1945 = vmatpush1.msra.mxu0 0.0
    %1946 = vmatprep.subr.mxu0 0.0
    %1947 = vmatpush1.msra.mxu0 0.0
    %1948 = vmatprep.subr.mxu0 0.0
    %1949 = vmatpush1.msra.mxu0 0.0
    %1950 = vmatprep.subr.mxu0 0.0
    %1951 = vmatpush1.msra.mxu0 0.0
    %1952 = vmatprep.subr.mxu0 0.0
    %1953 = vmatpush1.msra.mxu0 0.0
    %1954 = vmatprep.subr.mxu0 0.0
    %1955 = vmatpush1.msra.mxu0 0.0
    %1956 = vmatprep.subr.mxu0 0.0
    %1957 = vmatpush1.msra.mxu0 0.0
    %1958 = vmatprep.subr.mxu0 0.0
    %1959 = vmatpush1.msra.mxu0 0.0
    %1960 = vmatprep.subr.mxu0 0.0
    %1961 = vmatpush1.msra.mxu0 0.0
    %1962 = vmatprep.subr.mxu0 0.0
    %1963 = vmatpush1.msra.mxu0 0.0
    %1964 = vmatprep.subr.mxu0 0.0
    %1965 = vmatpush1.msra.mxu0 0.0
    %1966 = vmatprep.subr.mxu0 0.0
    %1967 = vmatpush1.msra.mxu0 %v1532
    %1968 = vmatprep.subr.mxu0 0.0
    %1969 = vmatpush1.msra.mxu0 %v1527
    %1970 = vmatprep.subr.mxu0 0.0
    %1971 = vmatpush2.msra.mxu0 0.0
    %1972 = vmatprep.subr.mxu0 0.0
    %1973 = vmatpush2.msra.mxu0 0.0
    %1974 = vmatprep.subr.mxu0 0.0
    %1975 = vmatpush2.msra.mxu0 0.0
    %1976 = vmatprep.subr.mxu0 0.0
    %1977 = vmatpush2.msra.mxu0 0.0
    %1978 = vmatprep.subr.mxu0 0.0
    %1979 = vmatpush2.msra.mxu0 0.0
    %1980 = vmatprep.subr.mxu0 0.0
    %1981 = vmatpush2.msra.mxu0 0.0
    %1982 = vmatprep.subr.mxu0 0.0
    %1983 = vmatpush2.msra.mxu0 0.0
    %1984 = vmatprep.subr.mxu0 0.0
    %1985 = vmatpush2.msra.mxu0 0.0
    %1986 = vmatprep.subr.mxu0 0.0
    %1987 = vmatpush2.msra.mxu0 0.0
    %1988 = vmatprep.subr.mxu0 0.0
    %1989 = vmatpush2.msra.mxu0 0.0
    %1990 = vmatprep.subr.mxu0 0.0
    %1991 = vmatpush2.msra.mxu0 0.0
    %1992 = vmatprep.subr.mxu0 0.0
    %1993 = vmatpush2.msra.mxu0 0.0
    %1994 = vmatprep.subr.mxu0 0.0
    %1995 = vmatpush2.msra.mxu0 0.0
    %1996 = vmatprep.subr.mxu0 0.0
    %1997 = vmatpush2.msra.mxu0 0.0
    %1998 = vmatprep.subr.mxu0 0.0
    %1999 = vmatpush2.msra.mxu0 0.0
    %2000 = vmatprep.subr.mxu0 0.0
    %2001 = vmatpush2.msra.mxu0 0.0
    %2002 = vmatprep.mubr.f32.mxu0 0.0
    %2003 = vmatmul.mubr.f32.gmra.mxu0 %v1933
    %v2004 = vpop.f32.mrf.mxu0
    %v2005 = vadd.f32 %v1931, %v2004
    %v2006 = vpop.f32.mrf.mxu0
    %2007 = vmatprep.mubr.f32.mxu0 0.0
    %2008 = vmatmul.mubr.f32.gmra.mxu0 %v1936
    %v2009 = vpop.f32.mrf.mxu0
    %v2010 = vadd.f32 %v1931, %v2009
    %v2011 = vpop.f32.mrf.mxu0
    %2012 = vdwg.mxu0
    %vm2013 = vcmp.gt.f32.partialorder %v2005, 0.0
    %vm2014 = vcmp.gt.f32.partialorder %v2010, 0.0
    %v2015 = vmin.f32 %v2005, 0.0
    %v2016 = vmin.f32 %v2010, 0.0
    %v2017 = vmul.f32 %v2015, 1.442695
    %v2018 = vpow.pop %v2017
    %v2019 = vmul.f32 %v2016, 1.442695
    %v2020 = vpow.pop %v2019
    %v2021 = vsub.f32 %v2018, 1.0
    %v2022 = vsub.f32 %v2020, 1.0
    %v2023 = vsel %vm2013, %v2005, %v2021
    %v2024 = vsel %vm2014, %v2010, %v2022
    %2025 = vst.msk [vmem:[%s9] sm:$0xff] %vm73, %v2023
    %2026 = vst.msk [vmem:[%s9 + $0x8] sm:$0xff] %vm73, %v2024
    // Predicated region
    $region46: #{affinity_gat_forward.1} parent=1 // pred_check
      _
    $region47: #{affinity_gat_forward.1} parent=1 // pred_check_branch
      %2028 = sbr.rel (0) target = $region49
    $region48: #{affinity_gat_forward.1} parent=1 // pred_region
      _
    $region49: #{affinity_gat_forward.1} parent=1 // pred_fallthru
      _
    // Predicated region
    $region50: #{affinity_gat_forward.1} parent=1 // pred_check
      _
    $region51: #{affinity_gat_forward.1} parent=1 // pred_check_branch
      %2030 = sbr.rel (0) target = $region53
    $region52: #{affinity_gat_forward.1} parent=1 // pred_region
      _
    $region53: #{affinity_gat_forward.1} parent=1 // pred_fallthru
      _
    %2031 = vsyncpa [#allocation4], 1
    %2032 = vsyncpa [#allocation6], 1

</llo_original>
